<compile_context>
chip_gen: v6e
topology: v6e:2x2x1
jax: 0.10.0
libtpu: 0.0.40
codegen_flags: <defaults>
</compile_context>

<pallas_src>
import jax
import jax.numpy as jnp
from jax import lax
from jax.experimental import pallas as pl
from jax.experimental.pallas import tpu as pltpu

# Small shapes consistent with the module (config.*):
SEQ, BATCH, HIDDEN, LAYERS, VOCAB = 8, 2, 32, 2, 64


def lstm_fc_lsm_kernel(ids_ref, emb_ref, hc0_ref, slab_ref, fcwb_ref,
                       out_ref, hcN_ref):
    """ids + embed table + packed LSTM/fc weights -> log-probs (S*B, V), [hN;cN]."""
    V, H = emb_ref.shape                     # (VOCAB, HIDDEN)
    SB = ids_ref.shape[0]                    # S * B, row n = t*B + b (time-major)
    L = hc0_ref.shape[0] // 2
    B = hc0_ref.shape[1]
    S = SB // B

    # --- embedding gather as a one-hot MXU matmul ---------------------------
    ids = ids_ref[...]                                            # (S*B, 1) int32
    iota = lax.broadcasted_iota(jnp.int32, (SB, V), 1)
    onehot = (iota == ids).astype(jnp.float32)                    # (S*B, V)
    x = jnp.dot(onehot, emb_ref[...],
                preferred_element_type=jnp.float32)               # (S*B, H)

    # --- layer-0 input projection for the whole sequence: one matmul --------
    slab0 = slab_ref[0]                                           # (2H+8, 4H)
    gates_x = jnp.dot(x, slab0[:H],
                      preferred_element_type=jnp.float32) + slab0[2 * H:2 * H + 1]
    gates_x_t = [gates_x[t * B:(t + 1) * B, :] for t in range(S)]  # per-step (B,4H)

    # --- multi-layer LSTM ----------------------------------------------------
    ys = None
    for l in range(L):                       # static layer loop
        slab = slab_ref[l]                   # (2H+8, 4H)
        w_hh = slab[H:2 * H]                 # (H, 4H), pre-transposed
        is_last = (l + 1 == L)
        if not is_last:
            slab_nxt = slab_ref[l + 1]
            w_ih_nxt = slab_nxt[:H]          # (H, 4H)
            b_nxt = slab_nxt[2 * H:2 * H + 1]

        h_c = hc0_ref[l]                     # (B, H), carried in vregs
        c_c = hc0_ref[L + l]
        next_gates = []
        ys = []
        for t in range(S):                   # fully-unrolled serial recurrence
            gates = gates_x_t[t] + jnp.dot(
                h_c, w_hh, preferred_element_type=jnp.float32)    # (B, 4H)
            # one sigmoid + one tanh pass over the full 128-lane gates vreg
            sig = jax.nn.sigmoid(gates)
            th = jnp.tanh(gates)
            i = sig[:, 0 * H:1 * H]          # PyTorch gate order i, f, g, o
            f = sig[:, 1 * H:2 * H]
            g = th[:, 2 * H:3 * H]
            o = sig[:, 3 * H:4 * H]
            c_c = f * c_c + i * g
            h_c = o * jnp.tanh(c_c)
            if is_last:
                ys.append(h_c)
            else:
                # interleave next layer's input projection (independent MXU
                # work between dependent h @ W_hh pushes)
                next_gates.append(jnp.dot(h_c, w_ih_nxt,
                                          preferred_element_type=jnp.float32)
                                  + b_nxt)
        hcN_ref[l] = h_c
        hcN_ref[L + l] = c_c
        if not is_last:
            gates_x_t = next_gates
        # TODO(synk): nn.LSTM inter-layer dropout is train-mode-only (and
        # stochastic); inference semantics (no dropout) implemented here.

    # --- fused fc + log-softmax epilogue (single matmul, single reduction) ---
    y_all = jnp.concatenate(ys, axis=0)      # (S*B, H), time-major
    fcwb = fcwb_ref[...]                     # (H+8, V)
    logits = jnp.dot(y_all, fcwb[:H],
                     preferred_element_type=jnp.float32) + fcwb[H:H + 1]
    m = jnp.max(logits, axis=-1, keepdims=True)
    z = logits - m                           # temp == 1
    lse = jnp.log(jnp.sum(jnp.exp(z), axis=-1, keepdims=True))
    out_ref[...] = z - lse                   # (S*B, V) log-probs


@jax.jit
def text_gen_forward(x_ids, h0, c0, params):
    ids_v = x_ids.reshape(-1, 1).astype(jnp.int32)        # (S*B, 1), row = t*B + b
    hc0 = jnp.concatenate([h0, c0], axis=0)               # (2L, B, H)

    out2d, hcN = pl.pallas_call(
        lstm_fc_lsm_kernel,
        out_shape=(jax.ShapeDtypeStruct((SEQ * BATCH, VOCAB), jnp.float32),
                   jax.ShapeDtypeStruct((2 * LAYERS, BATCH, HIDDEN), jnp.float32)),
        in_specs=[pl.BlockSpec(memory_space=pltpu.MemorySpace.VMEM)] * 5,
        out_specs=(pl.BlockSpec(memory_space=pltpu.MemorySpace.VMEM),) * 2,
    )(ids_v, params["embed"], hc0, params["slab"], params["fcwb"])

    out = out2d.reshape(SEQ, BATCH, VOCAB)                # fc reshape + lsm(dim=2)
    return out, hcN[:LAYERS], hcN[LAYERS:]


def init_params(key):
    """Deterministic init, shapes exactly as the PyTorch module; packed for DMA."""
    ks = jax.random.split(key, 7)
    bound = 1.0 / jnp.sqrt(HIDDEN)
    embed = jax.random.normal(ks[0], (VOCAB, HIDDEN), jnp.float32)          # Embedding
    w_ih = jax.random.uniform(ks[1], (LAYERS, 4 * HIDDEN, HIDDEN),
                              jnp.float32, -bound, bound)                   # weight_ih_l*
    w_hh = jax.random.uniform(ks[2], (LAYERS, 4 * HIDDEN, HIDDEN),
                              jnp.float32, -bound, bound)                   # weight_hh_l*
    b_ih = jax.random.uniform(ks[3], (LAYERS, 4 * HIDDEN), jnp.float32, -bound, bound)
    b_hh = jax.random.uniform(ks[4], (LAYERS, 4 * HIDDEN), jnp.float32, -bound, bound)
    fc_w = jax.random.uniform(ks[5], (VOCAB, HIDDEN), jnp.float32, -bound, bound)
    fc_b = jax.random.uniform(ks[6], (VOCAB,), jnp.float32, -bound, bound)

    w_ih_T = jnp.transpose(w_ih, (0, 2, 1))               # (L, H, 4H)
    w_hh_T = jnp.transpose(w_hh, (0, 2, 1))               # (L, H, 4H)
    bias = (b_ih + b_hh)[:, None, :]                      # (L, 1, 4H)
    bias_pad = jnp.concatenate(
        [bias, jnp.zeros((LAYERS, 7, 4 * HIDDEN), jnp.float32)], axis=1)    # (L, 8, 4H)
    slab = jnp.concatenate([w_ih_T, w_hh_T, bias_pad], axis=1)              # (L, 2H+8, 4H)

    fc_w_T = fc_w.T                                        # (H, V)
    fcb_row = fc_b[None, :]                                # (1, V)
    fcb_pad = jnp.concatenate([fcb_row, jnp.zeros((7, VOCAB), jnp.float32)], axis=0)
    fcwb = jnp.concatenate([fc_w_T, fcb_pad], axis=0)      # (H+8, V)

    return dict(
        # packed kernel inputs
        embed=embed, slab=slab, fcwb=fcwb,
        # unpacked views for the pure-JAX reference
        w_ih_T=w_ih_T, w_hh_T=w_hh_T, bias=bias, fc_w_T=fc_w_T, fc_b=fcb_row,
    )


def reference_forward(x_ids, h0, c0, params):
    """Pure-JAX reference reproducing PyTorch semantics (eval mode)."""
    H = HIDDEN
    out_seq = params["embed"][x_ids].astype(jnp.float32)
    hs, cs = [], []
    for l in range(LAYERS):
        wih, whh, b = params["w_ih_T"][l], params["w_hh_T"][l], params["bias"][l]
        h_l, c_l = h0[l], c0[l]
        ys = []
        for t in range(SEQ):
            gates = out_seq[t] @ wih + h_l @ whh + b
            i = jax.nn.sigmoid(gates[:, :H])
            f = jax.nn.sigmoid(gates[:, H:2 * H])
            g = jnp.tanh(gates[:, 2 * H:3 * H])
            o = jax.nn.sigmoid(gates[:, 3 * H:])
            c_l = f * c_l + i * g
            h_l = o * jnp.tanh(c_l)
            ys.append(h_l)
        out_seq = jnp.stack(ys, 0)
        hs.append(h_l)
        cs.append(c_l)
    logits = out_seq.reshape(-1, H) @ params["fc_w_T"] + params["fc_b"]
    logits = logits.reshape(SEQ, BATCH, VOCAB)
    return jax.nn.log_softmax(logits, axis=-1), jnp.stack(hs, 0), jnp.stack(cs, 0)


if __name__ == "__main__":
    key = jax.random.PRNGKey(0)
    pkey, xkey = jax.random.split(key)
    params = init_params(pkey)

    x_ids = jax.random.randint(xkey, (SEQ, BATCH), 0, VOCAB, dtype=jnp.int32)
    h0 = jnp.zeros((LAYERS, BATCH, HIDDEN), jnp.float32)   # init_cell
    c0 = jnp.zeros((LAYERS, BATCH, HIDDEN), jnp.float32)

    out, hN, cN = text_gen_forward(x_ids, h0, c0, params)
    jax.block_until_ready((out, hN, cN))

    ref_out, ref_h, ref_c = reference_forward(x_ids, h0, c0, params)
    assert out.shape == (SEQ, BATCH, VOCAB)
    assert jnp.allclose(out, ref_out, atol=1e-4), "log-softmax output mismatch"
    assert jnp.allclose(hN, ref_h, atol=1e-4), "h mismatch"
    assert jnp.allclose(cN, ref_c, atol=1e-4), "C mismatch"

    print("KERNEL_OK")
</pallas_src>

<mosaic_0001>
module attributes {stable_mosaic.version = 11 : i64} {
  func.func @lstm_fc_lsm_kernel(%arg0: memref<16x1xi32, #tpu.memory_space<vmem>>, %arg1: memref<64x32xf32, #tpu.memory_space<vmem>>, %arg2: memref<4x2x32xf32, #tpu.memory_space<vmem>>, %arg3: memref<2x72x128xf32, #tpu.memory_space<vmem>>, %arg4: memref<40x64xf32, #tpu.memory_space<vmem>>, %arg5: memref<16x64xf32, #tpu.memory_space<vmem>>, %arg6: memref<4x2x32xf32, #tpu.memory_space<vmem>>) attributes {dimension_semantics = [], scalar_prefetch = 0 : i64, scratch_operands = 0 : i64, tpu.core_type = #tpu.core_type<tc>} {
    %c0 = arith.constant 0 : index
    %c0_0 = arith.constant 0 : index
    %0 = vector.load %arg0[%c0, %c0_0] : memref<16x1xi32, #tpu.memory_space<vmem>>, vector<16x1xi32>
    %1 = tpu.iota {dimensions = array<i32: 1>} : vector<16x64xi32>
    %2 = vector.broadcast %0 : vector<16x1xi32> to vector<16x64xi32>
    %3 = arith.cmpi eq, %1, %2 : vector<16x64xi32>
    %4 = arith.extui %3 : vector<16x64xi1> to vector<16x64xi32>
    %5 = arith.sitofp %4 : vector<16x64xi32> to vector<16x64xf32>
    %c0_1 = arith.constant 0 : index
    %c0_2 = arith.constant 0 : index
    %6 = vector.load %arg1[%c0_1, %c0_2] : memref<64x32xf32, #tpu.memory_space<vmem>>, vector<64x32xf32>
    %cst = arith.constant dense<0.000000e+00> : vector<16x32xf32>
    %7 = tpu.matmul %5, %6, %cst {dimension_numbers = #tpu.dot_dimension_numbers<[1], [0], [0], [1], [0, 0, 1, 1], [], []>} : vector<16x64xf32>, vector<64x32xf32>, vector<16x32xf32> -> vector<16x32xf32>
    %c0_3 = arith.constant 0 : index
    %c0_4 = arith.constant 0 : index
    %c0_5 = arith.constant 0 : index
    %8 = vector.load %arg3[%c0_3, %c0_4, %c0_5] : memref<2x72x128xf32, #tpu.memory_space<vmem>>, vector<1x72x128xf32>
    %9 = vector.shape_cast %8 : vector<1x72x128xf32> to vector<72x128xf32>
    %10 = vector.extract_strided_slice %9 {offsets = [0, 0], sizes = [32, 128], strides = [1, 1]} : vector<72x128xf32> to vector<32x128xf32>
    %cst_6 = arith.constant dense<0.000000e+00> : vector<16x128xf32>
    %11 = tpu.matmul %7, %10, %cst_6 {dimension_numbers = #tpu.dot_dimension_numbers<[1], [0], [0], [1], [0, 0, 1, 1], [], []>} : vector<16x32xf32>, vector<32x128xf32>, vector<16x128xf32> -> vector<16x128xf32>
    %12 = vector.extract_strided_slice %9 {offsets = [64, 0], sizes = [1, 128], strides = [1, 1]} : vector<72x128xf32> to vector<1x128xf32>
    %13 = vector.broadcast %12 : vector<1x128xf32> to vector<16x128xf32>
    %14 = arith.addf %11, %13 : vector<16x128xf32>
    %15 = vector.extract_strided_slice %14 {offsets = [0, 0], sizes = [2, 128], strides = [1, 1]} : vector<16x128xf32> to vector<2x128xf32>
    %16 = vector.extract_strided_slice %14 {offsets = [2, 0], sizes = [2, 128], strides = [1, 1]} : vector<16x128xf32> to vector<2x128xf32>
    %17 = vector.extract_strided_slice %14 {offsets = [4, 0], sizes = [2, 128], strides = [1, 1]} : vector<16x128xf32> to vector<2x128xf32>
    %18 = vector.extract_strided_slice %14 {offsets = [6, 0], sizes = [2, 128], strides = [1, 1]} : vector<16x128xf32> to vector<2x128xf32>
    %19 = vector.extract_strided_slice %14 {offsets = [8, 0], sizes = [2, 128], strides = [1, 1]} : vector<16x128xf32> to vector<2x128xf32>
    %20 = vector.extract_strided_slice %14 {offsets = [10, 0], sizes = [2, 128], strides = [1, 1]} : vector<16x128xf32> to vector<2x128xf32>
    %21 = vector.extract_strided_slice %14 {offsets = [12, 0], sizes = [2, 128], strides = [1, 1]} : vector<16x128xf32> to vector<2x128xf32>
    %22 = vector.extract_strided_slice %14 {offsets = [14, 0], sizes = [2, 128], strides = [1, 1]} : vector<16x128xf32> to vector<2x128xf32>
    %c0_7 = arith.constant 0 : index
    %c0_8 = arith.constant 0 : index
    %c0_9 = arith.constant 0 : index
    %23 = vector.load %arg3[%c0_7, %c0_8, %c0_9] : memref<2x72x128xf32, #tpu.memory_space<vmem>>, vector<1x72x128xf32>
    %24 = vector.shape_cast %23 : vector<1x72x128xf32> to vector<72x128xf32>
    %25 = vector.extract_strided_slice %24 {offsets = [32, 0], sizes = [32, 128], strides = [1, 1]} : vector<72x128xf32> to vector<32x128xf32>
    %c1 = arith.constant 1 : index
    %c0_10 = arith.constant 0 : index
    %c0_11 = arith.constant 0 : index
    %26 = vector.load %arg3[%c1, %c0_10, %c0_11] : memref<2x72x128xf32, #tpu.memory_space<vmem>>, vector<1x72x128xf32>
    %27 = vector.shape_cast %26 : vector<1x72x128xf32> to vector<72x128xf32>
    %28 = vector.extract_strided_slice %27 {offsets = [0, 0], sizes = [32, 128], strides = [1, 1]} : vector<72x128xf32> to vector<32x128xf32>
    %29 = vector.extract_strided_slice %27 {offsets = [64, 0], sizes = [1, 128], strides = [1, 1]} : vector<72x128xf32> to vector<1x128xf32>
    %c0_12 = arith.constant 0 : index
    %c0_13 = arith.constant 0 : index
    %c0_14 = arith.constant 0 : index
    %30 = vector.load %arg2[%c0_12, %c0_13, %c0_14] : memref<4x2x32xf32, #tpu.memory_space<vmem>>, vector<1x2x32xf32>
    %31 = vector.shape_cast %30 : vector<1x2x32xf32> to vector<2x32xf32>
    %c2 = arith.constant 2 : index
    %c0_15 = arith.constant 0 : index
    %c0_16 = arith.constant 0 : index
    %32 = vector.load %arg2[%c2, %c0_15, %c0_16] : memref<4x2x32xf32, #tpu.memory_space<vmem>>, vector<1x2x32xf32>
    %33 = vector.shape_cast %32 : vector<1x2x32xf32> to vector<2x32xf32>
    %cst_17 = arith.constant dense<0.000000e+00> : vector<2x128xf32>
    %34 = tpu.matmul %31, %25, %cst_17 {dimension_numbers = #tpu.dot_dimension_numbers<[1], [0], [0], [1], [0, 0, 1, 1], [], []>} : vector<2x32xf32>, vector<32x128xf32>, vector<2x128xf32> -> vector<2x128xf32>
    %35 = arith.addf %15, %34 : vector<2x128xf32>
    %36 = arith.negf %35 : vector<2x128xf32>
    %37 = math.exp %36 : vector<2x128xf32>
    %cst_18 = arith.constant 1.000000e+00 : f32
    %38 = vector.broadcast %cst_18 : f32 to vector<2x128xf32>
    %39 = arith.addf %38, %37 : vector<2x128xf32>
    %40 = arith.divf %38, %39 : vector<2x128xf32>
    %41 = math.tanh %35 : vector<2x128xf32>
    %42 = vector.extract_strided_slice %40 {offsets = [0, 0], sizes = [2, 32], strides = [1, 1]} : vector<2x128xf32> to vector<2x32xf32>
    %43 = vector.extract_strided_slice %40 {offsets = [0, 32], sizes = [2, 32], strides = [1, 1]} : vector<2x128xf32> to vector<2x32xf32>
    %44 = vector.extract_strided_slice %41 {offsets = [0, 64], sizes = [2, 32], strides = [1, 1]} : vector<2x128xf32> to vector<2x32xf32>
    %45 = vector.extract_strided_slice %40 {offsets = [0, 96], sizes = [2, 32], strides = [1, 1]} : vector<2x128xf32> to vector<2x32xf32>
    %46 = arith.mulf %43, %33 : vector<2x32xf32>
    %47 = arith.mulf %42, %44 : vector<2x32xf32>
    %48 = arith.addf %46, %47 : vector<2x32xf32>
    %49 = math.tanh %48 : vector<2x32xf32>
    %50 = arith.mulf %45, %49 : vector<2x32xf32>
    %cst_19 = arith.constant dense<0.000000e+00> : vector<2x128xf32>
    %51 = tpu.matmul %50, %28, %cst_19 {dimension_numbers = #tpu.dot_dimension_numbers<[1], [0], [0], [1], [0, 0, 1, 1], [], []>} : vector<2x32xf32>, vector<32x128xf32>, vector<2x128xf32> -> vector<2x128xf32>
    %52 = vector.broadcast %29 : vector<1x128xf32> to vector<2x128xf32>
    %53 = arith.addf %51, %52 : vector<2x128xf32>
    %cst_20 = arith.constant dense<0.000000e+00> : vector<2x128xf32>
    %54 = tpu.matmul %50, %25, %cst_20 {dimension_numbers = #tpu.dot_dimension_numbers<[1], [0], [0], [1], [0, 0, 1, 1], [], []>} : vector<2x32xf32>, vector<32x128xf32>, vector<2x128xf32> -> vector<2x128xf32>
    %55 = arith.addf %16, %54 : vector<2x128xf32>
    %56 = arith.negf %55 : vector<2x128xf32>
    %57 = math.exp %56 : vector<2x128xf32>
    %cst_21 = arith.constant 1.000000e+00 : f32
    %58 = vector.broadcast %cst_21 : f32 to vector<2x128xf32>
    %59 = arith.addf %58, %57 : vector<2x128xf32>
    %60 = arith.divf %58, %59 : vector<2x128xf32>
    %61 = math.tanh %55 : vector<2x128xf32>
    %62 = vector.extract_strided_slice %60 {offsets = [0, 0], sizes = [2, 32], strides = [1, 1]} : vector<2x128xf32> to vector<2x32xf32>
    %63 = vector.extract_strided_slice %60 {offsets = [0, 32], sizes = [2, 32], strides = [1, 1]} : vector<2x128xf32> to vector<2x32xf32>
    %64 = vector.extract_strided_slice %61 {offsets = [0, 64], sizes = [2, 32], strides = [1, 1]} : vector<2x128xf32> to vector<2x32xf32>
    %65 = vector.extract_strided_slice %60 {offsets = [0, 96], sizes = [2, 32], strides = [1, 1]} : vector<2x128xf32> to vector<2x32xf32>
    %66 = arith.mulf %63, %48 : vector<2x32xf32>
    %67 = arith.mulf %62, %64 : vector<2x32xf32>
    %68 = arith.addf %66, %67 : vector<2x32xf32>
    %69 = math.tanh %68 : vector<2x32xf32>
    %70 = arith.mulf %65, %69 : vector<2x32xf32>
    %cst_22 = arith.constant dense<0.000000e+00> : vector<2x128xf32>
    %71 = tpu.matmul %70, %28, %cst_22 {dimension_numbers = #tpu.dot_dimension_numbers<[1], [0], [0], [1], [0, 0, 1, 1], [], []>} : vector<2x32xf32>, vector<32x128xf32>, vector<2x128xf32> -> vector<2x128xf32>
    %72 = vector.broadcast %29 : vector<1x128xf32> to vector<2x128xf32>
    %73 = arith.addf %71, %72 : vector<2x128xf32>
    %cst_23 = arith.constant dense<0.000000e+00> : vector<2x128xf32>
    %74 = tpu.matmul %70, %25, %cst_23 {dimension_numbers = #tpu.dot_dimension_numbers<[1], [0], [0], [1], [0, 0, 1, 1], [], []>} : vector<2x32xf32>, vector<32x128xf32>, vector<2x128xf32> -> vector<2x128xf32>
    %75 = arith.addf %17, %74 : vector<2x128xf32>
    %76 = arith.negf %75 : vector<2x128xf32>
    %77 = math.exp %76 : vector<2x128xf32>
    %cst_24 = arith.constant 1.000000e+00 : f32
    %78 = vector.broadcast %cst_24 : f32 to vector<2x128xf32>
    %79 = arith.addf %78, %77 : vector<2x128xf32>
    %80 = arith.divf %78, %79 : vector<2x128xf32>
    %81 = math.tanh %75 : vector<2x128xf32>
    %82 = vector.extract_strided_slice %80 {offsets = [0, 0], sizes = [2, 32], strides = [1, 1]} : vector<2x128xf32> to vector<2x32xf32>
    %83 = vector.extract_strided_slice %80 {offsets = [0, 32], sizes = [2, 32], strides = [1, 1]} : vector<2x128xf32> to vector<2x32xf32>
    %84 = vector.extract_strided_slice %81 {offsets = [0, 64], sizes = [2, 32], strides = [1, 1]} : vector<2x128xf32> to vector<2x32xf32>
    %85 = vector.extract_strided_slice %80 {offsets = [0, 96], sizes = [2, 32], strides = [1, 1]} : vector<2x128xf32> to vector<2x32xf32>
    %86 = arith.mulf %83, %68 : vector<2x32xf32>
    %87 = arith.mulf %82, %84 : vector<2x32xf32>
    %88 = arith.addf %86, %87 : vector<2x32xf32>
    %89 = math.tanh %88 : vector<2x32xf32>
    %90 = arith.mulf %85, %89 : vector<2x32xf32>
    %cst_25 = arith.constant dense<0.000000e+00> : vector<2x128xf32>
    %91 = tpu.matmul %90, %28, %cst_25 {dimension_numbers = #tpu.dot_dimension_numbers<[1], [0], [0], [1], [0, 0, 1, 1], [], []>} : vector<2x32xf32>, vector<32x128xf32>, vector<2x128xf32> -> vector<2x128xf32>
    %92 = vector.broadcast %29 : vector<1x128xf32> to vector<2x128xf32>
    %93 = arith.addf %91, %92 : vector<2x128xf32>
    %cst_26 = arith.constant dense<0.000000e+00> : vector<2x128xf32>
    %94 = tpu.matmul %90, %25, %cst_26 {dimension_numbers = #tpu.dot_dimension_numbers<[1], [0], [0], [1], [0, 0, 1, 1], [], []>} : vector<2x32xf32>, vector<32x128xf32>, vector<2x128xf32> -> vector<2x128xf32>
    %95 = arith.addf %18, %94 : vector<2x128xf32>
    %96 = arith.negf %95 : vector<2x128xf32>
    %97 = math.exp %96 : vector<2x128xf32>
    %cst_27 = arith.constant 1.000000e+00 : f32
    %98 = vector.broadcast %cst_27 : f32 to vector<2x128xf32>
    %99 = arith.addf %98, %97 : vector<2x128xf32>
    %100 = arith.divf %98, %99 : vector<2x128xf32>
    %101 = math.tanh %95 : vector<2x128xf32>
    %102 = vector.extract_strided_slice %100 {offsets = [0, 0], sizes = [2, 32], strides = [1, 1]} : vector<2x128xf32> to vector<2x32xf32>
    %103 = vector.extract_strided_slice %100 {offsets = [0, 32], sizes = [2, 32], strides = [1, 1]} : vector<2x128xf32> to vector<2x32xf32>
    %104 = vector.extract_strided_slice %101 {offsets = [0, 64], sizes = [2, 32], strides = [1, 1]} : vector<2x128xf32> to vector<2x32xf32>
    %105 = vector.extract_strided_slice %100 {offsets = [0, 96], sizes = [2, 32], strides = [1, 1]} : vector<2x128xf32> to vector<2x32xf32>
    %106 = arith.mulf %103, %88 : vector<2x32xf32>
    %107 = arith.mulf %102, %104 : vector<2x32xf32>
    %108 = arith.addf %106, %107 : vector<2x32xf32>
    %109 = math.tanh %108 : vector<2x32xf32>
    %110 = arith.mulf %105, %109 : vector<2x32xf32>
    %cst_28 = arith.constant dense<0.000000e+00> : vector<2x128xf32>
    %111 = tpu.matmul %110, %28, %cst_28 {dimension_numbers = #tpu.dot_dimension_numbers<[1], [0], [0], [1], [0, 0, 1, 1], [], []>} : vector<2x32xf32>, vector<32x128xf32>, vector<2x128xf32> -> vector<2x128xf32>
    %112 = vector.broadcast %29 : vector<1x128xf32> to vector<2x128xf32>
    %113 = arith.addf %111, %112 : vector<2x128xf32>
    %cst_29 = arith.constant dense<0.000000e+00> : vector<2x128xf32>
    %114 = tpu.matmul %110, %25, %cst_29 {dimension_numbers = #tpu.dot_dimension_numbers<[1], [0], [0], [1], [0, 0, 1, 1], [], []>} : vector<2x32xf32>, vector<32x128xf32>, vector<2x128xf32> -> vector<2x128xf32>
    %115 = arith.addf %19, %114 : vector<2x128xf32>
    %116 = arith.negf %115 : vector<2x128xf32>
    %117 = math.exp %116 : vector<2x128xf32>
    %cst_30 = arith.constant 1.000000e+00 : f32
    %118 = vector.broadcast %cst_30 : f32 to vector<2x128xf32>
    %119 = arith.addf %118, %117 : vector<2x128xf32>
    %120 = arith.divf %118, %119 : vector<2x128xf32>
    %121 = math.tanh %115 : vector<2x128xf32>
    %122 = vector.extract_strided_slice %120 {offsets = [0, 0], sizes = [2, 32], strides = [1, 1]} : vector<2x128xf32> to vector<2x32xf32>
    %123 = vector.extract_strided_slice %120 {offsets = [0, 32], sizes = [2, 32], strides = [1, 1]} : vector<2x128xf32> to vector<2x32xf32>
    %124 = vector.extract_strided_slice %121 {offsets = [0, 64], sizes = [2, 32], strides = [1, 1]} : vector<2x128xf32> to vector<2x32xf32>
    %125 = vector.extract_strided_slice %120 {offsets = [0, 96], sizes = [2, 32], strides = [1, 1]} : vector<2x128xf32> to vector<2x32xf32>
    %126 = arith.mulf %123, %108 : vector<2x32xf32>
    %127 = arith.mulf %122, %124 : vector<2x32xf32>
    %128 = arith.addf %126, %127 : vector<2x32xf32>
    %129 = math.tanh %128 : vector<2x32xf32>
    %130 = arith.mulf %125, %129 : vector<2x32xf32>
    %cst_31 = arith.constant dense<0.000000e+00> : vector<2x128xf32>
    %131 = tpu.matmul %130, %28, %cst_31 {dimension_numbers = #tpu.dot_dimension_numbers<[1], [0], [0], [1], [0, 0, 1, 1], [], []>} : vector<2x32xf32>, vector<32x128xf32>, vector<2x128xf32> -> vector<2x128xf32>
    %132 = vector.broadcast %29 : vector<1x128xf32> to vector<2x128xf32>
    %133 = arith.addf %131, %132 : vector<2x128xf32>
    %cst_32 = arith.constant dense<0.000000e+00> : vector<2x128xf32>
    %134 = tpu.matmul %130, %25, %cst_32 {dimension_numbers = #tpu.dot_dimension_numbers<[1], [0], [0], [1], [0, 0, 1, 1], [], []>} : vector<2x32xf32>, vector<32x128xf32>, vector<2x128xf32> -> vector<2x128xf32>
    %135 = arith.addf %20, %134 : vector<2x128xf32>
    %136 = arith.negf %135 : vector<2x128xf32>
    %137 = math.exp %136 : vector<2x128xf32>
    %cst_33 = arith.constant 1.000000e+00 : f32
    %138 = vector.broadcast %cst_33 : f32 to vector<2x128xf32>
    %139 = arith.addf %138, %137 : vector<2x128xf32>
    %140 = arith.divf %138, %139 : vector<2x128xf32>
    %141 = math.tanh %135 : vector<2x128xf32>
    %142 = vector.extract_strided_slice %140 {offsets = [0, 0], sizes = [2, 32], strides = [1, 1]} : vector<2x128xf32> to vector<2x32xf32>
    %143 = vector.extract_strided_slice %140 {offsets = [0, 32], sizes = [2, 32], strides = [1, 1]} : vector<2x128xf32> to vector<2x32xf32>
    %144 = vector.extract_strided_slice %141 {offsets = [0, 64], sizes = [2, 32], strides = [1, 1]} : vector<2x128xf32> to vector<2x32xf32>
    %145 = vector.extract_strided_slice %140 {offsets = [0, 96], sizes = [2, 32], strides = [1, 1]} : vector<2x128xf32> to vector<2x32xf32>
    %146 = arith.mulf %143, %128 : vector<2x32xf32>
    %147 = arith.mulf %142, %144 : vector<2x32xf32>
    %148 = arith.addf %146, %147 : vector<2x32xf32>
    %149 = math.tanh %148 : vector<2x32xf32>
    %150 = arith.mulf %145, %149 : vector<2x32xf32>
    %cst_34 = arith.constant dense<0.000000e+00> : vector<2x128xf32>
    %151 = tpu.matmul %150, %28, %cst_34 {dimension_numbers = #tpu.dot_dimension_numbers<[1], [0], [0], [1], [0, 0, 1, 1], [], []>} : vector<2x32xf32>, vector<32x128xf32>, vector<2x128xf32> -> vector<2x128xf32>
    %152 = vector.broadcast %29 : vector<1x128xf32> to vector<2x128xf32>
    %153 = arith.addf %151, %152 : vector<2x128xf32>
    %cst_35 = arith.constant dense<0.000000e+00> : vector<2x128xf32>
    %154 = tpu.matmul %150, %25, %cst_35 {dimension_numbers = #tpu.dot_dimension_numbers<[1], [0], [0], [1], [0, 0, 1, 1], [], []>} : vector<2x32xf32>, vector<32x128xf32>, vector<2x128xf32> -> vector<2x128xf32>
    %155 = arith.addf %21, %154 : vector<2x128xf32>
    %156 = arith.negf %155 : vector<2x128xf32>
    %157 = math.exp %156 : vector<2x128xf32>
    %cst_36 = arith.constant 1.000000e+00 : f32
    %158 = vector.broadcast %cst_36 : f32 to vector<2x128xf32>
    %159 = arith.addf %158, %157 : vector<2x128xf32>
    %160 = arith.divf %158, %159 : vector<2x128xf32>
    %161 = math.tanh %155 : vector<2x128xf32>
    %162 = vector.extract_strided_slice %160 {offsets = [0, 0], sizes = [2, 32], strides = [1, 1]} : vector<2x128xf32> to vector<2x32xf32>
    %163 = vector.extract_strided_slice %160 {offsets = [0, 32], sizes = [2, 32], strides = [1, 1]} : vector<2x128xf32> to vector<2x32xf32>
    %164 = vector.extract_strided_slice %161 {offsets = [0, 64], sizes = [2, 32], strides = [1, 1]} : vector<2x128xf32> to vector<2x32xf32>
    %165 = vector.extract_strided_slice %160 {offsets = [0, 96], sizes = [2, 32], strides = [1, 1]} : vector<2x128xf32> to vector<2x32xf32>
    %166 = arith.mulf %163, %148 : vector<2x32xf32>
    %167 = arith.mulf %162, %164 : vector<2x32xf32>
    %168 = arith.addf %166, %167 : vector<2x32xf32>
    %169 = math.tanh %168 : vector<2x32xf32>
    %170 = arith.mulf %165, %169 : vector<2x32xf32>
    %cst_37 = arith.constant dense<0.000000e+00> : vector<2x128xf32>
    %171 = tpu.matmul %170, %28, %cst_37 {dimension_numbers = #tpu.dot_dimension_numbers<[1], [0], [0], [1], [0, 0, 1, 1], [], []>} : vector<2x32xf32>, vector<32x128xf32>, vector<2x128xf32> -> vector<2x128xf32>
    %172 = vector.broadcast %29 : vector<1x128xf32> to vector<2x128xf32>
    %173 = arith.addf %171, %172 : vector<2x128xf32>
    %cst_38 = arith.constant dense<0.000000e+00> : vector<2x128xf32>
    %174 = tpu.matmul %170, %25, %cst_38 {dimension_numbers = #tpu.dot_dimension_numbers<[1], [0], [0], [1], [0, 0, 1, 1], [], []>} : vector<2x32xf32>, vector<32x128xf32>, vector<2x128xf32> -> vector<2x128xf32>
    %175 = arith.addf %22, %174 : vector<2x128xf32>
    %176 = arith.negf %175 : vector<2x128xf32>
    %177 = math.exp %176 : vector<2x128xf32>
    %cst_39 = arith.constant 1.000000e+00 : f32
    %178 = vector.broadcast %cst_39 : f32 to vector<2x128xf32>
    %179 = arith.addf %178, %177 : vector<2x128xf32>
    %180 = arith.divf %178, %179 : vector<2x128xf32>
    %181 = math.tanh %175 : vector<2x128xf32>
    %182 = vector.extract_strided_slice %180 {offsets = [0, 0], sizes = [2, 32], strides = [1, 1]} : vector<2x128xf32> to vector<2x32xf32>
    %183 = vector.extract_strided_slice %180 {offsets = [0, 32], sizes = [2, 32], strides = [1, 1]} : vector<2x128xf32> to vector<2x32xf32>
    %184 = vector.extract_strided_slice %181 {offsets = [0, 64], sizes = [2, 32], strides = [1, 1]} : vector<2x128xf32> to vector<2x32xf32>
    %185 = vector.extract_strided_slice %180 {offsets = [0, 96], sizes = [2, 32], strides = [1, 1]} : vector<2x128xf32> to vector<2x32xf32>
    %186 = arith.mulf %183, %168 : vector<2x32xf32>
    %187 = arith.mulf %182, %184 : vector<2x32xf32>
    %188 = arith.addf %186, %187 : vector<2x32xf32>
    %189 = math.tanh %188 : vector<2x32xf32>
    %190 = arith.mulf %185, %189 : vector<2x32xf32>
    %cst_40 = arith.constant dense<0.000000e+00> : vector<2x128xf32>
    %191 = tpu.matmul %190, %28, %cst_40 {dimension_numbers = #tpu.dot_dimension_numbers<[1], [0], [0], [1], [0, 0, 1, 1], [], []>} : vector<2x32xf32>, vector<32x128xf32>, vector<2x128xf32> -> vector<2x128xf32>
    %192 = vector.broadcast %29 : vector<1x128xf32> to vector<2x128xf32>
    %193 = arith.addf %191, %192 : vector<2x128xf32>
    %c0_41 = arith.constant 0 : index
    %c0_42 = arith.constant 0 : index
    %c0_43 = arith.constant 0 : index
    %194 = vector.load %arg6[%c0_41, %c0_42, %c0_43] : memref<4x2x32xf32, #tpu.memory_space<vmem>>, vector<1x2x32xf32>
    %195 = vector.shape_cast %194 : vector<1x2x32xf32> to vector<2x32xf32>
    %196 = vector.shape_cast %190 : vector<2x32xf32> to vector<1x2x32xf32>
    tpu.vector_store %arg6[%c0_41, %c0_42, %c0_43], %196 {strides = array<i32>} : memref<4x2x32xf32, #tpu.memory_space<vmem>>, vector<1x2x32xf32>,
    %c2_44 = arith.constant 2 : index
    %c0_45 = arith.constant 0 : index
    %c0_46 = arith.constant 0 : index
    %197 = vector.load %arg6[%c2_44, %c0_45, %c0_46] : memref<4x2x32xf32, #tpu.memory_space<vmem>>, vector<1x2x32xf32>
    %198 = vector.shape_cast %197 : vector<1x2x32xf32> to vector<2x32xf32>
    %199 = vector.shape_cast %188 : vector<2x32xf32> to vector<1x2x32xf32>
    tpu.vector_store %arg6[%c2_44, %c0_45, %c0_46], %199 {strides = array<i32>} : memref<4x2x32xf32, #tpu.memory_space<vmem>>, vector<1x2x32xf32>,
    %c1_47 = arith.constant 1 : index
    %c0_48 = arith.constant 0 : index
    %c0_49 = arith.constant 0 : index
    %200 = vector.load %arg3[%c1_47, %c0_48, %c0_49] : memref<2x72x128xf32, #tpu.memory_space<vmem>>, vector<1x72x128xf32>
    %201 = vector.shape_cast %200 : vector<1x72x128xf32> to vector<72x128xf32>
    %202 = vector.extract_strided_slice %201 {offsets = [32, 0], sizes = [32, 128], strides = [1, 1]} : vector<72x128xf32> to vector<32x128xf32>
    %c1_50 = arith.constant 1 : index
    %c0_51 = arith.constant 0 : index
    %c0_52 = arith.constant 0 : index
    %203 = vector.load %arg2[%c1_50, %c0_51, %c0_52] : memref<4x2x32xf32, #tpu.memory_space<vmem>>, vector<1x2x32xf32>
    %204 = vector.shape_cast %203 : vector<1x2x32xf32> to vector<2x32xf32>
    %c3 = arith.constant 3 : index
    %c0_53 = arith.constant 0 : index
    %c0_54 = arith.constant 0 : index
    %205 = vector.load %arg2[%c3, %c0_53, %c0_54] : memref<4x2x32xf32, #tpu.memory_space<vmem>>, vector<1x2x32xf32>
    %206 = vector.shape_cast %205 : vector<1x2x32xf32> to vector<2x32xf32>
    %cst_55 = arith.constant dense<0.000000e+00> : vector<2x128xf32>
    %207 = tpu.matmul %204, %202, %cst_55 {dimension_numbers = #tpu.dot_dimension_numbers<[1], [0], [0], [1], [0, 0, 1, 1], [], []>} : vector<2x32xf32>, vector<32x128xf32>, vector<2x128xf32> -> vector<2x128xf32>
    %208 = arith.addf %53, %207 : vector<2x128xf32>
    %209 = arith.negf %208 : vector<2x128xf32>
    %210 = math.exp %209 : vector<2x128xf32>
    %cst_56 = arith.constant 1.000000e+00 : f32
    %211 = vector.broadcast %cst_56 : f32 to vector<2x128xf32>
    %212 = arith.addf %211, %210 : vector<2x128xf32>
    %213 = arith.divf %211, %212 : vector<2x128xf32>
    %214 = math.tanh %208 : vector<2x128xf32>
    %215 = vector.extract_strided_slice %213 {offsets = [0, 0], sizes = [2, 32], strides = [1, 1]} : vector<2x128xf32> to vector<2x32xf32>
    %216 = vector.extract_strided_slice %213 {offsets = [0, 32], sizes = [2, 32], strides = [1, 1]} : vector<2x128xf32> to vector<2x32xf32>
    %217 = vector.extract_strided_slice %214 {offsets = [0, 64], sizes = [2, 32], strides = [1, 1]} : vector<2x128xf32> to vector<2x32xf32>
    %218 = vector.extract_strided_slice %213 {offsets = [0, 96], sizes = [2, 32], strides = [1, 1]} : vector<2x128xf32> to vector<2x32xf32>
    %219 = arith.mulf %216, %206 : vector<2x32xf32>
    %220 = arith.mulf %215, %217 : vector<2x32xf32>
    %221 = arith.addf %219, %220 : vector<2x32xf32>
    %222 = math.tanh %221 : vector<2x32xf32>
    %223 = arith.mulf %218, %222 : vector<2x32xf32>
    %cst_57 = arith.constant dense<0.000000e+00> : vector<2x128xf32>
    %224 = tpu.matmul %223, %202, %cst_57 {dimension_numbers = #tpu.dot_dimension_numbers<[1], [0], [0], [1], [0, 0, 1, 1], [], []>} : vector<2x32xf32>, vector<32x128xf32>, vector<2x128xf32> -> vector<2x128xf32>
    %225 = arith.addf %73, %224 : vector<2x128xf32>
    %226 = arith.negf %225 : vector<2x128xf32>
    %227 = math.exp %226 : vector<2x128xf32>
    %cst_58 = arith.constant 1.000000e+00 : f32
    %228 = vector.broadcast %cst_58 : f32 to vector<2x128xf32>
    %229 = arith.addf %228, %227 : vector<2x128xf32>
    %230 = arith.divf %228, %229 : vector<2x128xf32>
    %231 = math.tanh %225 : vector<2x128xf32>
    %232 = vector.extract_strided_slice %230 {offsets = [0, 0], sizes = [2, 32], strides = [1, 1]} : vector<2x128xf32> to vector<2x32xf32>
    %233 = vector.extract_strided_slice %230 {offsets = [0, 32], sizes = [2, 32], strides = [1, 1]} : vector<2x128xf32> to vector<2x32xf32>
    %234 = vector.extract_strided_slice %231 {offsets = [0, 64], sizes = [2, 32], strides = [1, 1]} : vector<2x128xf32> to vector<2x32xf32>
    %235 = vector.extract_strided_slice %230 {offsets = [0, 96], sizes = [2, 32], strides = [1, 1]} : vector<2x128xf32> to vector<2x32xf32>
    %236 = arith.mulf %233, %221 : vector<2x32xf32>
    %237 = arith.mulf %232, %234 : vector<2x32xf32>
    %238 = arith.addf %236, %237 : vector<2x32xf32>
    %239 = math.tanh %238 : vector<2x32xf32>
    %240 = arith.mulf %235, %239 : vector<2x32xf32>
    %cst_59 = arith.constant dense<0.000000e+00> : vector<2x128xf32>
    %241 = tpu.matmul %240, %202, %cst_59 {dimension_numbers = #tpu.dot_dimension_numbers<[1], [0], [0], [1], [0, 0, 1, 1], [], []>} : vector<2x32xf32>, vector<32x128xf32>, vector<2x128xf32> -> vector<2x128xf32>
    %242 = arith.addf %93, %241 : vector<2x128xf32>
    %243 = arith.negf %242 : vector<2x128xf32>
    %244 = math.exp %243 : vector<2x128xf32>
    %cst_60 = arith.constant 1.000000e+00 : f32
    %245 = vector.broadcast %cst_60 : f32 to vector<2x128xf32>
    %246 = arith.addf %245, %244 : vector<2x128xf32>
    %247 = arith.divf %245, %246 : vector<2x128xf32>
    %248 = math.tanh %242 : vector<2x128xf32>
    %249 = vector.extract_strided_slice %247 {offsets = [0, 0], sizes = [2, 32], strides = [1, 1]} : vector<2x128xf32> to vector<2x32xf32>
    %250 = vector.extract_strided_slice %247 {offsets = [0, 32], sizes = [2, 32], strides = [1, 1]} : vector<2x128xf32> to vector<2x32xf32>
    %251 = vector.extract_strided_slice %248 {offsets = [0, 64], sizes = [2, 32], strides = [1, 1]} : vector<2x128xf32> to vector<2x32xf32>
    %252 = vector.extract_strided_slice %247 {offsets = [0, 96], sizes = [2, 32], strides = [1, 1]} : vector<2x128xf32> to vector<2x32xf32>
    %253 = arith.mulf %250, %238 : vector<2x32xf32>
    %254 = arith.mulf %249, %251 : vector<2x32xf32>
    %255 = arith.addf %253, %254 : vector<2x32xf32>
    %256 = math.tanh %255 : vector<2x32xf32>
    %257 = arith.mulf %252, %256 : vector<2x32xf32>
    %cst_61 = arith.constant dense<0.000000e+00> : vector<2x128xf32>
    %258 = tpu.matmul %257, %202, %cst_61 {dimension_numbers = #tpu.dot_dimension_numbers<[1], [0], [0], [1], [0, 0, 1, 1], [], []>} : vector<2x32xf32>, vector<32x128xf32>, vector<2x128xf32> -> vector<2x128xf32>
    %259 = arith.addf %113, %258 : vector<2x128xf32>
    %260 = arith.negf %259 : vector<2x128xf32>
    %261 = math.exp %260 : vector<2x128xf32>
    %cst_62 = arith.constant 1.000000e+00 : f32
    %262 = vector.broadcast %cst_62 : f32 to vector<2x128xf32>
    %263 = arith.addf %262, %261 : vector<2x128xf32>
    %264 = arith.divf %262, %263 : vector<2x128xf32>
    %265 = math.tanh %259 : vector<2x128xf32>
    %266 = vector.extract_strided_slice %264 {offsets = [0, 0], sizes = [2, 32], strides = [1, 1]} : vector<2x128xf32> to vector<2x32xf32>
    %267 = vector.extract_strided_slice %264 {offsets = [0, 32], sizes = [2, 32], strides = [1, 1]} : vector<2x128xf32> to vector<2x32xf32>
    %268 = vector.extract_strided_slice %265 {offsets = [0, 64], sizes = [2, 32], strides = [1, 1]} : vector<2x128xf32> to vector<2x32xf32>
    %269 = vector.extract_strided_slice %264 {offsets = [0, 96], sizes = [2, 32], strides = [1, 1]} : vector<2x128xf32> to vector<2x32xf32>
    %270 = arith.mulf %267, %255 : vector<2x32xf32>
    %271 = arith.mulf %266, %268 : vector<2x32xf32>
    %272 = arith.addf %270, %271 : vector<2x32xf32>
    %273 = math.tanh %272 : vector<2x32xf32>
    %274 = arith.mulf %269, %273 : vector<2x32xf32>
    %cst_63 = arith.constant dense<0.000000e+00> : vector<2x128xf32>
    %275 = tpu.matmul %274, %202, %cst_63 {dimension_numbers = #tpu.dot_dimension_numbers<[1], [0], [0], [1], [0, 0, 1, 1], [], []>} : vector<2x32xf32>, vector<32x128xf32>, vector<2x128xf32> -> vector<2x128xf32>
    %276 = arith.addf %133, %275 : vector<2x128xf32>
    %277 = arith.negf %276 : vector<2x128xf32>
    %278 = math.exp %277 : vector<2x128xf32>
    %cst_64 = arith.constant 1.000000e+00 : f32
    %279 = vector.broadcast %cst_64 : f32 to vector<2x128xf32>
    %280 = arith.addf %279, %278 : vector<2x128xf32>
    %281 = arith.divf %279, %280 : vector<2x128xf32>
    %282 = math.tanh %276 : vector<2x128xf32>
    %283 = vector.extract_strided_slice %281 {offsets = [0, 0], sizes = [2, 32], strides = [1, 1]} : vector<2x128xf32> to vector<2x32xf32>
    %284 = vector.extract_strided_slice %281 {offsets = [0, 32], sizes = [2, 32], strides = [1, 1]} : vector<2x128xf32> to vector<2x32xf32>
    %285 = vector.extract_strided_slice %282 {offsets = [0, 64], sizes = [2, 32], strides = [1, 1]} : vector<2x128xf32> to vector<2x32xf32>
    %286 = vector.extract_strided_slice %281 {offsets = [0, 96], sizes = [2, 32], strides = [1, 1]} : vector<2x128xf32> to vector<2x32xf32>
    %287 = arith.mulf %284, %272 : vector<2x32xf32>
    %288 = arith.mulf %283, %285 : vector<2x32xf32>
    %289 = arith.addf %287, %288 : vector<2x32xf32>
    %290 = math.tanh %289 : vector<2x32xf32>
    %291 = arith.mulf %286, %290 : vector<2x32xf32>
    %cst_65 = arith.constant dense<0.000000e+00> : vector<2x128xf32>
    %292 = tpu.matmul %291, %202, %cst_65 {dimension_numbers = #tpu.dot_dimension_numbers<[1], [0], [0], [1], [0, 0, 1, 1], [], []>} : vector<2x32xf32>, vector<32x128xf32>, vector<2x128xf32> -> vector<2x128xf32>
    %293 = arith.addf %153, %292 : vector<2x128xf32>
    %294 = arith.negf %293 : vector<2x128xf32>
    %295 = math.exp %294 : vector<2x128xf32>
    %cst_66 = arith.constant 1.000000e+00 : f32
    %296 = vector.broadcast %cst_66 : f32 to vector<2x128xf32>
    %297 = arith.addf %296, %295 : vector<2x128xf32>
    %298 = arith.divf %296, %297 : vector<2x128xf32>
    %299 = math.tanh %293 : vector<2x128xf32>
    %300 = vector.extract_strided_slice %298 {offsets = [0, 0], sizes = [2, 32], strides = [1, 1]} : vector<2x128xf32> to vector<2x32xf32>
    %301 = vector.extract_strided_slice %298 {offsets = [0, 32], sizes = [2, 32], strides = [1, 1]} : vector<2x128xf32> to vector<2x32xf32>
    %302 = vector.extract_strided_slice %299 {offsets = [0, 64], sizes = [2, 32], strides = [1, 1]} : vector<2x128xf32> to vector<2x32xf32>
    %303 = vector.extract_strided_slice %298 {offsets = [0, 96], sizes = [2, 32], strides = [1, 1]} : vector<2x128xf32> to vector<2x32xf32>
    %304 = arith.mulf %301, %289 : vector<2x32xf32>
    %305 = arith.mulf %300, %302 : vector<2x32xf32>
    %306 = arith.addf %304, %305 : vector<2x32xf32>
    %307 = math.tanh %306 : vector<2x32xf32>
    %308 = arith.mulf %303, %307 : vector<2x32xf32>
    %cst_67 = arith.constant dense<0.000000e+00> : vector<2x128xf32>
    %309 = tpu.matmul %308, %202, %cst_67 {dimension_numbers = #tpu.dot_dimension_numbers<[1], [0], [0], [1], [0, 0, 1, 1], [], []>} : vector<2x32xf32>, vector<32x128xf32>, vector<2x128xf32> -> vector<2x128xf32>
    %310 = arith.addf %173, %309 : vector<2x128xf32>
    %311 = arith.negf %310 : vector<2x128xf32>
    %312 = math.exp %311 : vector<2x128xf32>
    %cst_68 = arith.constant 1.000000e+00 : f32
    %313 = vector.broadcast %cst_68 : f32 to vector<2x128xf32>
    %314 = arith.addf %313, %312 : vector<2x128xf32>
    %315 = arith.divf %313, %314 : vector<2x128xf32>
    %316 = math.tanh %310 : vector<2x128xf32>
    %317 = vector.extract_strided_slice %315 {offsets = [0, 0], sizes = [2, 32], strides = [1, 1]} : vector<2x128xf32> to vector<2x32xf32>
    %318 = vector.extract_strided_slice %315 {offsets = [0, 32], sizes = [2, 32], strides = [1, 1]} : vector<2x128xf32> to vector<2x32xf32>
    %319 = vector.extract_strided_slice %316 {offsets = [0, 64], sizes = [2, 32], strides = [1, 1]} : vector<2x128xf32> to vector<2x32xf32>
    %320 = vector.extract_strided_slice %315 {offsets = [0, 96], sizes = [2, 32], strides = [1, 1]} : vector<2x128xf32> to vector<2x32xf32>
    %321 = arith.mulf %318, %306 : vector<2x32xf32>
    %322 = arith.mulf %317, %319 : vector<2x32xf32>
    %323 = arith.addf %321, %322 : vector<2x32xf32>
    %324 = math.tanh %323 : vector<2x32xf32>
    %325 = arith.mulf %320, %324 : vector<2x32xf32>
    %cst_69 = arith.constant dense<0.000000e+00> : vector<2x128xf32>
    %326 = tpu.matmul %325, %202, %cst_69 {dimension_numbers = #tpu.dot_dimension_numbers<[1], [0], [0], [1], [0, 0, 1, 1], [], []>} : vector<2x32xf32>, vector<32x128xf32>, vector<2x128xf32> -> vector<2x128xf32>
    %327 = arith.addf %193, %326 : vector<2x128xf32>
    %328 = arith.negf %327 : vector<2x128xf32>
    %329 = math.exp %328 : vector<2x128xf32>
    %cst_70 = arith.constant 1.000000e+00 : f32
    %330 = vector.broadcast %cst_70 : f32 to vector<2x128xf32>
    %331 = arith.addf %330, %329 : vector<2x128xf32>
    %332 = arith.divf %330, %331 : vector<2x128xf32>
    %333 = math.tanh %327 : vector<2x128xf32>
    %334 = vector.extract_strided_slice %332 {offsets = [0, 0], sizes = [2, 32], strides = [1, 1]} : vector<2x128xf32> to vector<2x32xf32>
    %335 = vector.extract_strided_slice %332 {offsets = [0, 32], sizes = [2, 32], strides = [1, 1]} : vector<2x128xf32> to vector<2x32xf32>
    %336 = vector.extract_strided_slice %333 {offsets = [0, 64], sizes = [2, 32], strides = [1, 1]} : vector<2x128xf32> to vector<2x32xf32>
    %337 = vector.extract_strided_slice %332 {offsets = [0, 96], sizes = [2, 32], strides = [1, 1]} : vector<2x128xf32> to vector<2x32xf32>
    %338 = arith.mulf %335, %323 : vector<2x32xf32>
    %339 = arith.mulf %334, %336 : vector<2x32xf32>
    %340 = arith.addf %338, %339 : vector<2x32xf32>
    %341 = math.tanh %340 : vector<2x32xf32>
    %342 = arith.mulf %337, %341 : vector<2x32xf32>
    %c1_71 = arith.constant 1 : index
    %c0_72 = arith.constant 0 : index
    %c0_73 = arith.constant 0 : index
    %343 = vector.load %arg6[%c1_71, %c0_72, %c0_73] : memref<4x2x32xf32, #tpu.memory_space<vmem>>, vector<1x2x32xf32>
    %344 = vector.shape_cast %343 : vector<1x2x32xf32> to vector<2x32xf32>
    %345 = vector.shape_cast %342 : vector<2x32xf32> to vector<1x2x32xf32>
    tpu.vector_store %arg6[%c1_71, %c0_72, %c0_73], %345 {strides = array<i32>} : memref<4x2x32xf32, #tpu.memory_space<vmem>>, vector<1x2x32xf32>,
    %c3_74 = arith.constant 3 : index
    %c0_75 = arith.constant 0 : index
    %c0_76 = arith.constant 0 : index
    %346 = vector.load %arg6[%c3_74, %c0_75, %c0_76] : memref<4x2x32xf32, #tpu.memory_space<vmem>>, vector<1x2x32xf32>
    %347 = vector.shape_cast %346 : vector<1x2x32xf32> to vector<2x32xf32>
    %348 = vector.shape_cast %340 : vector<2x32xf32> to vector<1x2x32xf32>
    tpu.vector_store %arg6[%c3_74, %c0_75, %c0_76], %348 {strides = array<i32>} : memref<4x2x32xf32, #tpu.memory_space<vmem>>, vector<1x2x32xf32>,
    %349 = tpu.concatenate %223, %240, %257, %274, %291, %308, %325, %342 in 0 : vector<2x32xf32>, vector<2x32xf32>, vector<2x32xf32>, vector<2x32xf32>, vector<2x32xf32>, vector<2x32xf32>, vector<2x32xf32>, vector<2x32xf32> -> vector<16x32xf32>
    %c0_77 = arith.constant 0 : index
    %c0_78 = arith.constant 0 : index
    %350 = vector.load %arg4[%c0_77, %c0_78] : memref<40x64xf32, #tpu.memory_space<vmem>>, vector<40x64xf32>
    %351 = vector.extract_strided_slice %350 {offsets = [0, 0], sizes = [32, 64], strides = [1, 1]} : vector<40x64xf32> to vector<32x64xf32>
    %cst_79 = arith.constant dense<0.000000e+00> : vector<16x64xf32>
    %352 = tpu.matmul %349, %351, %cst_79 {dimension_numbers = #tpu.dot_dimension_numbers<[1], [0], [0], [1], [0, 0, 1, 1], [], []>} : vector<16x32xf32>, vector<32x64xf32>, vector<16x64xf32> -> vector<16x64xf32>
    %353 = vector.extract_strided_slice %350 {offsets = [32, 0], sizes = [1, 64], strides = [1, 1]} : vector<40x64xf32> to vector<1x64xf32>
    %354 = vector.broadcast %353 : vector<1x64xf32> to vector<16x64xf32>
    %355 = arith.addf %352, %354 : vector<16x64xf32>
    %cst_80 = arith.constant dense<0xFF800000> : vector<16xf32>
    %356 = vector.multi_reduction <maximumf>, %355, %cst_80 [1] : vector<16x64xf32> to vector<16xf32>
    %357 = vector.shape_cast %356 : vector<16xf32> to vector<16x1xf32>
    %358 = vector.broadcast %357 : vector<16x1xf32> to vector<16x64xf32>
    %359 = arith.subf %355, %358 : vector<16x64xf32>
    %360 = math.exp %359 : vector<16x64xf32>
    %cst_81 = arith.constant dense<0.000000e+00> : vector<16xf32>
    %361 = vector.multi_reduction <add>, %360, %cst_81 [1] : vector<16x64xf32> to vector<16xf32>
    %362 = vector.shape_cast %361 : vector<16xf32> to vector<16x1xf32>
    %363 = math.log %362 : vector<16x1xf32>
    %364 = vector.broadcast %363 : vector<16x1xf32> to vector<16x64xf32>
    %365 = arith.subf %359, %364 : vector<16x64xf32>
    %c0_82 = arith.constant 0 : index
    %c0_83 = arith.constant 0 : index
    %366 = vector.load %arg5[%c0_82, %c0_83] : memref<16x64xf32, #tpu.memory_space<vmem>>, vector<16x64xf32>
    tpu.vector_store %arg5[%c0_82, %c0_83], %365 {strides = array<i32>} : memref<16x64xf32, #tpu.memory_space<vmem>>, vector<16x64xf32>,
    return
  }
}

</mosaic_0001>

<llo_original>
// kernel: text_gen_forward.1
$region0: #{text_gen_forward.1}
  #allocation0 [shape = 'u32[]', space=smem, size = 0x4, offset = 0x4, fixed_abs, tag = 'smem constant byte address 0x4 - core index']
  #allocation1 [shape = 'u32[144,128]{1,0:T(1,128)}', space=vmem, size = 0x12000, scoped, tag = 'internal scratch']
  %s0 = inlined_call_operand.vmem [shape: s32[16,1], index: 0, kind: input, shape index: {}]
  %s1 = inlined_call_operand.vmem [shape: f32[64,32], index: 1, kind: input, shape index: {}]
  %s2 = inlined_call_operand.vmem [shape: f32[4,2,32], index: 2, kind: input, shape index: {}]
  %s3 = inlined_call_operand.vmem [shape: f32[2,72,128], index: 3, kind: input, shape index: {}]
  %s4 = inlined_call_operand.hbm [shape: f32[40,64], index: 4, kind: input, shape index: {}]
  %s5 = inlined_call_operand.hbm [shape: f32[16,64], index: 5, kind: output, shape index: {0}]
  %s6 = inlined_call_operand.vmem [shape: f32[4,2,32], index: 6, kind: output, shape index: {1}]
  %7 = xla_tuple %s5, %s6
  %s8 = sld [smem:[#allocation0]]
  $region42: #{text_gen_forward.1} parent=0
    _
  %s10 = ssub.s32 1, %s8
  %s11 = scalar_select 0, %s10, %s8
  $region1: #{text_gen_forward.1} parent=0
    #allocation2 [shape = 'u8[20480]{0}', space=vmem, size = 0x5000, scoped, tag = 'input window, operand 4, single buffered']
    #allocation3 [shape = 's32[1]{0}', space=sflag, size = 0x4, scoped, tag = 'scoped memory for text_gen_forward.1']
    #allocation4 [shape = 's32[1]{0}', space=sflag, size = 0x4, scoped, tag = 'scoped memory for text_gen_forward.1']
    #allocation5 [shape = 'u8[8192]{0}', space=vmem, size = 0x2000, scoped, tag = 'output window, operand 0, single buffered']
    %12 = vsyncpa [#allocation3], 0
    %13 = vsyncpa [#allocation4], 0
    // Predicated region
    $region2: #{text_gen_forward.1} parent=1 // pred_check
      _
    $region3: #{text_gen_forward.1} parent=1 // pred_check_branch
      %15 = sbr.rel (0) target = $region5
    $region4: #{text_gen_forward.1} parent=1 // pred_region
      _
    $region5: #{text_gen_forward.1} parent=1 // pred_fallthru
      _
    // Predicated region
    $region6: #{text_gen_forward.1} parent=1 // pred_check
      _
    $region7: #{text_gen_forward.1} parent=1 // pred_check_branch
      %17 = sbr.rel (0) target = $region9
    $region8: #{text_gen_forward.1} parent=1 // pred_region
      _
    $region9: #{text_gen_forward.1} parent=1 // pred_fallthru
      _
    // Predicated region
    $region10: #{text_gen_forward.1} parent=1 // pred_check
      _
    $region11: #{text_gen_forward.1} parent=1 // pred_check_branch
      %19 = sbr.rel (0) target = $region13
    $region12: #{text_gen_forward.1} parent=1 // pred_region
      _
    $region13: #{text_gen_forward.1} parent=1 // pred_fallthru
      _
    // Predicated region
    $region14: #{text_gen_forward.1} parent=1 // pred_check
      _
    $region15: #{text_gen_forward.1} parent=1 // pred_check_branch
      %21 = sbr.rel (0) target = $region17
    $region16: #{text_gen_forward.1} parent=1 // pred_region
      _
    $region17: #{text_gen_forward.1} parent=1 // pred_fallthru
      _
    // Predicated region
    $region18: #{text_gen_forward.1} parent=1 // pred_check
      _
    $region19: #{text_gen_forward.1} parent=1 // pred_check_branch
      %23 = sbr.rel (0) target = $region21
    $region20: #{text_gen_forward.1} parent=1 // pred_region
      %s25 = ssub.s32 640, 640
      %26 = vsyncadd [#allocation3], %s25
      %s27 = sshll.u32 [#allocation2], 4
      %s28 = int_to_ptr.vmem [resolvable:$true] %s27
      %33 = dma.hbm_to_vmem [thread:$0]  %s4, 640, %s28, [#allocation3], 128, 128, 8
    $region21: #{text_gen_forward.1} parent=1 // pred_fallthru
      _
    // Predicated region
    $region22: #{text_gen_forward.1} parent=1 // pred_check
      _
    $region23: #{text_gen_forward.1} parent=1 // pred_check_branch
      %35 = sbr.rel (0) target = $region25
    $region24: #{text_gen_forward.1} parent=1 // pred_region
      %36 = dma.done [#allocation3], 640
    $region25: #{text_gen_forward.1} parent=1 // pred_fallthru
      _
    %v37 = vld [vmem:[%s0] sm:$0xff]
    %v38 = vld [vmem:[%s0 + $0x8] sm:$0xff]
    %v39 = vlaneseq
    %v40 = vand.u32 %v39, 127
    %41 = vset.pattern.permute.xlu0 0
    %42 = vperm.xlu0 %41, %v37
    %v43 = vpop.permute.xlu0 %42
    %44 = vset.pattern.permute.xlu0 0
    %45 = vperm.xlu0 %44, %v38
    %v46 = vpop.permute.xlu0 %45
    %vm47 = vcmp.eq.s32.totalorder %v40, %v43
    %vm48 = vcmp.eq.s32.totalorder %v40, %v46
    %v49 = vsel %vm47, 1, 0
    %v50 = vsel %vm48, 1, 0
    %v51 = vcvt.s32.f32 %v49
    %v52 = vcvt.s32.f32 %v50
    %v53 = vld [vmem:[%s1] sm:$0xff]
    %v54 = vld [vmem:[%s1 + $0x8] sm:$0xff]
    %v55 = vld [vmem:[%s1 + $0x10] sm:$0xff]
    %v56 = vld [vmem:[%s1 + $0x18] sm:$0xff]
    %v57 = vld [vmem:[%s1 + $0x20] sm:$0xff]
    %v58 = vld [vmem:[%s1 + $0x28] sm:$0xff]
    %v59 = vld [vmem:[%s1 + $0x30] sm:$0xff]
    %v60 = vld [vmem:[%s1 + $0x38] sm:$0xff]
    %vm61 = vcmask 523264
    %v63 = vsel %vm61, %v51, 0
    %v66 = vsel %vm61, %v52, 0
    %68 = vmatprep.subr.mxu0 0.0
    %69 = vmatpush1.msra.mxu0 0.0
    %70 = vmatprep.subr.mxu0 0.0
    %71 = vmatpush1.msra.mxu0 0.0
    %72 = vmatprep.subr.mxu0 0.0
    %73 = vmatpush1.msra.mxu0 0.0
    %74 = vmatprep.subr.mxu0 0.0
    %75 = vmatpush1.msra.mxu0 0.0
    %76 = vmatprep.subr.mxu0 0.0
    %77 = vmatpush1.msra.mxu0 0.0
    %78 = vmatprep.subr.mxu0 0.0
    %79 = vmatpush1.msra.mxu0 0.0
    %80 = vmatprep.subr.mxu0 0.0
    %81 = vmatpush1.msra.mxu0 0.0
    %82 = vmatprep.subr.mxu0 0.0
    %83 = vmatpush1.msra.mxu0 0.0
    %84 = vmatprep.subr.mxu0 0.0
    %85 = vmatpush1.msra.mxu0 %v60
    %86 = vmatprep.subr.mxu0 0.0
    %87 = vmatpush1.msra.mxu0 %v59
    %88 = vmatprep.subr.mxu0 0.0
    %89 = vmatpush1.msra.mxu0 %v58
    %90 = vmatprep.subr.mxu0 0.0
    %91 = vmatpush1.msra.mxu0 %v57
    %92 = vmatprep.subr.mxu0 0.0
    %93 = vmatpush1.msra.mxu0 %v56
    %94 = vmatprep.subr.mxu0 0.0
    %95 = vmatpush1.msra.mxu0 %v55
    %96 = vmatprep.subr.mxu0 0.0
    %97 = vmatpush1.msra.mxu0 %v54
    %98 = vmatprep.subr.mxu0 0.0
    %99 = vmatpush1.msra.mxu0 %v53
    %100 = vmatprep.subr.mxu0 0.0
    %101 = vmatpush2.msra.mxu0 0.0
    %102 = vmatprep.subr.mxu0 0.0
    %103 = vmatpush2.msra.mxu0 0.0
    %104 = vmatprep.subr.mxu0 0.0
    %105 = vmatpush2.msra.mxu0 0.0
    %106 = vmatprep.subr.mxu0 0.0
    %107 = vmatpush2.msra.mxu0 0.0
    %108 = vmatprep.subr.mxu0 0.0
    %109 = vmatpush2.msra.mxu0 0.0
    %110 = vmatprep.subr.mxu0 0.0
    %111 = vmatpush2.msra.mxu0 0.0
    %112 = vmatprep.subr.mxu0 0.0
    %113 = vmatpush2.msra.mxu0 0.0
    %114 = vmatprep.subr.mxu0 0.0
    %115 = vmatpush2.msra.mxu0 0.0
    %116 = vmatprep.subr.mxu0 0.0
    %117 = vmatpush2.msra.mxu0 0.0
    %118 = vmatprep.subr.mxu0 0.0
    %119 = vmatpush2.msra.mxu0 0.0
    %120 = vmatprep.subr.mxu0 0.0
    %121 = vmatpush2.msra.mxu0 0.0
    %122 = vmatprep.subr.mxu0 0.0
    %123 = vmatpush2.msra.mxu0 0.0
    %124 = vmatprep.subr.mxu0 0.0
    %125 = vmatpush2.msra.mxu0 0.0
    %126 = vmatprep.subr.mxu0 0.0
    %127 = vmatpush2.msra.mxu0 0.0
    %128 = vmatprep.subr.mxu0 0.0
    %129 = vmatpush2.msra.mxu0 0.0
    %130 = vmatprep.subr.mxu0 0.0
    %131 = vmatpush2.msra.mxu0 0.0
    %132 = vmatprep.mubr.f32.mxu0 0.0
    %133 = vmatmul.mubr.f32.gmra.mxu0 %v63
    %v134 = vpop.f32.mrf.mxu0
    %v135 = vadd.f32 0.0, %v134
    %v136 = vpop.f32.mrf.mxu0
    %137 = vmatprep.mubr.f32.mxu0 0.0
    %138 = vmatmul.mubr.f32.gmra.mxu0 %v66
    %v139 = vpop.f32.mrf.mxu0
    %v140 = vadd.f32 0.0, %v139
    %v141 = vpop.f32.mrf.mxu0
    %142 = vdwg.mxu0
    %v143 = vld [vmem:[%s3] sm:$0xff]
    %v144 = vld [vmem:[%s3 + $0x8] sm:$0xff]
    %v145 = vld [vmem:[%s3 + $0x10] sm:$0xff]
    %v146 = vld [vmem:[%s3 + $0x18] sm:$0xff]
    %v147 = vld [vmem:[%s3 + $0x20] sm:$0xff]
    %v148 = vld [vmem:[%s3 + $0x28] sm:$0xff]
    %v149 = vld [vmem:[%s3 + $0x30] sm:$0xff]
    %v150 = vld [vmem:[%s3 + $0x38] sm:$0xff]
    %v151 = vld [vmem:[%s3 + $0x40] sm:$0xff]
    %v152 = vlaneseq
    %v153 = vshrl.u32 %v152, 7
    %v154 = vsub.s32 0, %v153
    %v155 = vrot.slane %v151, %v154
    %vm156 = vcmask 261120
    %v158 = vsel %vm156, %v135, 0
    %v161 = vsel %vm156, %v140, 0
    %163 = vmatprep.subr.mxu0 0.0
    %164 = vmatpush1.msra.mxu0 0.0
    %165 = vmatprep.subr.mxu0 0.0
    %166 = vmatpush1.msra.mxu0 0.0
    %167 = vmatprep.subr.mxu0 0.0
    %168 = vmatpush1.msra.mxu0 0.0
    %169 = vmatprep.subr.mxu0 0.0
    %170 = vmatpush1.msra.mxu0 0.0
    %171 = vmatprep.subr.mxu0 0.0
    %172 = vmatpush1.msra.mxu0 0.0
    %173 = vmatprep.subr.mxu0 0.0
    %174 = vmatpush1.msra.mxu0 0.0
    %175 = vmatprep.subr.mxu0 0.0
    %176 = vmatpush1.msra.mxu0 0.0
    %177 = vmatprep.subr.mxu0 0.0
    %178 = vmatpush1.msra.mxu0 0.0
    %179 = vmatprep.subr.mxu0 0.0
    %180 = vmatpush1.msra.mxu0 0.0
    %181 = vmatprep.subr.mxu0 0.0
    %182 = vmatpush1.msra.mxu0 0.0
    %183 = vmatprep.subr.mxu0 0.0
    %184 = vmatpush1.msra.mxu0 0.0
    %185 = vmatprep.subr.mxu0 0.0
    %186 = vmatpush1.msra.mxu0 0.0
    %187 = vmatprep.subr.mxu0 0.0
    %188 = vmatpush1.msra.mxu0 %v146
    %189 = vmatprep.subr.mxu0 0.0
    %190 = vmatpush1.msra.mxu0 %v145
    %191 = vmatprep.subr.mxu0 0.0
    %192 = vmatpush1.msra.mxu0 %v144
    %193 = vmatprep.subr.mxu0 0.0
    %194 = vmatpush1.msra.mxu0 %v143
    %195 = vmatprep.subr.mxu0 0.0
    %196 = vmatpush2.msra.mxu0 0.0
    %197 = vmatprep.subr.mxu0 0.0
    %198 = vmatpush2.msra.mxu0 0.0
    %199 = vmatprep.subr.mxu0 0.0
    %200 = vmatpush2.msra.mxu0 0.0
    %201 = vmatprep.subr.mxu0 0.0
    %202 = vmatpush2.msra.mxu0 0.0
    %203 = vmatprep.subr.mxu0 0.0
    %204 = vmatpush2.msra.mxu0 0.0
    %205 = vmatprep.subr.mxu0 0.0
    %206 = vmatpush2.msra.mxu0 0.0
    %207 = vmatprep.subr.mxu0 0.0
    %208 = vmatpush2.msra.mxu0 0.0
    %209 = vmatprep.subr.mxu0 0.0
    %210 = vmatpush2.msra.mxu0 0.0
    %211 = vmatprep.subr.mxu0 0.0
    %212 = vmatpush2.msra.mxu0 0.0
    %213 = vmatprep.subr.mxu0 0.0
    %214 = vmatpush2.msra.mxu0 0.0
    %215 = vmatprep.subr.mxu0 0.0
    %216 = vmatpush2.msra.mxu0 0.0
    %217 = vmatprep.subr.mxu0 0.0
    %218 = vmatpush2.msra.mxu0 0.0
    %219 = vmatprep.subr.mxu0 0.0
    %220 = vmatpush2.msra.mxu0 0.0
    %221 = vmatprep.subr.mxu0 0.0
    %222 = vmatpush2.msra.mxu0 0.0
    %223 = vmatprep.subr.mxu0 0.0
    %224 = vmatpush2.msra.mxu0 0.0
    %225 = vmatprep.subr.mxu0 0.0
    %226 = vmatpush2.msra.mxu0 0.0
    %227 = vmatprep.mubr.f32.mxu0 0.0
    %228 = vmatmul.mubr.f32.gmra.mxu0 %v158
    %v229 = vpop.f32.mrf.mxu0
    %v230 = vadd.f32 %v155, %v229
    %v231 = vpop.f32.mrf.mxu0
    %232 = vmatprep.mubr.f32.mxu0 0.0
    %233 = vmatmul.mubr.f32.gmra.mxu0 %v161
    %v234 = vpop.f32.mrf.mxu0
    %v235 = vadd.f32 %v155, %v234
    %v236 = vpop.f32.mrf.mxu0
    %237 = vdwg.mxu0
    %s238 = scalar_lea.vmem %s3, 72
    %v239 = vld [vmem:[%s238] sm:$0xff]
    %v240 = vld [vmem:[%s238 + $0x8] sm:$0xff]
    %v241 = vld [vmem:[%s238 + $0x10] sm:$0xff]
    %v242 = vld [vmem:[%s238 + $0x18] sm:$0xff]
    %v243 = vld [vmem:[%s238 + $0x40] sm:$0xff]
    %v244 = vld [vmem:[%s2] sm:$0x3]
    %s245 = scalar_lea.vmem %s2, 4
    %v246 = vld [vmem:[%s245] sm:$0x3]
    %v248 = vsel %vm156, %v244, 0
    %250 = vmatprep.subr.mxu0 0.0
    %251 = vmatpush1.msra.mxu0 0.0
    %252 = vmatprep.subr.mxu0 0.0
    %253 = vmatpush1.msra.mxu0 0.0
    %254 = vmatprep.subr.mxu0 0.0
    %255 = vmatpush1.msra.mxu0 0.0
    %256 = vmatprep.subr.mxu0 0.0
    %257 = vmatpush1.msra.mxu0 0.0
    %258 = vmatprep.subr.mxu0 0.0
    %259 = vmatpush1.msra.mxu0 0.0
    %260 = vmatprep.subr.mxu0 0.0
    %261 = vmatpush1.msra.mxu0 0.0
    %262 = vmatprep.subr.mxu0 0.0
    %263 = vmatpush1.msra.mxu0 0.0
    %264 = vmatprep.subr.mxu0 0.0
    %265 = vmatpush1.msra.mxu0 0.0
    %266 = vmatprep.subr.mxu0 0.0
    %267 = vmatpush1.msra.mxu0 0.0
    %268 = vmatprep.subr.mxu0 0.0
    %269 = vmatpush1.msra.mxu0 0.0
    %270 = vmatprep.subr.mxu0 0.0
    %271 = vmatpush1.msra.mxu0 0.0
    %272 = vmatprep.subr.mxu0 0.0
    %273 = vmatpush1.msra.mxu0 0.0
    %274 = vmatprep.subr.mxu0 0.0
    %275 = vmatpush1.msra.mxu0 %v150
    %276 = vmatprep.subr.mxu0 0.0
    %277 = vmatpush1.msra.mxu0 %v149
    %278 = vmatprep.subr.mxu0 0.0
    %279 = vmatpush1.msra.mxu0 %v148
    %280 = vmatprep.subr.mxu0 0.0
    %281 = vmatpush1.msra.mxu0 %v147
    %282 = vmatprep.subr.mxu0 0.0
    %283 = vmatpush2.msra.mxu0 0.0
    %284 = vmatprep.subr.mxu0 0.0
    %285 = vmatpush2.msra.mxu0 0.0
    %286 = vmatprep.subr.mxu0 0.0
    %287 = vmatpush2.msra.mxu0 0.0
    %288 = vmatprep.subr.mxu0 0.0
    %289 = vmatpush2.msra.mxu0 0.0
    %290 = vmatprep.subr.mxu0 0.0
    %291 = vmatpush2.msra.mxu0 0.0
    %292 = vmatprep.subr.mxu0 0.0
    %293 = vmatpush2.msra.mxu0 0.0
    %294 = vmatprep.subr.mxu0 0.0
    %295 = vmatpush2.msra.mxu0 0.0
    %296 = vmatprep.subr.mxu0 0.0
    %297 = vmatpush2.msra.mxu0 0.0
    %298 = vmatprep.subr.mxu0 0.0
    %299 = vmatpush2.msra.mxu0 0.0
    %300 = vmatprep.subr.mxu0 0.0
    %301 = vmatpush2.msra.mxu0 0.0
    %302 = vmatprep.subr.mxu0 0.0
    %303 = vmatpush2.msra.mxu0 0.0
    %304 = vmatprep.subr.mxu0 0.0
    %305 = vmatpush2.msra.mxu0 0.0
    %306 = vmatprep.subr.mxu0 0.0
    %307 = vmatpush2.msra.mxu0 0.0
    %308 = vmatprep.subr.mxu0 0.0
    %309 = vmatpush2.msra.mxu0 0.0
    %310 = vmatprep.subr.mxu0 0.0
    %311 = vmatpush2.msra.mxu0 0.0
    %312 = vmatprep.subr.mxu0 0.0
    %313 = vmatpush2.msra.mxu0 0.0
    %314 = vmatprep.mubr.f32.mxu0 0.0
    %315 = vmatmul.mubr.f32.gmra.mxu0 %v248
    %v316 = vpop.f32.mrf.mxu0
    %v317 = vadd.f32 0.0, %v316
    %v318 = vpop.f32.mrf.mxu0
    %319 = vdwg.mxu0
    %v320 = vadd.f32 %v230, %v317
    %v321 = vxor.u32 %v320, 2147483648
    %v322 = vmul.f32 %v321, 1.442695
    %v323 = vpow.pop %v322
    %v324 = vadd.f32 %v323, 1.0
    %v325 = vrcp.pop %v324
    %v326 = vmul.f32 1.0, %v325
    %v327 = vtanh.pop %v320
    %329 = vrot.lane.b32.xlu0 %v246, 32
    %v330 = vpop.permute.xlu0 %329
    %v332 = vmul.f32 %v326, %v330
    %334 = vrot.lane.b32.xlu0 %v327, 64
    %v335 = vpop.permute.xlu0 %334
    %v337 = vmul.f32 %v326, %v335
    %339 = vrot.lane.b32.xlu0 %v337, 32
    %v340 = vpop.permute.xlu0 %339
    %v342 = vadd.f32 %v332, %v340
    %v343 = vtanh.pop %v342
    %345 = vrot.lane.b32.xlu0 %v343, 64
    %v346 = vpop.permute.xlu0 %345
    %v348 = vmul.f32 %v326, %v346
    %v349 = vlaneseq
    %v350 = vshrl.u32 %v349, 7
    %v351 = vsub.s32 0, %v350
    %v352 = vrot.slane %v243, %v351
    %354 = vrot.lane.b32.xlu0 %v348, 32
    %v355 = vpop.permute.xlu0 %354
    %v356 = vsel %vm156, %v355, 0
    %358 = vmatprep.subr.mxu0 0.0
    %359 = vmatpush1.msra.mxu0 0.0
    %360 = vmatprep.subr.mxu0 0.0
    %361 = vmatpush1.msra.mxu0 0.0
    %362 = vmatprep.subr.mxu0 0.0
    %363 = vmatpush1.msra.mxu0 0.0
    %364 = vmatprep.subr.mxu0 0.0
    %365 = vmatpush1.msra.mxu0 0.0
    %366 = vmatprep.subr.mxu0 0.0
    %367 = vmatpush1.msra.mxu0 0.0
    %368 = vmatprep.subr.mxu0 0.0
    %369 = vmatpush1.msra.mxu0 0.0
    %370 = vmatprep.subr.mxu0 0.0
    %371 = vmatpush1.msra.mxu0 0.0
    %372 = vmatprep.subr.mxu0 0.0
    %373 = vmatpush1.msra.mxu0 0.0
    %374 = vmatprep.subr.mxu0 0.0
    %375 = vmatpush1.msra.mxu0 0.0
    %376 = vmatprep.subr.mxu0 0.0
    %377 = vmatpush1.msra.mxu0 0.0
    %378 = vmatprep.subr.mxu0 0.0
    %379 = vmatpush1.msra.mxu0 0.0
    %380 = vmatprep.subr.mxu0 0.0
    %381 = vmatpush1.msra.mxu0 0.0
    %382 = vmatprep.subr.mxu0 0.0
    %383 = vmatpush1.msra.mxu0 %v242
    %384 = vmatprep.subr.mxu0 0.0
    %385 = vmatpush1.msra.mxu0 %v241
    %386 = vmatprep.subr.mxu0 0.0
    %387 = vmatpush1.msra.mxu0 %v240
    %388 = vmatprep.subr.mxu0 0.0
    %389 = vmatpush1.msra.mxu0 %v239
    %390 = vmatprep.subr.mxu0 0.0
    %391 = vmatpush2.msra.mxu0 0.0
    %392 = vmatprep.subr.mxu0 0.0
    %393 = vmatpush2.msra.mxu0 0.0
    %394 = vmatprep.subr.mxu0 0.0
    %395 = vmatpush2.msra.mxu0 0.0
    %396 = vmatprep.subr.mxu0 0.0
    %397 = vmatpush2.msra.mxu0 0.0
    %398 = vmatprep.subr.mxu0 0.0
    %399 = vmatpush2.msra.mxu0 0.0
    %400 = vmatprep.subr.mxu0 0.0
    %401 = vmatpush2.msra.mxu0 0.0
    %402 = vmatprep.subr.mxu0 0.0
    %403 = vmatpush2.msra.mxu0 0.0
    %404 = vmatprep.subr.mxu0 0.0
    %405 = vmatpush2.msra.mxu0 0.0
    %406 = vmatprep.subr.mxu0 0.0
    %407 = vmatpush2.msra.mxu0 0.0
    %408 = vmatprep.subr.mxu0 0.0
    %409 = vmatpush2.msra.mxu0 0.0
    %410 = vmatprep.subr.mxu0 0.0
    %411 = vmatpush2.msra.mxu0 0.0
    %412 = vmatprep.subr.mxu0 0.0
    %413 = vmatpush2.msra.mxu0 0.0
    %414 = vmatprep.subr.mxu0 0.0
    %415 = vmatpush2.msra.mxu0 0.0
    %416 = vmatprep.subr.mxu0 0.0
    %417 = vmatpush2.msra.mxu0 0.0
    %418 = vmatprep.subr.mxu0 0.0
    %419 = vmatpush2.msra.mxu0 0.0
    %420 = vmatprep.subr.mxu0 0.0
    %421 = vmatpush2.msra.mxu0 0.0
    %422 = vmatprep.mubr.f32.mxu0 0.0
    %423 = vmatmul.mubr.f32.gmra.mxu0 %v356
    %v424 = vpop.f32.mrf.mxu0
    %v425 = vadd.f32 %v352, %v424
    %v426 = vpop.f32.mrf.mxu0
    %427 = vdwg.mxu0
    %428 = vmatprep.subr.mxu0 0.0
    %429 = vmatpush1.msra.mxu0 0.0
    %430 = vmatprep.subr.mxu0 0.0
    %431 = vmatpush1.msra.mxu0 0.0
    %432 = vmatprep.subr.mxu0 0.0
    %433 = vmatpush1.msra.mxu0 0.0
    %434 = vmatprep.subr.mxu0 0.0
    %435 = vmatpush1.msra.mxu0 0.0
    %436 = vmatprep.subr.mxu0 0.0
    %437 = vmatpush1.msra.mxu0 0.0
    %438 = vmatprep.subr.mxu0 0.0
    %439 = vmatpush1.msra.mxu0 0.0
    %440 = vmatprep.subr.mxu0 0.0
    %441 = vmatpush1.msra.mxu0 0.0
    %442 = vmatprep.subr.mxu0 0.0
    %443 = vmatpush1.msra.mxu0 0.0
    %444 = vmatprep.subr.mxu0 0.0
    %445 = vmatpush1.msra.mxu0 0.0
    %446 = vmatprep.subr.mxu0 0.0
    %447 = vmatpush1.msra.mxu0 0.0
    %448 = vmatprep.subr.mxu0 0.0
    %449 = vmatpush1.msra.mxu0 0.0
    %450 = vmatprep.subr.mxu0 0.0
    %451 = vmatpush1.msra.mxu0 0.0
    %452 = vmatprep.subr.mxu0 0.0
    %453 = vmatpush1.msra.mxu0 %v150
    %454 = vmatprep.subr.mxu0 0.0
    %455 = vmatpush1.msra.mxu0 %v149
    %456 = vmatprep.subr.mxu0 0.0
    %457 = vmatpush1.msra.mxu0 %v148
    %458 = vmatprep.subr.mxu0 0.0
    %459 = vmatpush1.msra.mxu0 %v147
    %460 = vmatprep.subr.mxu0 0.0
    %461 = vmatpush2.msra.mxu0 0.0
    %462 = vmatprep.subr.mxu0 0.0
    %463 = vmatpush2.msra.mxu0 0.0
    %464 = vmatprep.subr.mxu0 0.0
    %465 = vmatpush2.msra.mxu0 0.0
    %466 = vmatprep.subr.mxu0 0.0
    %467 = vmatpush2.msra.mxu0 0.0
    %468 = vmatprep.subr.mxu0 0.0
    %469 = vmatpush2.msra.mxu0 0.0
    %470 = vmatprep.subr.mxu0 0.0
    %471 = vmatpush2.msra.mxu0 0.0
    %472 = vmatprep.subr.mxu0 0.0
    %473 = vmatpush2.msra.mxu0 0.0
    %474 = vmatprep.subr.mxu0 0.0
    %475 = vmatpush2.msra.mxu0 0.0
    %476 = vmatprep.subr.mxu0 0.0
    %477 = vmatpush2.msra.mxu0 0.0
    %478 = vmatprep.subr.mxu0 0.0
    %479 = vmatpush2.msra.mxu0 0.0
    %480 = vmatprep.subr.mxu0 0.0
    %481 = vmatpush2.msra.mxu0 0.0
    %482 = vmatprep.subr.mxu0 0.0
    %483 = vmatpush2.msra.mxu0 0.0
    %484 = vmatprep.subr.mxu0 0.0
    %485 = vmatpush2.msra.mxu0 0.0
    %486 = vmatprep.subr.mxu0 0.0
    %487 = vmatpush2.msra.mxu0 0.0
    %488 = vmatprep.subr.mxu0 0.0
    %489 = vmatpush2.msra.mxu0 0.0
    %490 = vmatprep.subr.mxu0 0.0
    %491 = vmatpush2.msra.mxu0 0.0
    %492 = vmatprep.mubr.f32.mxu0 0.0
    %493 = vmatmul.mubr.f32.gmra.mxu0 %v356
    %v494 = vpop.f32.mrf.mxu0
    %v495 = vadd.f32 0.0, %v494
    %v496 = vpop.f32.mrf.mxu0
    %497 = vdwg.mxu0
    %v499 = vrot.slane %v495, 6
    %v501 = vadd.f32 %v230, %v499
    %v502 = vxor.u32 %v501, 2147483648
    %v503 = vmul.f32 %v502, 1.442695
    %v504 = vpow.pop %v503
    %v505 = vadd.f32 %v504, 1.0
    %v506 = vrcp.pop %v505
    %v507 = vmul.f32 1.0, %v506
    %v508 = vtanh.pop %v501
    %v510 = vrot.slane %v342, 6
    %v512 = vmul.f32 %v507, %v510
    %514 = vrot.lane.b32.xlu0 %v508, 64
    %v515 = vpop.permute.xlu0 %514
    %v517 = vmul.f32 %v507, %v515
    %519 = vrot.lane.b32.xlu0 %v517, 32
    %v520 = vpop.permute.xlu0 %519
    %v522 = vadd.f32 %v512, %v520
    %v523 = vtanh.pop %v522
    %525 = vrot.lane.b32.xlu0 %v523, 64
    %v526 = vpop.permute.xlu0 %525
    %v528 = vmul.f32 %v507, %v526
    %v530 = vrot.slane %v528, 2
    %531 = vrot.lane.b32.xlu0 %v530, 32
    %v532 = vpop.permute.xlu0 %531
    %v533 = vsel %vm156, %v532, 0
    %535 = vmatprep.subr.mxu0 0.0
    %536 = vmatpush1.msra.mxu0 0.0
    %537 = vmatprep.subr.mxu0 0.0
    %538 = vmatpush1.msra.mxu0 0.0
    %539 = vmatprep.subr.mxu0 0.0
    %540 = vmatpush1.msra.mxu0 0.0
    %541 = vmatprep.subr.mxu0 0.0
    %542 = vmatpush1.msra.mxu0 0.0
    %543 = vmatprep.subr.mxu0 0.0
    %544 = vmatpush1.msra.mxu0 0.0
    %545 = vmatprep.subr.mxu0 0.0
    %546 = vmatpush1.msra.mxu0 0.0
    %547 = vmatprep.subr.mxu0 0.0
    %548 = vmatpush1.msra.mxu0 0.0
    %549 = vmatprep.subr.mxu0 0.0
    %550 = vmatpush1.msra.mxu0 0.0
    %551 = vmatprep.subr.mxu0 0.0
    %552 = vmatpush1.msra.mxu0 0.0
    %553 = vmatprep.subr.mxu0 0.0
    %554 = vmatpush1.msra.mxu0 0.0
    %555 = vmatprep.subr.mxu0 0.0
    %556 = vmatpush1.msra.mxu0 0.0
    %557 = vmatprep.subr.mxu0 0.0
    %558 = vmatpush1.msra.mxu0 0.0
    %559 = vmatprep.subr.mxu0 0.0
    %560 = vmatpush1.msra.mxu0 %v242
    %561 = vmatprep.subr.mxu0 0.0
    %562 = vmatpush1.msra.mxu0 %v241
    %563 = vmatprep.subr.mxu0 0.0
    %564 = vmatpush1.msra.mxu0 %v240
    %565 = vmatprep.subr.mxu0 0.0
    %566 = vmatpush1.msra.mxu0 %v239
    %567 = vmatprep.subr.mxu0 0.0
    %568 = vmatpush2.msra.mxu0 0.0
    %569 = vmatprep.subr.mxu0 0.0
    %570 = vmatpush2.msra.mxu0 0.0
    %571 = vmatprep.subr.mxu0 0.0
    %572 = vmatpush2.msra.mxu0 0.0
    %573 = vmatprep.subr.mxu0 0.0
    %574 = vmatpush2.msra.mxu0 0.0
    %575 = vmatprep.subr.mxu0 0.0
    %576 = vmatpush2.msra.mxu0 0.0
    %577 = vmatprep.subr.mxu0 0.0
    %578 = vmatpush2.msra.mxu0 0.0
    %579 = vmatprep.subr.mxu0 0.0
    %580 = vmatpush2.msra.mxu0 0.0
    %581 = vmatprep.subr.mxu0 0.0
    %582 = vmatpush2.msra.mxu0 0.0
    %583 = vmatprep.subr.mxu0 0.0
    %584 = vmatpush2.msra.mxu0 0.0
    %585 = vmatprep.subr.mxu0 0.0
    %586 = vmatpush2.msra.mxu0 0.0
    %587 = vmatprep.subr.mxu0 0.0
    %588 = vmatpush2.msra.mxu0 0.0
    %589 = vmatprep.subr.mxu0 0.0
    %590 = vmatpush2.msra.mxu0 0.0
    %591 = vmatprep.subr.mxu0 0.0
    %592 = vmatpush2.msra.mxu0 0.0
    %593 = vmatprep.subr.mxu0 0.0
    %594 = vmatpush2.msra.mxu0 0.0
    %595 = vmatprep.subr.mxu0 0.0
    %596 = vmatpush2.msra.mxu0 0.0
    %597 = vmatprep.subr.mxu0 0.0
    %598 = vmatpush2.msra.mxu0 0.0
    %599 = vmatprep.mubr.f32.mxu0 0.0
    %600 = vmatmul.mubr.f32.gmra.mxu0 %v533
    %v601 = vpop.f32.mrf.mxu0
    %v602 = vadd.f32 %v352, %v601
    %v603 = vpop.f32.mrf.mxu0
    %604 = vdwg.mxu0
    %605 = vmatprep.subr.mxu0 0.0
    %606 = vmatpush1.msra.mxu0 0.0
    %607 = vmatprep.subr.mxu0 0.0
    %608 = vmatpush1.msra.mxu0 0.0
    %609 = vmatprep.subr.mxu0 0.0
    %610 = vmatpush1.msra.mxu0 0.0
    %611 = vmatprep.subr.mxu0 0.0
    %612 = vmatpush1.msra.mxu0 0.0
    %613 = vmatprep.subr.mxu0 0.0
    %614 = vmatpush1.msra.mxu0 0.0
    %615 = vmatprep.subr.mxu0 0.0
    %616 = vmatpush1.msra.mxu0 0.0
    %617 = vmatprep.subr.mxu0 0.0
    %618 = vmatpush1.msra.mxu0 0.0
    %619 = vmatprep.subr.mxu0 0.0
    %620 = vmatpush1.msra.mxu0 0.0
    %621 = vmatprep.subr.mxu0 0.0
    %622 = vmatpush1.msra.mxu0 0.0
    %623 = vmatprep.subr.mxu0 0.0
    %624 = vmatpush1.msra.mxu0 0.0
    %625 = vmatprep.subr.mxu0 0.0
    %626 = vmatpush1.msra.mxu0 0.0
    %627 = vmatprep.subr.mxu0 0.0
    %628 = vmatpush1.msra.mxu0 0.0
    %629 = vmatprep.subr.mxu0 0.0
    %630 = vmatpush1.msra.mxu0 %v150
    %631 = vmatprep.subr.mxu0 0.0
    %632 = vmatpush1.msra.mxu0 %v149
    %633 = vmatprep.subr.mxu0 0.0
    %634 = vmatpush1.msra.mxu0 %v148
    %635 = vmatprep.subr.mxu0 0.0
    %636 = vmatpush1.msra.mxu0 %v147
    %637 = vmatprep.subr.mxu0 0.0
    %638 = vmatpush2.msra.mxu0 0.0
    %639 = vmatprep.subr.mxu0 0.0
    %640 = vmatpush2.msra.mxu0 0.0
    %641 = vmatprep.subr.mxu0 0.0
    %642 = vmatpush2.msra.mxu0 0.0
    %643 = vmatprep.subr.mxu0 0.0
    %644 = vmatpush2.msra.mxu0 0.0
    %645 = vmatprep.subr.mxu0 0.0
    %646 = vmatpush2.msra.mxu0 0.0
    %647 = vmatprep.subr.mxu0 0.0
    %648 = vmatpush2.msra.mxu0 0.0
    %649 = vmatprep.subr.mxu0 0.0
    %650 = vmatpush2.msra.mxu0 0.0
    %651 = vmatprep.subr.mxu0 0.0
    %652 = vmatpush2.msra.mxu0 0.0
    %653 = vmatprep.subr.mxu0 0.0
    %654 = vmatpush2.msra.mxu0 0.0
    %655 = vmatprep.subr.mxu0 0.0
    %656 = vmatpush2.msra.mxu0 0.0
    %657 = vmatprep.subr.mxu0 0.0
    %658 = vmatpush2.msra.mxu0 0.0
    %659 = vmatprep.subr.mxu0 0.0
    %660 = vmatpush2.msra.mxu0 0.0
    %661 = vmatprep.subr.mxu0 0.0
    %662 = vmatpush2.msra.mxu0 0.0
    %663 = vmatprep.subr.mxu0 0.0
    %664 = vmatpush2.msra.mxu0 0.0
    %665 = vmatprep.subr.mxu0 0.0
    %666 = vmatpush2.msra.mxu0 0.0
    %667 = vmatprep.subr.mxu0 0.0
    %668 = vmatpush2.msra.mxu0 0.0
    %669 = vmatprep.mubr.f32.mxu0 0.0
    %670 = vmatmul.mubr.f32.gmra.mxu0 %v533
    %v671 = vpop.f32.mrf.mxu0
    %v672 = vadd.f32 0.0, %v671
    %v673 = vpop.f32.mrf.mxu0
    %674 = vdwg.mxu0
    %v676 = vrot.slane %v672, 4
    %v678 = vadd.f32 %v230, %v676
    %v679 = vxor.u32 %v678, 2147483648
    %v680 = vmul.f32 %v679, 1.442695
    %v681 = vpow.pop %v680
    %v682 = vadd.f32 %v681, 1.0
    %v683 = vrcp.pop %v682
    %v684 = vmul.f32 1.0, %v683
    %v685 = vtanh.pop %v678
    %v687 = vrot.slane %v522, 6
    %v689 = vmul.f32 %v684, %v687
    %691 = vrot.lane.b32.xlu0 %v685, 64
    %v692 = vpop.permute.xlu0 %691
    %v694 = vmul.f32 %v684, %v692
    %696 = vrot.lane.b32.xlu0 %v694, 32
    %v697 = vpop.permute.xlu0 %696
    %v699 = vadd.f32 %v689, %v697
    %v700 = vtanh.pop %v699
    %702 = vrot.lane.b32.xlu0 %v700, 64
    %v703 = vpop.permute.xlu0 %702
    %v705 = vmul.f32 %v684, %v703
    %v707 = vrot.slane %v705, 4
    %708 = vrot.lane.b32.xlu0 %v707, 32
    %v709 = vpop.permute.xlu0 %708
    %v710 = vsel %vm156, %v709, 0
    %712 = vmatprep.subr.mxu0 0.0
    %713 = vmatpush1.msra.mxu0 0.0
    %714 = vmatprep.subr.mxu0 0.0
    %715 = vmatpush1.msra.mxu0 0.0
    %716 = vmatprep.subr.mxu0 0.0
    %717 = vmatpush1.msra.mxu0 0.0
    %718 = vmatprep.subr.mxu0 0.0
    %719 = vmatpush1.msra.mxu0 0.0
    %720 = vmatprep.subr.mxu0 0.0
    %721 = vmatpush1.msra.mxu0 0.0
    %722 = vmatprep.subr.mxu0 0.0
    %723 = vmatpush1.msra.mxu0 0.0
    %724 = vmatprep.subr.mxu0 0.0
    %725 = vmatpush1.msra.mxu0 0.0
    %726 = vmatprep.subr.mxu0 0.0
    %727 = vmatpush1.msra.mxu0 0.0
    %728 = vmatprep.subr.mxu0 0.0
    %729 = vmatpush1.msra.mxu0 0.0
    %730 = vmatprep.subr.mxu0 0.0
    %731 = vmatpush1.msra.mxu0 0.0
    %732 = vmatprep.subr.mxu0 0.0
    %733 = vmatpush1.msra.mxu0 0.0
    %734 = vmatprep.subr.mxu0 0.0
    %735 = vmatpush1.msra.mxu0 0.0
    %736 = vmatprep.subr.mxu0 0.0
    %737 = vmatpush1.msra.mxu0 %v242
    %738 = vmatprep.subr.mxu0 0.0
    %739 = vmatpush1.msra.mxu0 %v241
    %740 = vmatprep.subr.mxu0 0.0
    %741 = vmatpush1.msra.mxu0 %v240
    %742 = vmatprep.subr.mxu0 0.0
    %743 = vmatpush1.msra.mxu0 %v239
    %744 = vmatprep.subr.mxu0 0.0
    %745 = vmatpush2.msra.mxu0 0.0
    %746 = vmatprep.subr.mxu0 0.0
    %747 = vmatpush2.msra.mxu0 0.0
    %748 = vmatprep.subr.mxu0 0.0
    %749 = vmatpush2.msra.mxu0 0.0
    %750 = vmatprep.subr.mxu0 0.0
    %751 = vmatpush2.msra.mxu0 0.0
    %752 = vmatprep.subr.mxu0 0.0
    %753 = vmatpush2.msra.mxu0 0.0
    %754 = vmatprep.subr.mxu0 0.0
    %755 = vmatpush2.msra.mxu0 0.0
    %756 = vmatprep.subr.mxu0 0.0
    %757 = vmatpush2.msra.mxu0 0.0
    %758 = vmatprep.subr.mxu0 0.0
    %759 = vmatpush2.msra.mxu0 0.0
    %760 = vmatprep.subr.mxu0 0.0
    %761 = vmatpush2.msra.mxu0 0.0
    %762 = vmatprep.subr.mxu0 0.0
    %763 = vmatpush2.msra.mxu0 0.0
    %764 = vmatprep.subr.mxu0 0.0
    %765 = vmatpush2.msra.mxu0 0.0
    %766 = vmatprep.subr.mxu0 0.0
    %767 = vmatpush2.msra.mxu0 0.0
    %768 = vmatprep.subr.mxu0 0.0
    %769 = vmatpush2.msra.mxu0 0.0
    %770 = vmatprep.subr.mxu0 0.0
    %771 = vmatpush2.msra.mxu0 0.0
    %772 = vmatprep.subr.mxu0 0.0
    %773 = vmatpush2.msra.mxu0 0.0
    %774 = vmatprep.subr.mxu0 0.0
    %775 = vmatpush2.msra.mxu0 0.0
    %776 = vmatprep.mubr.f32.mxu0 0.0
    %777 = vmatmul.mubr.f32.gmra.mxu0 %v710
    %v778 = vpop.f32.mrf.mxu0
    %v779 = vadd.f32 %v352, %v778
    %v780 = vpop.f32.mrf.mxu0
    %781 = vdwg.mxu0
    %782 = vmatprep.subr.mxu0 0.0
    %783 = vmatpush1.msra.mxu0 0.0
    %784 = vmatprep.subr.mxu0 0.0
    %785 = vmatpush1.msra.mxu0 0.0
    %786 = vmatprep.subr.mxu0 0.0
    %787 = vmatpush1.msra.mxu0 0.0
    %788 = vmatprep.subr.mxu0 0.0
    %789 = vmatpush1.msra.mxu0 0.0
    %790 = vmatprep.subr.mxu0 0.0
    %791 = vmatpush1.msra.mxu0 0.0
    %792 = vmatprep.subr.mxu0 0.0
    %793 = vmatpush1.msra.mxu0 0.0
    %794 = vmatprep.subr.mxu0 0.0
    %795 = vmatpush1.msra.mxu0 0.0
    %796 = vmatprep.subr.mxu0 0.0
    %797 = vmatpush1.msra.mxu0 0.0
    %798 = vmatprep.subr.mxu0 0.0
    %799 = vmatpush1.msra.mxu0 0.0
    %800 = vmatprep.subr.mxu0 0.0
    %801 = vmatpush1.msra.mxu0 0.0
    %802 = vmatprep.subr.mxu0 0.0
    %803 = vmatpush1.msra.mxu0 0.0
    %804 = vmatprep.subr.mxu0 0.0
    %805 = vmatpush1.msra.mxu0 0.0
    %806 = vmatprep.subr.mxu0 0.0
    %807 = vmatpush1.msra.mxu0 %v150
    %808 = vmatprep.subr.mxu0 0.0
    %809 = vmatpush1.msra.mxu0 %v149
    %810 = vmatprep.subr.mxu0 0.0
    %811 = vmatpush1.msra.mxu0 %v148
    %812 = vmatprep.subr.mxu0 0.0
    %813 = vmatpush1.msra.mxu0 %v147
    %814 = vmatprep.subr.mxu0 0.0
    %815 = vmatpush2.msra.mxu0 0.0
    %816 = vmatprep.subr.mxu0 0.0
    %817 = vmatpush2.msra.mxu0 0.0
    %818 = vmatprep.subr.mxu0 0.0
    %819 = vmatpush2.msra.mxu0 0.0
    %820 = vmatprep.subr.mxu0 0.0
    %821 = vmatpush2.msra.mxu0 0.0
    %822 = vmatprep.subr.mxu0 0.0
    %823 = vmatpush2.msra.mxu0 0.0
    %824 = vmatprep.subr.mxu0 0.0
    %825 = vmatpush2.msra.mxu0 0.0
    %826 = vmatprep.subr.mxu0 0.0
    %827 = vmatpush2.msra.mxu0 0.0
    %828 = vmatprep.subr.mxu0 0.0
    %829 = vmatpush2.msra.mxu0 0.0
    %830 = vmatprep.subr.mxu0 0.0
    %831 = vmatpush2.msra.mxu0 0.0
    %832 = vmatprep.subr.mxu0 0.0
    %833 = vmatpush2.msra.mxu0 0.0
    %834 = vmatprep.subr.mxu0 0.0
    %835 = vmatpush2.msra.mxu0 0.0
    %836 = vmatprep.subr.mxu0 0.0
    %837 = vmatpush2.msra.mxu0 0.0
    %838 = vmatprep.subr.mxu0 0.0
    %839 = vmatpush2.msra.mxu0 0.0
    %840 = vmatprep.subr.mxu0 0.0
    %841 = vmatpush2.msra.mxu0 0.0
    %842 = vmatprep.subr.mxu0 0.0
    %843 = vmatpush2.msra.mxu0 0.0
    %844 = vmatprep.subr.mxu0 0.0
    %845 = vmatpush2.msra.mxu0 0.0
    %846 = vmatprep.mubr.f32.mxu0 0.0
    %847 = vmatmul.mubr.f32.gmra.mxu0 %v710
    %v848 = vpop.f32.mrf.mxu0
    %v849 = vadd.f32 0.0, %v848
    %v850 = vpop.f32.mrf.mxu0
    %851 = vdwg.mxu0
    %v853 = vrot.slane %v849, 2
    %v855 = vadd.f32 %v230, %v853
    %v856 = vxor.u32 %v855, 2147483648
    %v857 = vmul.f32 %v856, 1.442695
    %v858 = vpow.pop %v857
    %v859 = vadd.f32 %v858, 1.0
    %v860 = vrcp.pop %v859
    %v861 = vmul.f32 1.0, %v860
    %v862 = vtanh.pop %v855
    %v864 = vrot.slane %v699, 6
    %v866 = vmul.f32 %v861, %v864
    %868 = vrot.lane.b32.xlu0 %v862, 64
    %v869 = vpop.permute.xlu0 %868
    %v871 = vmul.f32 %v861, %v869
    %873 = vrot.lane.b32.xlu0 %v871, 32
    %v874 = vpop.permute.xlu0 %873
    %v876 = vadd.f32 %v866, %v874
    %v877 = vtanh.pop %v876
    %879 = vrot.lane.b32.xlu0 %v877, 64
    %v880 = vpop.permute.xlu0 %879
    %v882 = vmul.f32 %v861, %v880
    %v884 = vrot.slane %v882, 6
    %885 = vrot.lane.b32.xlu0 %v884, 32
    %v886 = vpop.permute.xlu0 %885
    %v887 = vsel %vm156, %v886, 0
    %889 = vmatprep.subr.mxu0 0.0
    %890 = vmatpush1.msra.mxu0 0.0
    %891 = vmatprep.subr.mxu0 0.0
    %892 = vmatpush1.msra.mxu0 0.0
    %893 = vmatprep.subr.mxu0 0.0
    %894 = vmatpush1.msra.mxu0 0.0
    %895 = vmatprep.subr.mxu0 0.0
    %896 = vmatpush1.msra.mxu0 0.0
    %897 = vmatprep.subr.mxu0 0.0
    %898 = vmatpush1.msra.mxu0 0.0
    %899 = vmatprep.subr.mxu0 0.0
    %900 = vmatpush1.msra.mxu0 0.0
    %901 = vmatprep.subr.mxu0 0.0
    %902 = vmatpush1.msra.mxu0 0.0
    %903 = vmatprep.subr.mxu0 0.0
    %904 = vmatpush1.msra.mxu0 0.0
    %905 = vmatprep.subr.mxu0 0.0
    %906 = vmatpush1.msra.mxu0 0.0
    %907 = vmatprep.subr.mxu0 0.0
    %908 = vmatpush1.msra.mxu0 0.0
    %909 = vmatprep.subr.mxu0 0.0
    %910 = vmatpush1.msra.mxu0 0.0
    %911 = vmatprep.subr.mxu0 0.0
    %912 = vmatpush1.msra.mxu0 0.0
    %913 = vmatprep.subr.mxu0 0.0
    %914 = vmatpush1.msra.mxu0 %v242
    %915 = vmatprep.subr.mxu0 0.0
    %916 = vmatpush1.msra.mxu0 %v241
    %917 = vmatprep.subr.mxu0 0.0
    %918 = vmatpush1.msra.mxu0 %v240
    %919 = vmatprep.subr.mxu0 0.0
    %920 = vmatpush1.msra.mxu0 %v239
    %921 = vmatprep.subr.mxu0 0.0
    %922 = vmatpush2.msra.mxu0 0.0
    %923 = vmatprep.subr.mxu0 0.0
    %924 = vmatpush2.msra.mxu0 0.0
    %925 = vmatprep.subr.mxu0 0.0
    %926 = vmatpush2.msra.mxu0 0.0
    %927 = vmatprep.subr.mxu0 0.0
    %928 = vmatpush2.msra.mxu0 0.0
    %929 = vmatprep.subr.mxu0 0.0
    %930 = vmatpush2.msra.mxu0 0.0
    %931 = vmatprep.subr.mxu0 0.0
    %932 = vmatpush2.msra.mxu0 0.0
    %933 = vmatprep.subr.mxu0 0.0
    %934 = vmatpush2.msra.mxu0 0.0
    %935 = vmatprep.subr.mxu0 0.0
    %936 = vmatpush2.msra.mxu0 0.0
    %937 = vmatprep.subr.mxu0 0.0
    %938 = vmatpush2.msra.mxu0 0.0
    %939 = vmatprep.subr.mxu0 0.0
    %940 = vmatpush2.msra.mxu0 0.0
    %941 = vmatprep.subr.mxu0 0.0
    %942 = vmatpush2.msra.mxu0 0.0
    %943 = vmatprep.subr.mxu0 0.0
    %944 = vmatpush2.msra.mxu0 0.0
    %945 = vmatprep.subr.mxu0 0.0
    %946 = vmatpush2.msra.mxu0 0.0
    %947 = vmatprep.subr.mxu0 0.0
    %948 = vmatpush2.msra.mxu0 0.0
    %949 = vmatprep.subr.mxu0 0.0
    %950 = vmatpush2.msra.mxu0 0.0
    %951 = vmatprep.subr.mxu0 0.0
    %952 = vmatpush2.msra.mxu0 0.0
    %953 = vmatprep.mubr.f32.mxu0 0.0
    %954 = vmatmul.mubr.f32.gmra.mxu0 %v887
    %v955 = vpop.f32.mrf.mxu0
    %v956 = vadd.f32 %v352, %v955
    %v957 = vpop.f32.mrf.mxu0
    %958 = vdwg.mxu0
    %959 = vmatprep.subr.mxu0 0.0
    %960 = vmatpush1.msra.mxu0 0.0
    %961 = vmatprep.subr.mxu0 0.0
    %962 = vmatpush1.msra.mxu0 0.0
    %963 = vmatprep.subr.mxu0 0.0
    %964 = vmatpush1.msra.mxu0 0.0
    %965 = vmatprep.subr.mxu0 0.0
    %966 = vmatpush1.msra.mxu0 0.0
    %967 = vmatprep.subr.mxu0 0.0
    %968 = vmatpush1.msra.mxu0 0.0
    %969 = vmatprep.subr.mxu0 0.0
    %970 = vmatpush1.msra.mxu0 0.0
    %971 = vmatprep.subr.mxu0 0.0
    %972 = vmatpush1.msra.mxu0 0.0
    %973 = vmatprep.subr.mxu0 0.0
    %974 = vmatpush1.msra.mxu0 0.0
    %975 = vmatprep.subr.mxu0 0.0
    %976 = vmatpush1.msra.mxu0 0.0
    %977 = vmatprep.subr.mxu0 0.0
    %978 = vmatpush1.msra.mxu0 0.0
    %979 = vmatprep.subr.mxu0 0.0
    %980 = vmatpush1.msra.mxu0 0.0
    %981 = vmatprep.subr.mxu0 0.0
    %982 = vmatpush1.msra.mxu0 0.0
    %983 = vmatprep.subr.mxu0 0.0
    %984 = vmatpush1.msra.mxu0 %v150
    %985 = vmatprep.subr.mxu0 0.0
    %986 = vmatpush1.msra.mxu0 %v149
    %987 = vmatprep.subr.mxu0 0.0
    %988 = vmatpush1.msra.mxu0 %v148
    %989 = vmatprep.subr.mxu0 0.0
    %990 = vmatpush1.msra.mxu0 %v147
    %991 = vmatprep.subr.mxu0 0.0
    %992 = vmatpush2.msra.mxu0 0.0
    %993 = vmatprep.subr.mxu0 0.0
    %994 = vmatpush2.msra.mxu0 0.0
    %995 = vmatprep.subr.mxu0 0.0
    %996 = vmatpush2.msra.mxu0 0.0
    %997 = vmatprep.subr.mxu0 0.0
    %998 = vmatpush2.msra.mxu0 0.0
    %999 = vmatprep.subr.mxu0 0.0
    %1000 = vmatpush2.msra.mxu0 0.0
    %1001 = vmatprep.subr.mxu0 0.0
    %1002 = vmatpush2.msra.mxu0 0.0
    %1003 = vmatprep.subr.mxu0 0.0
    %1004 = vmatpush2.msra.mxu0 0.0
    %1005 = vmatprep.subr.mxu0 0.0
    %1006 = vmatpush2.msra.mxu0 0.0
    %1007 = vmatprep.subr.mxu0 0.0
    %1008 = vmatpush2.msra.mxu0 0.0
    %1009 = vmatprep.subr.mxu0 0.0
    %1010 = vmatpush2.msra.mxu0 0.0
    %1011 = vmatprep.subr.mxu0 0.0
    %1012 = vmatpush2.msra.mxu0 0.0
    %1013 = vmatprep.subr.mxu0 0.0
    %1014 = vmatpush2.msra.mxu0 0.0
    %1015 = vmatprep.subr.mxu0 0.0
    %1016 = vmatpush2.msra.mxu0 0.0
    %1017 = vmatprep.subr.mxu0 0.0
    %1018 = vmatpush2.msra.mxu0 0.0
    %1019 = vmatprep.subr.mxu0 0.0
    %1020 = vmatpush2.msra.mxu0 0.0
    %1021 = vmatprep.subr.mxu0 0.0
    %1022 = vmatpush2.msra.mxu0 0.0
    %1023 = vmatprep.mubr.f32.mxu0 0.0
    %1024 = vmatmul.mubr.f32.gmra.mxu0 %v887
    %v1025 = vpop.f32.mrf.mxu0
    %v1026 = vadd.f32 0.0, %v1025
    %v1027 = vpop.f32.mrf.mxu0
    %1028 = vdwg.mxu0
    %v1029 = vadd.f32 %v235, %v1026
    %v1030 = vxor.u32 %v1029, 2147483648
    %v1031 = vmul.f32 %v1030, 1.442695
    %v1032 = vpow.pop %v1031
    %v1033 = vadd.f32 %v1032, 1.0
    %v1034 = vrcp.pop %v1033
    %v1035 = vmul.f32 1.0, %v1034
    %v1036 = vtanh.pop %v1029
    %v1038 = vrot.slane %v876, 6
    %v1040 = vmul.f32 %v1035, %v1038
    %1042 = vrot.lane.b32.xlu0 %v1036, 64
    %v1043 = vpop.permute.xlu0 %1042
    %v1045 = vmul.f32 %v1035, %v1043
    %1047 = vrot.lane.b32.xlu0 %v1045, 32
    %v1048 = vpop.permute.xlu0 %1047
    %v1050 = vadd.f32 %v1040, %v1048
    %v1051 = vtanh.pop %v1050
    %1053 = vrot.lane.b32.xlu0 %v1051, 64
    %v1054 = vpop.permute.xlu0 %1053
    %v1056 = vmul.f32 %v1035, %v1054
    %1058 = vrot.lane.b32.xlu0 %v1056, 32
    %v1059 = vpop.permute.xlu0 %1058
    %v1060 = vsel %vm156, %v1059, 0
    %1062 = vmatprep.subr.mxu0 0.0
    %1063 = vmatpush1.msra.mxu0 0.0
    %1064 = vmatprep.subr.mxu0 0.0
    %1065 = vmatpush1.msra.mxu0 0.0
    %1066 = vmatprep.subr.mxu0 0.0
    %1067 = vmatpush1.msra.mxu0 0.0
    %1068 = vmatprep.subr.mxu0 0.0
    %1069 = vmatpush1.msra.mxu0 0.0
    %1070 = vmatprep.subr.mxu0 0.0
    %1071 = vmatpush1.msra.mxu0 0.0
    %1072 = vmatprep.subr.mxu0 0.0
    %1073 = vmatpush1.msra.mxu0 0.0
    %1074 = vmatprep.subr.mxu0 0.0
    %1075 = vmatpush1.msra.mxu0 0.0
    %1076 = vmatprep.subr.mxu0 0.0
    %1077 = vmatpush1.msra.mxu0 0.0
    %1078 = vmatprep.subr.mxu0 0.0
    %1079 = vmatpush1.msra.mxu0 0.0
    %1080 = vmatprep.subr.mxu0 0.0
    %1081 = vmatpush1.msra.mxu0 0.0
    %1082 = vmatprep.subr.mxu0 0.0
    %1083 = vmatpush1.msra.mxu0 0.0
    %1084 = vmatprep.subr.mxu0 0.0
    %1085 = vmatpush1.msra.mxu0 0.0
    %1086 = vmatprep.subr.mxu0 0.0
    %1087 = vmatpush1.msra.mxu0 %v242
    %1088 = vmatprep.subr.mxu0 0.0
    %1089 = vmatpush1.msra.mxu0 %v241
    %1090 = vmatprep.subr.mxu0 0.0
    %1091 = vmatpush1.msra.mxu0 %v240
    %1092 = vmatprep.subr.mxu0 0.0
    %1093 = vmatpush1.msra.mxu0 %v239
    %1094 = vmatprep.subr.mxu0 0.0
    %1095 = vmatpush2.msra.mxu0 0.0
    %1096 = vmatprep.subr.mxu0 0.0
    %1097 = vmatpush2.msra.mxu0 0.0
    %1098 = vmatprep.subr.mxu0 0.0
    %1099 = vmatpush2.msra.mxu0 0.0
    %1100 = vmatprep.subr.mxu0 0.0
    %1101 = vmatpush2.msra.mxu0 0.0
    %1102 = vmatprep.subr.mxu0 0.0
    %1103 = vmatpush2.msra.mxu0 0.0
    %1104 = vmatprep.subr.mxu0 0.0
    %1105 = vmatpush2.msra.mxu0 0.0
    %1106 = vmatprep.subr.mxu0 0.0
    %1107 = vmatpush2.msra.mxu0 0.0
    %1108 = vmatprep.subr.mxu0 0.0
    %1109 = vmatpush2.msra.mxu0 0.0
    %1110 = vmatprep.subr.mxu0 0.0
    %1111 = vmatpush2.msra.mxu0 0.0
    %1112 = vmatprep.subr.mxu0 0.0
    %1113 = vmatpush2.msra.mxu0 0.0
    %1114 = vmatprep.subr.mxu0 0.0
    %1115 = vmatpush2.msra.mxu0 0.0
    %1116 = vmatprep.subr.mxu0 0.0
    %1117 = vmatpush2.msra.mxu0 0.0
    %1118 = vmatprep.subr.mxu0 0.0
    %1119 = vmatpush2.msra.mxu0 0.0
    %1120 = vmatprep.subr.mxu0 0.0
    %1121 = vmatpush2.msra.mxu0 0.0
    %1122 = vmatprep.subr.mxu0 0.0
    %1123 = vmatpush2.msra.mxu0 0.0
    %1124 = vmatprep.subr.mxu0 0.0
    %1125 = vmatpush2.msra.mxu0 0.0
    %1126 = vmatprep.mubr.f32.mxu0 0.0
    %1127 = vmatmul.mubr.f32.gmra.mxu0 %v1060
    %v1128 = vpop.f32.mrf.mxu0
    %v1129 = vadd.f32 %v352, %v1128
    %v1130 = vpop.f32.mrf.mxu0
    %1131 = vdwg.mxu0
    %1132 = vmatprep.subr.mxu0 0.0
    %1133 = vmatpush1.msra.mxu0 0.0
    %1134 = vmatprep.subr.mxu0 0.0
    %1135 = vmatpush1.msra.mxu0 0.0
    %1136 = vmatprep.subr.mxu0 0.0
    %1137 = vmatpush1.msra.mxu0 0.0
    %1138 = vmatprep.subr.mxu0 0.0
    %1139 = vmatpush1.msra.mxu0 0.0
    %1140 = vmatprep.subr.mxu0 0.0
    %1141 = vmatpush1.msra.mxu0 0.0
    %1142 = vmatprep.subr.mxu0 0.0
    %1143 = vmatpush1.msra.mxu0 0.0
    %1144 = vmatprep.subr.mxu0 0.0
    %1145 = vmatpush1.msra.mxu0 0.0
    %1146 = vmatprep.subr.mxu0 0.0
    %1147 = vmatpush1.msra.mxu0 0.0
    %1148 = vmatprep.subr.mxu0 0.0
    %1149 = vmatpush1.msra.mxu0 0.0
    %1150 = vmatprep.subr.mxu0 0.0
    %1151 = vmatpush1.msra.mxu0 0.0
    %1152 = vmatprep.subr.mxu0 0.0
    %1153 = vmatpush1.msra.mxu0 0.0
    %1154 = vmatprep.subr.mxu0 0.0
    %1155 = vmatpush1.msra.mxu0 0.0
    %1156 = vmatprep.subr.mxu0 0.0
    %1157 = vmatpush1.msra.mxu0 %v150
    %1158 = vmatprep.subr.mxu0 0.0
    %1159 = vmatpush1.msra.mxu0 %v149
    %1160 = vmatprep.subr.mxu0 0.0
    %1161 = vmatpush1.msra.mxu0 %v148
    %1162 = vmatprep.subr.mxu0 0.0
    %1163 = vmatpush1.msra.mxu0 %v147
    %1164 = vmatprep.subr.mxu0 0.0
    %1165 = vmatpush2.msra.mxu0 0.0
    %1166 = vmatprep.subr.mxu0 0.0
    %1167 = vmatpush2.msra.mxu0 0.0
    %1168 = vmatprep.subr.mxu0 0.0
    %1169 = vmatpush2.msra.mxu0 0.0
    %1170 = vmatprep.subr.mxu0 0.0
    %1171 = vmatpush2.msra.mxu0 0.0
    %1172 = vmatprep.subr.mxu0 0.0
    %1173 = vmatpush2.msra.mxu0 0.0
    %1174 = vmatprep.subr.mxu0 0.0
    %1175 = vmatpush2.msra.mxu0 0.0
    %1176 = vmatprep.subr.mxu0 0.0
    %1177 = vmatpush2.msra.mxu0 0.0
    %1178 = vmatprep.subr.mxu0 0.0
    %1179 = vmatpush2.msra.mxu0 0.0
    %1180 = vmatprep.subr.mxu0 0.0
    %1181 = vmatpush2.msra.mxu0 0.0
    %1182 = vmatprep.subr.mxu0 0.0
    %1183 = vmatpush2.msra.mxu0 0.0
    %1184 = vmatprep.subr.mxu0 0.0
    %1185 = vmatpush2.msra.mxu0 0.0
    %1186 = vmatprep.subr.mxu0 0.0
    %1187 = vmatpush2.msra.mxu0 0.0
    %1188 = vmatprep.subr.mxu0 0.0
    %1189 = vmatpush2.msra.mxu0 0.0
    %1190 = vmatprep.subr.mxu0 0.0
    %1191 = vmatpush2.msra.mxu0 0.0
    %1192 = vmatprep.subr.mxu0 0.0
    %1193 = vmatpush2.msra.mxu0 0.0
    %1194 = vmatprep.subr.mxu0 0.0
    %1195 = vmatpush2.msra.mxu0 0.0
    %1196 = vmatprep.mubr.f32.mxu0 0.0
    %1197 = vmatmul.mubr.f32.gmra.mxu0 %v1060
    %v1198 = vpop.f32.mrf.mxu0
    %v1199 = vadd.f32 0.0, %v1198
    %v1200 = vpop.f32.mrf.mxu0
    %1201 = vdwg.mxu0
    %v1203 = vrot.slane %v1199, 6
    %v1205 = vadd.f32 %v235, %v1203
    %v1206 = vxor.u32 %v1205, 2147483648
    %v1207 = vmul.f32 %v1206, 1.442695
    %v1208 = vpow.pop %v1207
    %v1209 = vadd.f32 %v1208, 1.0
    %v1210 = vrcp.pop %v1209
    %v1211 = vmul.f32 1.0, %v1210
    %v1212 = vtanh.pop %v1205
    %v1214 = vrot.slane %v1050, 6
    %v1216 = vmul.f32 %v1211, %v1214
    %1218 = vrot.lane.b32.xlu0 %v1212, 64
    %v1219 = vpop.permute.xlu0 %1218
    %v1221 = vmul.f32 %v1211, %v1219
    %1223 = vrot.lane.b32.xlu0 %v1221, 32
    %v1224 = vpop.permute.xlu0 %1223
    %v1226 = vadd.f32 %v1216, %v1224
    %v1227 = vtanh.pop %v1226
    %1229 = vrot.lane.b32.xlu0 %v1227, 64
    %v1230 = vpop.permute.xlu0 %1229
    %v1232 = vmul.f32 %v1211, %v1230
    %v1234 = vrot.slane %v1232, 2
    %1235 = vrot.lane.b32.xlu0 %v1234, 32
    %v1236 = vpop.permute.xlu0 %1235
    %v1237 = vsel %vm156, %v1236, 0
    %1239 = vmatprep.subr.mxu0 0.0
    %1240 = vmatpush1.msra.mxu0 0.0
    %1241 = vmatprep.subr.mxu0 0.0
    %1242 = vmatpush1.msra.mxu0 0.0
    %1243 = vmatprep.subr.mxu0 0.0
    %1244 = vmatpush1.msra.mxu0 0.0
    %1245 = vmatprep.subr.mxu0 0.0
    %1246 = vmatpush1.msra.mxu0 0.0
    %1247 = vmatprep.subr.mxu0 0.0
    %1248 = vmatpush1.msra.mxu0 0.0
    %1249 = vmatprep.subr.mxu0 0.0
    %1250 = vmatpush1.msra.mxu0 0.0
    %1251 = vmatprep.subr.mxu0 0.0
    %1252 = vmatpush1.msra.mxu0 0.0
    %1253 = vmatprep.subr.mxu0 0.0
    %1254 = vmatpush1.msra.mxu0 0.0
    %1255 = vmatprep.subr.mxu0 0.0
    %1256 = vmatpush1.msra.mxu0 0.0
    %1257 = vmatprep.subr.mxu0 0.0
    %1258 = vmatpush1.msra.mxu0 0.0
    %1259 = vmatprep.subr.mxu0 0.0
    %1260 = vmatpush1.msra.mxu0 0.0
    %1261 = vmatprep.subr.mxu0 0.0
    %1262 = vmatpush1.msra.mxu0 0.0
    %1263 = vmatprep.subr.mxu0 0.0
    %1264 = vmatpush1.msra.mxu0 %v242
    %1265 = vmatprep.subr.mxu0 0.0
    %1266 = vmatpush1.msra.mxu0 %v241
    %1267 = vmatprep.subr.mxu0 0.0
    %1268 = vmatpush1.msra.mxu0 %v240
    %1269 = vmatprep.subr.mxu0 0.0
    %1270 = vmatpush1.msra.mxu0 %v239
    %1271 = vmatprep.subr.mxu0 0.0
    %1272 = vmatpush2.msra.mxu0 0.0
    %1273 = vmatprep.subr.mxu0 0.0
    %1274 = vmatpush2.msra.mxu0 0.0
    %1275 = vmatprep.subr.mxu0 0.0
    %1276 = vmatpush2.msra.mxu0 0.0
    %1277 = vmatprep.subr.mxu0 0.0
    %1278 = vmatpush2.msra.mxu0 0.0
    %1279 = vmatprep.subr.mxu0 0.0
    %1280 = vmatpush2.msra.mxu0 0.0
    %1281 = vmatprep.subr.mxu0 0.0
    %1282 = vmatpush2.msra.mxu0 0.0
    %1283 = vmatprep.subr.mxu0 0.0
    %1284 = vmatpush2.msra.mxu0 0.0
    %1285 = vmatprep.subr.mxu0 0.0
    %1286 = vmatpush2.msra.mxu0 0.0
    %1287 = vmatprep.subr.mxu0 0.0
    %1288 = vmatpush2.msra.mxu0 0.0
    %1289 = vmatprep.subr.mxu0 0.0
    %1290 = vmatpush2.msra.mxu0 0.0
    %1291 = vmatprep.subr.mxu0 0.0
    %1292 = vmatpush2.msra.mxu0 0.0
    %1293 = vmatprep.subr.mxu0 0.0
    %1294 = vmatpush2.msra.mxu0 0.0
    %1295 = vmatprep.subr.mxu0 0.0
    %1296 = vmatpush2.msra.mxu0 0.0
    %1297 = vmatprep.subr.mxu0 0.0
    %1298 = vmatpush2.msra.mxu0 0.0
    %1299 = vmatprep.subr.mxu0 0.0
    %1300 = vmatpush2.msra.mxu0 0.0
    %1301 = vmatprep.subr.mxu0 0.0
    %1302 = vmatpush2.msra.mxu0 0.0
    %1303 = vmatprep.mubr.f32.mxu0 0.0
    %1304 = vmatmul.mubr.f32.gmra.mxu0 %v1237
    %v1305 = vpop.f32.mrf.mxu0
    %v1306 = vadd.f32 %v352, %v1305
    %v1307 = vpop.f32.mrf.mxu0
    %1308 = vdwg.mxu0
    %1309 = vmatprep.subr.mxu0 0.0
    %1310 = vmatpush1.msra.mxu0 0.0
    %1311 = vmatprep.subr.mxu0 0.0
    %1312 = vmatpush1.msra.mxu0 0.0
    %1313 = vmatprep.subr.mxu0 0.0
    %1314 = vmatpush1.msra.mxu0 0.0
    %1315 = vmatprep.subr.mxu0 0.0
    %1316 = vmatpush1.msra.mxu0 0.0
    %1317 = vmatprep.subr.mxu0 0.0
    %1318 = vmatpush1.msra.mxu0 0.0
    %1319 = vmatprep.subr.mxu0 0.0
    %1320 = vmatpush1.msra.mxu0 0.0
    %1321 = vmatprep.subr.mxu0 0.0
    %1322 = vmatpush1.msra.mxu0 0.0
    %1323 = vmatprep.subr.mxu0 0.0
    %1324 = vmatpush1.msra.mxu0 0.0
    %1325 = vmatprep.subr.mxu0 0.0
    %1326 = vmatpush1.msra.mxu0 0.0
    %1327 = vmatprep.subr.mxu0 0.0
    %1328 = vmatpush1.msra.mxu0 0.0
    %1329 = vmatprep.subr.mxu0 0.0
    %1330 = vmatpush1.msra.mxu0 0.0
    %1331 = vmatprep.subr.mxu0 0.0
    %1332 = vmatpush1.msra.mxu0 0.0
    %1333 = vmatprep.subr.mxu0 0.0
    %1334 = vmatpush1.msra.mxu0 %v150
    %1335 = vmatprep.subr.mxu0 0.0
    %1336 = vmatpush1.msra.mxu0 %v149
    %1337 = vmatprep.subr.mxu0 0.0
    %1338 = vmatpush1.msra.mxu0 %v148
    %1339 = vmatprep.subr.mxu0 0.0
    %1340 = vmatpush1.msra.mxu0 %v147
    %1341 = vmatprep.subr.mxu0 0.0
    %1342 = vmatpush2.msra.mxu0 0.0
    %1343 = vmatprep.subr.mxu0 0.0
    %1344 = vmatpush2.msra.mxu0 0.0
    %1345 = vmatprep.subr.mxu0 0.0
    %1346 = vmatpush2.msra.mxu0 0.0
    %1347 = vmatprep.subr.mxu0 0.0
    %1348 = vmatpush2.msra.mxu0 0.0
    %1349 = vmatprep.subr.mxu0 0.0
    %1350 = vmatpush2.msra.mxu0 0.0
    %1351 = vmatprep.subr.mxu0 0.0
    %1352 = vmatpush2.msra.mxu0 0.0
    %1353 = vmatprep.subr.mxu0 0.0
    %1354 = vmatpush2.msra.mxu0 0.0
    %1355 = vmatprep.subr.mxu0 0.0
    %1356 = vmatpush2.msra.mxu0 0.0
    %1357 = vmatprep.subr.mxu0 0.0
    %1358 = vmatpush2.msra.mxu0 0.0
    %1359 = vmatprep.subr.mxu0 0.0
    %1360 = vmatpush2.msra.mxu0 0.0
    %1361 = vmatprep.subr.mxu0 0.0
    %1362 = vmatpush2.msra.mxu0 0.0
    %1363 = vmatprep.subr.mxu0 0.0
    %1364 = vmatpush2.msra.mxu0 0.0
    %1365 = vmatprep.subr.mxu0 0.0
    %1366 = vmatpush2.msra.mxu0 0.0
    %1367 = vmatprep.subr.mxu0 0.0
    %1368 = vmatpush2.msra.mxu0 0.0
    %1369 = vmatprep.subr.mxu0 0.0
    %1370 = vmatpush2.msra.mxu0 0.0
    %1371 = vmatprep.subr.mxu0 0.0
    %1372 = vmatpush2.msra.mxu0 0.0
    %1373 = vmatprep.mubr.f32.mxu0 0.0
    %1374 = vmatmul.mubr.f32.gmra.mxu0 %v1237
    %v1375 = vpop.f32.mrf.mxu0
    %v1376 = vadd.f32 0.0, %v1375
    %v1377 = vpop.f32.mrf.mxu0
    %1378 = vdwg.mxu0
    %v1380 = vrot.slane %v1376, 4
    %v1382 = vadd.f32 %v235, %v1380
    %v1383 = vxor.u32 %v1382, 2147483648
    %v1384 = vmul.f32 %v1383, 1.442695
    %v1385 = vpow.pop %v1384
    %v1386 = vadd.f32 %v1385, 1.0
    %v1387 = vrcp.pop %v1386
    %v1388 = vmul.f32 1.0, %v1387
    %v1389 = vtanh.pop %v1382
    %v1391 = vrot.slane %v1226, 6
    %v1393 = vmul.f32 %v1388, %v1391
    %1395 = vrot.lane.b32.xlu0 %v1389, 64
    %v1396 = vpop.permute.xlu0 %1395
    %v1398 = vmul.f32 %v1388, %v1396
    %1400 = vrot.lane.b32.xlu0 %v1398, 32
    %v1401 = vpop.permute.xlu0 %1400
    %v1403 = vadd.f32 %v1393, %v1401
    %v1404 = vtanh.pop %v1403
    %1406 = vrot.lane.b32.xlu0 %v1404, 64
    %v1407 = vpop.permute.xlu0 %1406
    %v1409 = vmul.f32 %v1388, %v1407
    %v1411 = vrot.slane %v1409, 4
    %1412 = vrot.lane.b32.xlu0 %v1411, 32
    %v1413 = vpop.permute.xlu0 %1412
    %v1414 = vsel %vm156, %v1413, 0
    %1416 = vmatprep.subr.mxu0 0.0
    %1417 = vmatpush1.msra.mxu0 0.0
    %1418 = vmatprep.subr.mxu0 0.0
    %1419 = vmatpush1.msra.mxu0 0.0
    %1420 = vmatprep.subr.mxu0 0.0
    %1421 = vmatpush1.msra.mxu0 0.0
    %1422 = vmatprep.subr.mxu0 0.0
    %1423 = vmatpush1.msra.mxu0 0.0
    %1424 = vmatprep.subr.mxu0 0.0
    %1425 = vmatpush1.msra.mxu0 0.0
    %1426 = vmatprep.subr.mxu0 0.0
    %1427 = vmatpush1.msra.mxu0 0.0
    %1428 = vmatprep.subr.mxu0 0.0
    %1429 = vmatpush1.msra.mxu0 0.0
    %1430 = vmatprep.subr.mxu0 0.0
    %1431 = vmatpush1.msra.mxu0 0.0
    %1432 = vmatprep.subr.mxu0 0.0
    %1433 = vmatpush1.msra.mxu0 0.0
    %1434 = vmatprep.subr.mxu0 0.0
    %1435 = vmatpush1.msra.mxu0 0.0
    %1436 = vmatprep.subr.mxu0 0.0
    %1437 = vmatpush1.msra.mxu0 0.0
    %1438 = vmatprep.subr.mxu0 0.0
    %1439 = vmatpush1.msra.mxu0 0.0
    %1440 = vmatprep.subr.mxu0 0.0
    %1441 = vmatpush1.msra.mxu0 %v242
    %1442 = vmatprep.subr.mxu0 0.0
    %1443 = vmatpush1.msra.mxu0 %v241
    %1444 = vmatprep.subr.mxu0 0.0
    %1445 = vmatpush1.msra.mxu0 %v240
    %1446 = vmatprep.subr.mxu0 0.0
    %1447 = vmatpush1.msra.mxu0 %v239
    %1448 = vmatprep.subr.mxu0 0.0
    %1449 = vmatpush2.msra.mxu0 0.0
    %1450 = vmatprep.subr.mxu0 0.0
    %1451 = vmatpush2.msra.mxu0 0.0
    %1452 = vmatprep.subr.mxu0 0.0
    %1453 = vmatpush2.msra.mxu0 0.0
    %1454 = vmatprep.subr.mxu0 0.0
    %1455 = vmatpush2.msra.mxu0 0.0
    %1456 = vmatprep.subr.mxu0 0.0
    %1457 = vmatpush2.msra.mxu0 0.0
    %1458 = vmatprep.subr.mxu0 0.0
    %1459 = vmatpush2.msra.mxu0 0.0
    %1460 = vmatprep.subr.mxu0 0.0
    %1461 = vmatpush2.msra.mxu0 0.0
    %1462 = vmatprep.subr.mxu0 0.0
    %1463 = vmatpush2.msra.mxu0 0.0
    %1464 = vmatprep.subr.mxu0 0.0
    %1465 = vmatpush2.msra.mxu0 0.0
    %1466 = vmatprep.subr.mxu0 0.0
    %1467 = vmatpush2.msra.mxu0 0.0
    %1468 = vmatprep.subr.mxu0 0.0
    %1469 = vmatpush2.msra.mxu0 0.0
    %1470 = vmatprep.subr.mxu0 0.0
    %1471 = vmatpush2.msra.mxu0 0.0
    %1472 = vmatprep.subr.mxu0 0.0
    %1473 = vmatpush2.msra.mxu0 0.0
    %1474 = vmatprep.subr.mxu0 0.0
    %1475 = vmatpush2.msra.mxu0 0.0
    %1476 = vmatprep.subr.mxu0 0.0
    %1477 = vmatpush2.msra.mxu0 0.0
    %1478 = vmatprep.subr.mxu0 0.0
    %1479 = vmatpush2.msra.mxu0 0.0
    %1480 = vmatprep.mubr.f32.mxu0 0.0
    %1481 = vmatmul.mubr.f32.gmra.mxu0 %v1414
    %v1482 = vpop.f32.mrf.mxu0
    %v1483 = vadd.f32 %v352, %v1482
    %v1484 = vpop.f32.mrf.mxu0
    %1485 = vdwg.mxu0
    %1486 = vmatprep.subr.mxu0 0.0
    %1487 = vmatpush1.msra.mxu0 0.0
    %1488 = vmatprep.subr.mxu0 0.0
    %1489 = vmatpush1.msra.mxu0 0.0
    %1490 = vmatprep.subr.mxu0 0.0
    %1491 = vmatpush1.msra.mxu0 0.0
    %1492 = vmatprep.subr.mxu0 0.0
    %1493 = vmatpush1.msra.mxu0 0.0
    %1494 = vmatprep.subr.mxu0 0.0
    %1495 = vmatpush1.msra.mxu0 0.0
    %1496 = vmatprep.subr.mxu0 0.0
    %1497 = vmatpush1.msra.mxu0 0.0
    %1498 = vmatprep.subr.mxu0 0.0
    %1499 = vmatpush1.msra.mxu0 0.0
    %1500 = vmatprep.subr.mxu0 0.0
    %1501 = vmatpush1.msra.mxu0 0.0
    %1502 = vmatprep.subr.mxu0 0.0
    %1503 = vmatpush1.msra.mxu0 0.0
    %1504 = vmatprep.subr.mxu0 0.0
    %1505 = vmatpush1.msra.mxu0 0.0
    %1506 = vmatprep.subr.mxu0 0.0
    %1507 = vmatpush1.msra.mxu0 0.0
    %1508 = vmatprep.subr.mxu0 0.0
    %1509 = vmatpush1.msra.mxu0 0.0
    %1510 = vmatprep.subr.mxu0 0.0
    %1511 = vmatpush1.msra.mxu0 %v150
    %1512 = vmatprep.subr.mxu0 0.0
    %1513 = vmatpush1.msra.mxu0 %v149
    %1514 = vmatprep.subr.mxu0 0.0
    %1515 = vmatpush1.msra.mxu0 %v148
    %1516 = vmatprep.subr.mxu0 0.0
    %1517 = vmatpush1.msra.mxu0 %v147
    %1518 = vmatprep.subr.mxu0 0.0
    %1519 = vmatpush2.msra.mxu0 0.0
    %1520 = vmatprep.subr.mxu0 0.0
    %1521 = vmatpush2.msra.mxu0 0.0
    %1522 = vmatprep.subr.mxu0 0.0
    %1523 = vmatpush2.msra.mxu0 0.0
    %1524 = vmatprep.subr.mxu0 0.0
    %1525 = vmatpush2.msra.mxu0 0.0
    %1526 = vmatprep.subr.mxu0 0.0
    %1527 = vmatpush2.msra.mxu0 0.0
    %1528 = vmatprep.subr.mxu0 0.0
    %1529 = vmatpush2.msra.mxu0 0.0
    %1530 = vmatprep.subr.mxu0 0.0
    %1531 = vmatpush2.msra.mxu0 0.0
    %1532 = vmatprep.subr.mxu0 0.0
    %1533 = vmatpush2.msra.mxu0 0.0
    %1534 = vmatprep.subr.mxu0 0.0
    %1535 = vmatpush2.msra.mxu0 0.0
    %1536 = vmatprep.subr.mxu0 0.0
    %1537 = vmatpush2.msra.mxu0 0.0
    %1538 = vmatprep.subr.mxu0 0.0
    %1539 = vmatpush2.msra.mxu0 0.0
    %1540 = vmatprep.subr.mxu0 0.0
    %1541 = vmatpush2.msra.mxu0 0.0
    %1542 = vmatprep.subr.mxu0 0.0
    %1543 = vmatpush2.msra.mxu0 0.0
    %1544 = vmatprep.subr.mxu0 0.0
    %1545 = vmatpush2.msra.mxu0 0.0
    %1546 = vmatprep.subr.mxu0 0.0
    %1547 = vmatpush2.msra.mxu0 0.0
    %1548 = vmatprep.subr.mxu0 0.0
    %1549 = vmatpush2.msra.mxu0 0.0
    %1550 = vmatprep.mubr.f32.mxu0 0.0
    %1551 = vmatmul.mubr.f32.gmra.mxu0 %v1414
    %v1552 = vpop.f32.mrf.mxu0
    %v1553 = vadd.f32 0.0, %v1552
    %v1554 = vpop.f32.mrf.mxu0
    %1555 = vdwg.mxu0
    %v1557 = vrot.slane %v1553, 2
    %v1559 = vadd.f32 %v235, %v1557
    %v1560 = vxor.u32 %v1559, 2147483648
    %v1561 = vmul.f32 %v1560, 1.442695
    %v1562 = vpow.pop %v1561
    %v1563 = vadd.f32 %v1562, 1.0
    %v1564 = vrcp.pop %v1563
    %v1565 = vmul.f32 1.0, %v1564
    %v1566 = vtanh.pop %v1559
    %v1568 = vrot.slane %v1403, 6
    %v1570 = vmul.f32 %v1565, %v1568
    %1572 = vrot.lane.b32.xlu0 %v1566, 64
    %v1573 = vpop.permute.xlu0 %1572
    %v1575 = vmul.f32 %v1565, %v1573
    %1577 = vrot.lane.b32.xlu0 %v1575, 32
    %v1578 = vpop.permute.xlu0 %1577
    %v1580 = vadd.f32 %v1570, %v1578
    %v1581 = vtanh.pop %v1580
    %1583 = vrot.lane.b32.xlu0 %v1581, 64
    %v1584 = vpop.permute.xlu0 %1583
    %v1586 = vmul.f32 %v1565, %v1584
    %v1588 = vrot.slane %v1586, 6
    %1589 = vrot.lane.b32.xlu0 %v1588, 32
    %v1590 = vpop.permute.xlu0 %1589
    %v1591 = vsel %vm156, %v1590, 0
    %1593 = vmatprep.subr.mxu0 0.0
    %1594 = vmatpush1.msra.mxu0 0.0
    %1595 = vmatprep.subr.mxu0 0.0
    %1596 = vmatpush1.msra.mxu0 0.0
    %1597 = vmatprep.subr.mxu0 0.0
    %1598 = vmatpush1.msra.mxu0 0.0
    %1599 = vmatprep.subr.mxu0 0.0
    %1600 = vmatpush1.msra.mxu0 0.0
    %1601 = vmatprep.subr.mxu0 0.0
    %1602 = vmatpush1.msra.mxu0 0.0
    %1603 = vmatprep.subr.mxu0 0.0
    %1604 = vmatpush1.msra.mxu0 0.0
    %1605 = vmatprep.subr.mxu0 0.0
    %1606 = vmatpush1.msra.mxu0 0.0
    %1607 = vmatprep.subr.mxu0 0.0
    %1608 = vmatpush1.msra.mxu0 0.0
    %1609 = vmatprep.subr.mxu0 0.0
    %1610 = vmatpush1.msra.mxu0 0.0
    %1611 = vmatprep.subr.mxu0 0.0
    %1612 = vmatpush1.msra.mxu0 0.0
    %1613 = vmatprep.subr.mxu0 0.0
    %1614 = vmatpush1.msra.mxu0 0.0
    %1615 = vmatprep.subr.mxu0 0.0
    %1616 = vmatpush1.msra.mxu0 0.0
    %1617 = vmatprep.subr.mxu0 0.0
    %1618 = vmatpush1.msra.mxu0 %v242
    %1619 = vmatprep.subr.mxu0 0.0
    %1620 = vmatpush1.msra.mxu0 %v241
    %1621 = vmatprep.subr.mxu0 0.0
    %1622 = vmatpush1.msra.mxu0 %v240
    %1623 = vmatprep.subr.mxu0 0.0
    %1624 = vmatpush1.msra.mxu0 %v239
    %1625 = vmatprep.subr.mxu0 0.0
    %1626 = vmatpush2.msra.mxu0 0.0
    %1627 = vmatprep.subr.mxu0 0.0
    %1628 = vmatpush2.msra.mxu0 0.0
    %1629 = vmatprep.subr.mxu0 0.0
    %1630 = vmatpush2.msra.mxu0 0.0
    %1631 = vmatprep.subr.mxu0 0.0
    %1632 = vmatpush2.msra.mxu0 0.0
    %1633 = vmatprep.subr.mxu0 0.0
    %1634 = vmatpush2.msra.mxu0 0.0
    %1635 = vmatprep.subr.mxu0 0.0
    %1636 = vmatpush2.msra.mxu0 0.0
    %1637 = vmatprep.subr.mxu0 0.0
    %1638 = vmatpush2.msra.mxu0 0.0
    %1639 = vmatprep.subr.mxu0 0.0
    %1640 = vmatpush2.msra.mxu0 0.0
    %1641 = vmatprep.subr.mxu0 0.0
    %1642 = vmatpush2.msra.mxu0 0.0
    %1643 = vmatprep.subr.mxu0 0.0
    %1644 = vmatpush2.msra.mxu0 0.0
    %1645 = vmatprep.subr.mxu0 0.0
    %1646 = vmatpush2.msra.mxu0 0.0
    %1647 = vmatprep.subr.mxu0 0.0
    %1648 = vmatpush2.msra.mxu0 0.0
    %1649 = vmatprep.subr.mxu0 0.0
    %1650 = vmatpush2.msra.mxu0 0.0
    %1651 = vmatprep.subr.mxu0 0.0
    %1652 = vmatpush2.msra.mxu0 0.0
    %1653 = vmatprep.subr.mxu0 0.0
    %1654 = vmatpush2.msra.mxu0 0.0
    %1655 = vmatprep.subr.mxu0 0.0
    %1656 = vmatpush2.msra.mxu0 0.0
    %1657 = vmatprep.mubr.f32.mxu0 0.0
    %1658 = vmatmul.mubr.f32.gmra.mxu0 %v1591
    %v1659 = vpop.f32.mrf.mxu0
    %v1660 = vadd.f32 %v352, %v1659
    %v1661 = vpop.f32.mrf.mxu0
    %1662 = vdwg.mxu0
    %1663 = vrot.lane.b32.xlu0 %v1586, 32
    %v1664 = vpop.permute.xlu0 %1663
    %vm1666 = vcmask 261126
    %1667 = vst.msk [vmem:[%s6 - $0x6] sm:$0xc0] %vm1666, %v1664
    %1669 = vrot.lane.b32.xlu0 %v1580, 96
    %v1670 = vpop.permute.xlu0 %1669
    %s1672 = scalar_lea.vmem %s6, 4
    %1673 = vst.msk [vmem:[%s1672 - $0x6] sm:$0xc0] %vm1666, %v1670
    %v1674 = vld [vmem:[%s238 + $0x20] sm:$0xff]
    %v1675 = vld [vmem:[%s238 + $0x28] sm:$0xff]
    %v1676 = vld [vmem:[%s238 + $0x30] sm:$0xff]
    %v1677 = vld [vmem:[%s238 + $0x38] sm:$0xff]
    %s1678 = scalar_lea.vmem %s2, 2
    %v1679 = vld [vmem:[%s1678] sm:$0x3]
    %s1680 = scalar_lea.vmem %s2, 6
    %v1681 = vld [vmem:[%s1680] sm:$0x3]
    %v1683 = vsel %vm156, %v1679, 0
    %1685 = vmatprep.subr.mxu0 0.0
    %1686 = vmatpush1.msra.mxu0 0.0
    %1687 = vmatprep.subr.mxu0 0.0
    %1688 = vmatpush1.msra.mxu0 0.0
    %1689 = vmatprep.subr.mxu0 0.0
    %1690 = vmatpush1.msra.mxu0 0.0
    %1691 = vmatprep.subr.mxu0 0.0
    %1692 = vmatpush1.msra.mxu0 0.0
    %1693 = vmatprep.subr.mxu0 0.0
    %1694 = vmatpush1.msra.mxu0 0.0
    %1695 = vmatprep.subr.mxu0 0.0
    %1696 = vmatpush1.msra.mxu0 0.0
    %1697 = vmatprep.subr.mxu0 0.0
    %1698 = vmatpush1.msra.mxu0 0.0
    %1699 = vmatprep.subr.mxu0 0.0
    %1700 = vmatpush1.msra.mxu0 0.0
    %1701 = vmatprep.subr.mxu0 0.0
    %1702 = vmatpush1.msra.mxu0 0.0
    %1703 = vmatprep.subr.mxu0 0.0
    %1704 = vmatpush1.msra.mxu0 0.0
    %1705 = vmatprep.subr.mxu0 0.0
    %1706 = vmatpush1.msra.mxu0 0.0
    %1707 = vmatprep.subr.mxu0 0.0
    %1708 = vmatpush1.msra.mxu0 0.0
    %1709 = vmatprep.subr.mxu0 0.0
    %1710 = vmatpush1.msra.mxu0 %v1677
    %1711 = vmatprep.subr.mxu0 0.0
    %1712 = vmatpush1.msra.mxu0 %v1676
    %1713 = vmatprep.subr.mxu0 0.0
    %1714 = vmatpush1.msra.mxu0 %v1675
    %1715 = vmatprep.subr.mxu0 0.0
    %1716 = vmatpush1.msra.mxu0 %v1674
    %1717 = vmatprep.subr.mxu0 0.0
    %1718 = vmatpush2.msra.mxu0 0.0
    %1719 = vmatprep.subr.mxu0 0.0
    %1720 = vmatpush2.msra.mxu0 0.0
    %1721 = vmatprep.subr.mxu0 0.0
    %1722 = vmatpush2.msra.mxu0 0.0
    %1723 = vmatprep.subr.mxu0 0.0
    %1724 = vmatpush2.msra.mxu0 0.0
    %1725 = vmatprep.subr.mxu0 0.0
    %1726 = vmatpush2.msra.mxu0 0.0
    %1727 = vmatprep.subr.mxu0 0.0
    %1728 = vmatpush2.msra.mxu0 0.0
    %1729 = vmatprep.subr.mxu0 0.0
    %1730 = vmatpush2.msra.mxu0 0.0
    %1731 = vmatprep.subr.mxu0 0.0
    %1732 = vmatpush2.msra.mxu0 0.0
    %1733 = vmatprep.subr.mxu0 0.0
    %1734 = vmatpush2.msra.mxu0 0.0
    %1735 = vmatprep.subr.mxu0 0.0
    %1736 = vmatpush2.msra.mxu0 0.0
    %1737 = vmatprep.subr.mxu0 0.0
    %1738 = vmatpush2.msra.mxu0 0.0
    %1739 = vmatprep.subr.mxu0 0.0
    %1740 = vmatpush2.msra.mxu0 0.0
    %1741 = vmatprep.subr.mxu0 0.0
    %1742 = vmatpush2.msra.mxu0 0.0
    %1743 = vmatprep.subr.mxu0 0.0
    %1744 = vmatpush2.msra.mxu0 0.0
    %1745 = vmatprep.subr.mxu0 0.0
    %1746 = vmatpush2.msra.mxu0 0.0
    %1747 = vmatprep.subr.mxu0 0.0
    %1748 = vmatpush2.msra.mxu0 0.0
    %1749 = vmatprep.mubr.f32.mxu0 0.0
    %1750 = vmatmul.mubr.f32.gmra.mxu0 %v1683
    %v1751 = vpop.f32.mrf.mxu0
    %v1752 = vadd.f32 0.0, %v1751
    %v1753 = vpop.f32.mrf.mxu0
    %1754 = vdwg.mxu0
    %v1755 = vadd.f32 %v425, %v1752
    %v1756 = vxor.u32 %v1755, 2147483648
    %v1757 = vmul.f32 %v1756, 1.442695
    %v1758 = vpow.pop %v1757
    %v1759 = vadd.f32 %v1758, 1.0
    %v1760 = vrcp.pop %v1759
    %v1761 = vmul.f32 1.0, %v1760
    %v1762 = vtanh.pop %v1755
    %1764 = vrot.lane.b32.xlu0 %v1681, 32
    %v1765 = vpop.permute.xlu0 %1764
    %v1767 = vmul.f32 %v1761, %v1765
    %1769 = vrot.lane.b32.xlu0 %v1762, 64
    %v1770 = vpop.permute.xlu0 %1769
    %v1772 = vmul.f32 %v1761, %v1770
    %1774 = vrot.lane.b32.xlu0 %v1772, 32
    %v1775 = vpop.permute.xlu0 %1774
    %v1777 = vadd.f32 %v1767, %v1775
    %v1778 = vtanh.pop %v1777
    %1780 = vrot.lane.b32.xlu0 %v1778, 64
    %v1781 = vpop.permute.xlu0 %1780
    %v1783 = vmul.f32 %v1761, %v1781
    %1785 = vrot.lane.b32.xlu0 %v1783, 32
    %v1786 = vpop.permute.xlu0 %1785
    %v1787 = vsel %vm156, %v1786, 0
    %1789 = vmatprep.subr.mxu0 0.0
    %1790 = vmatpush1.msra.mxu0 0.0
    %1791 = vmatprep.subr.mxu0 0.0
    %1792 = vmatpush1.msra.mxu0 0.0
    %1793 = vmatprep.subr.mxu0 0.0
    %1794 = vmatpush1.msra.mxu0 0.0
    %1795 = vmatprep.subr.mxu0 0.0
    %1796 = vmatpush1.msra.mxu0 0.0
    %1797 = vmatprep.subr.mxu0 0.0
    %1798 = vmatpush1.msra.mxu0 0.0
    %1799 = vmatprep.subr.mxu0 0.0
    %1800 = vmatpush1.msra.mxu0 0.0
    %1801 = vmatprep.subr.mxu0 0.0
    %1802 = vmatpush1.msra.mxu0 0.0
    %1803 = vmatprep.subr.mxu0 0.0
    %1804 = vmatpush1.msra.mxu0 0.0
    %1805 = vmatprep.subr.mxu0 0.0
    %1806 = vmatpush1.msra.mxu0 0.0
    %1807 = vmatprep.subr.mxu0 0.0
    %1808 = vmatpush1.msra.mxu0 0.0
    %1809 = vmatprep.subr.mxu0 0.0
    %1810 = vmatpush1.msra.mxu0 0.0
    %1811 = vmatprep.subr.mxu0 0.0
    %1812 = vmatpush1.msra.mxu0 0.0
    %1813 = vmatprep.subr.mxu0 0.0
    %1814 = vmatpush1.msra.mxu0 %v1677
    %1815 = vmatprep.subr.mxu0 0.0
    %1816 = vmatpush1.msra.mxu0 %v1676
    %1817 = vmatprep.subr.mxu0 0.0
    %1818 = vmatpush1.msra.mxu0 %v1675
    %1819 = vmatprep.subr.mxu0 0.0
    %1820 = vmatpush1.msra.mxu0 %v1674
    %1821 = vmatprep.subr.mxu0 0.0
    %1822 = vmatpush2.msra.mxu0 0.0
    %1823 = vmatprep.subr.mxu0 0.0
    %1824 = vmatpush2.msra.mxu0 0.0
    %1825 = vmatprep.subr.mxu0 0.0
    %1826 = vmatpush2.msra.mxu0 0.0
    %1827 = vmatprep.subr.mxu0 0.0
    %1828 = vmatpush2.msra.mxu0 0.0
    %1829 = vmatprep.subr.mxu0 0.0
    %1830 = vmatpush2.msra.mxu0 0.0
    %1831 = vmatprep.subr.mxu0 0.0
    %1832 = vmatpush2.msra.mxu0 0.0
    %1833 = vmatprep.subr.mxu0 0.0
    %1834 = vmatpush2.msra.mxu0 0.0
    %1835 = vmatprep.subr.mxu0 0.0
    %1836 = vmatpush2.msra.mxu0 0.0
    %1837 = vmatprep.subr.mxu0 0.0
    %1838 = vmatpush2.msra.mxu0 0.0
    %1839 = vmatprep.subr.mxu0 0.0
    %1840 = vmatpush2.msra.mxu0 0.0
    %1841 = vmatprep.subr.mxu0 0.0
    %1842 = vmatpush2.msra.mxu0 0.0
    %1843 = vmatprep.subr.mxu0 0.0
    %1844 = vmatpush2.msra.mxu0 0.0
    %1845 = vmatprep.subr.mxu0 0.0
    %1846 = vmatpush2.msra.mxu0 0.0
    %1847 = vmatprep.subr.mxu0 0.0
    %1848 = vmatpush2.msra.mxu0 0.0
    %1849 = vmatprep.subr.mxu0 0.0
    %1850 = vmatpush2.msra.mxu0 0.0
    %1851 = vmatprep.subr.mxu0 0.0
    %1852 = vmatpush2.msra.mxu0 0.0
    %1853 = vmatprep.mubr.f32.mxu0 0.0
    %1854 = vmatmul.mubr.f32.gmra.mxu0 %v1787
    %v1855 = vpop.f32.mrf.mxu0
    %v1856 = vadd.f32 0.0, %v1855
    %v1857 = vpop.f32.mrf.mxu0
    %1858 = vdwg.mxu0
    %v1859 = vadd.f32 %v602, %v1856
    %v1860 = vxor.u32 %v1859, 2147483648
    %v1861 = vmul.f32 %v1860, 1.442695
    %v1862 = vpow.pop %v1861
    %v1863 = vadd.f32 %v1862, 1.0
    %v1864 = vrcp.pop %v1863
    %v1865 = vmul.f32 1.0, %v1864
    %v1866 = vtanh.pop %v1859
    %v1867 = vmul.f32 %v1865, %v1777
    %1869 = vrot.lane.b32.xlu0 %v1866, 64
    %v1870 = vpop.permute.xlu0 %1869
    %v1872 = vmul.f32 %v1865, %v1870
    %1874 = vrot.lane.b32.xlu0 %v1872, 32
    %v1875 = vpop.permute.xlu0 %1874
    %v1877 = vadd.f32 %v1867, %v1875
    %v1878 = vtanh.pop %v1877
    %1880 = vrot.lane.b32.xlu0 %v1878, 64
    %v1881 = vpop.permute.xlu0 %1880
    %v1883 = vmul.f32 %v1865, %v1881
    %1885 = vrot.lane.b32.xlu0 %v1883, 32
    %v1886 = vpop.permute.xlu0 %1885
    %v1887 = vsel %vm156, %v1886, 0
    %1889 = vmatprep.subr.mxu0 0.0
    %1890 = vmatpush1.msra.mxu0 0.0
    %1891 = vmatprep.subr.mxu0 0.0
    %1892 = vmatpush1.msra.mxu0 0.0
    %1893 = vmatprep.subr.mxu0 0.0
    %1894 = vmatpush1.msra.mxu0 0.0
    %1895 = vmatprep.subr.mxu0 0.0
    %1896 = vmatpush1.msra.mxu0 0.0
    %1897 = vmatprep.subr.mxu0 0.0
    %1898 = vmatpush1.msra.mxu0 0.0
    %1899 = vmatprep.subr.mxu0 0.0
    %1900 = vmatpush1.msra.mxu0 0.0
    %1901 = vmatprep.subr.mxu0 0.0
    %1902 = vmatpush1.msra.mxu0 0.0
    %1903 = vmatprep.subr.mxu0 0.0
    %1904 = vmatpush1.msra.mxu0 0.0
    %1905 = vmatprep.subr.mxu0 0.0
    %1906 = vmatpush1.msra.mxu0 0.0
    %1907 = vmatprep.subr.mxu0 0.0
    %1908 = vmatpush1.msra.mxu0 0.0
    %1909 = vmatprep.subr.mxu0 0.0
    %1910 = vmatpush1.msra.mxu0 0.0
    %1911 = vmatprep.subr.mxu0 0.0
    %1912 = vmatpush1.msra.mxu0 0.0
    %1913 = vmatprep.subr.mxu0 0.0
    %1914 = vmatpush1.msra.mxu0 %v1677
    %1915 = vmatprep.subr.mxu0 0.0
    %1916 = vmatpush1.msra.mxu0 %v1676
    %1917 = vmatprep.subr.mxu0 0.0
    %1918 = vmatpush1.msra.mxu0 %v1675
    %1919 = vmatprep.subr.mxu0 0.0
    %1920 = vmatpush1.msra.mxu0 %v1674
    %1921 = vmatprep.subr.mxu0 0.0
    %1922 = vmatpush2.msra.mxu0 0.0
    %1923 = vmatprep.subr.mxu0 0.0
    %1924 = vmatpush2.msra.mxu0 0.0
    %1925 = vmatprep.subr.mxu0 0.0
    %1926 = vmatpush2.msra.mxu0 0.0
    %1927 = vmatprep.subr.mxu0 0.0
    %1928 = vmatpush2.msra.mxu0 0.0
    %1929 = vmatprep.subr.mxu0 0.0
    %1930 = vmatpush2.msra.mxu0 0.0
    %1931 = vmatprep.subr.mxu0 0.0
    %1932 = vmatpush2.msra.mxu0 0.0
    %1933 = vmatprep.subr.mxu0 0.0
    %1934 = vmatpush2.msra.mxu0 0.0
    %1935 = vmatprep.subr.mxu0 0.0
    %1936 = vmatpush2.msra.mxu0 0.0
    %1937 = vmatprep.subr.mxu0 0.0
    %1938 = vmatpush2.msra.mxu0 0.0
    %1939 = vmatprep.subr.mxu0 0.0
    %1940 = vmatpush2.msra.mxu0 0.0
    %1941 = vmatprep.subr.mxu0 0.0
    %1942 = vmatpush2.msra.mxu0 0.0
    %1943 = vmatprep.subr.mxu0 0.0
    %1944 = vmatpush2.msra.mxu0 0.0
    %1945 = vmatprep.subr.mxu0 0.0
    %1946 = vmatpush2.msra.mxu0 0.0
    %1947 = vmatprep.subr.mxu0 0.0
    %1948 = vmatpush2.msra.mxu0 0.0
    %1949 = vmatprep.subr.mxu0 0.0
    %1950 = vmatpush2.msra.mxu0 0.0
    %1951 = vmatprep.subr.mxu0 0.0
    %1952 = vmatpush2.msra.mxu0 0.0
    %1953 = vmatprep.mubr.f32.mxu0 0.0
    %1954 = vmatmul.mubr.f32.gmra.mxu0 %v1887
    %v1955 = vpop.f32.mrf.mxu0
    %v1956 = vadd.f32 0.0, %v1955
    %v1957 = vpop.f32.mrf.mxu0
    %1958 = vdwg.mxu0
    %v1959 = vadd.f32 %v779, %v1956
    %v1960 = vxor.u32 %v1959, 2147483648
    %v1961 = vmul.f32 %v1960, 1.442695
    %v1962 = vpow.pop %v1961
    %v1963 = vadd.f32 %v1962, 1.0
    %v1964 = vrcp.pop %v1963
    %v1965 = vmul.f32 1.0, %v1964
    %v1966 = vtanh.pop %v1959
    %v1967 = vmul.f32 %v1965, %v1877
    %1969 = vrot.lane.b32.xlu0 %v1966, 64
    %v1970 = vpop.permute.xlu0 %1969
    %v1972 = vmul.f32 %v1965, %v1970
    %1974 = vrot.lane.b32.xlu0 %v1972, 32
    %v1975 = vpop.permute.xlu0 %1974
    %v1977 = vadd.f32 %v1967, %v1975
    %v1978 = vtanh.pop %v1977
    %1980 = vrot.lane.b32.xlu0 %v1978, 64
    %v1981 = vpop.permute.xlu0 %1980
    %v1983 = vmul.f32 %v1965, %v1981
    %1985 = vrot.lane.b32.xlu0 %v1983, 32
    %v1986 = vpop.permute.xlu0 %1985
    %v1987 = vsel %vm156, %v1986, 0
    %1989 = vmatprep.subr.mxu0 0.0
    %1990 = vmatpush1.msra.mxu0 0.0
    %1991 = vmatprep.subr.mxu0 0.0
    %1992 = vmatpush1.msra.mxu0 0.0
    %1993 = vmatprep.subr.mxu0 0.0
    %1994 = vmatpush1.msra.mxu0 0.0
    %1995 = vmatprep.subr.mxu0 0.0
    %1996 = vmatpush1.msra.mxu0 0.0
    %1997 = vmatprep.subr.mxu0 0.0
    %1998 = vmatpush1.msra.mxu0 0.0
    %1999 = vmatprep.subr.mxu0 0.0
    %2000 = vmatpush1.msra.mxu0 0.0
    %2001 = vmatprep.subr.mxu0 0.0
    %2002 = vmatpush1.msra.mxu0 0.0
    %2003 = vmatprep.subr.mxu0 0.0
    %2004 = vmatpush1.msra.mxu0 0.0
    %2005 = vmatprep.subr.mxu0 0.0
    %2006 = vmatpush1.msra.mxu0 0.0
    %2007 = vmatprep.subr.mxu0 0.0
    %2008 = vmatpush1.msra.mxu0 0.0
    %2009 = vmatprep.subr.mxu0 0.0
    %2010 = vmatpush1.msra.mxu0 0.0
    %2011 = vmatprep.subr.mxu0 0.0
    %2012 = vmatpush1.msra.mxu0 0.0
    %2013 = vmatprep.subr.mxu0 0.0
    %2014 = vmatpush1.msra.mxu0 %v1677
    %2015 = vmatprep.subr.mxu0 0.0
    %2016 = vmatpush1.msra.mxu0 %v1676
    %2017 = vmatprep.subr.mxu0 0.0
    %2018 = vmatpush1.msra.mxu0 %v1675
    %2019 = vmatprep.subr.mxu0 0.0
    %2020 = vmatpush1.msra.mxu0 %v1674
    %2021 = vmatprep.subr.mxu0 0.0
    %2022 = vmatpush2.msra.mxu0 0.0
    %2023 = vmatprep.subr.mxu0 0.0
    %2024 = vmatpush2.msra.mxu0 0.0
    %2025 = vmatprep.subr.mxu0 0.0
    %2026 = vmatpush2.msra.mxu0 0.0
    %2027 = vmatprep.subr.mxu0 0.0
    %2028 = vmatpush2.msra.mxu0 0.0
    %2029 = vmatprep.subr.mxu0 0.0
    %2030 = vmatpush2.msra.mxu0 0.0
    %2031 = vmatprep.subr.mxu0 0.0
    %2032 = vmatpush2.msra.mxu0 0.0
    %2033 = vmatprep.subr.mxu0 0.0
    %2034 = vmatpush2.msra.mxu0 0.0
    %2035 = vmatprep.subr.mxu0 0.0
    %2036 = vmatpush2.msra.mxu0 0.0
    %2037 = vmatprep.subr.mxu0 0.0
    %2038 = vmatpush2.msra.mxu0 0.0
    %2039 = vmatprep.subr.mxu0 0.0
    %2040 = vmatpush2.msra.mxu0 0.0
    %2041 = vmatprep.subr.mxu0 0.0
    %2042 = vmatpush2.msra.mxu0 0.0
    %2043 = vmatprep.subr.mxu0 0.0
    %2044 = vmatpush2.msra.mxu0 0.0
    %2045 = vmatprep.subr.mxu0 0.0
    %2046 = vmatpush2.msra.mxu0 0.0
    %2047 = vmatprep.subr.mxu0 0.0
    %2048 = vmatpush2.msra.mxu0 0.0
    %2049 = vmatprep.subr.mxu0 0.0
    %2050 = vmatpush2.msra.mxu0 0.0
    %2051 = vmatprep.subr.mxu0 0.0
    %2052 = vmatpush2.msra.mxu0 0.0
    %2053 = vmatprep.mubr.f32.mxu0 0.0
    %2054 = vmatmul.mubr.f32.gmra.mxu0 %v1987
    %v2055 = vpop.f32.mrf.mxu0
    %v2056 = vadd.f32 0.0, %v2055
    %v2057 = vpop.f32.mrf.mxu0
    %2058 = vdwg.mxu0
    %v2059 = vadd.f32 %v956, %v2056
    %v2060 = vxor.u32 %v2059, 2147483648
    %v2061 = vmul.f32 %v2060, 1.442695
    %v2062 = vpow.pop %v2061
    %v2063 = vadd.f32 %v2062, 1.0
    %v2064 = vrcp.pop %v2063
    %v2065 = vmul.f32 1.0, %v2064
    %v2066 = vtanh.pop %v2059
    %v2067 = vmul.f32 %v2065, %v1977
    %2069 = vrot.lane.b32.xlu0 %v2066, 64
    %v2070 = vpop.permute.xlu0 %2069
    %v2072 = vmul.f32 %v2065, %v2070
    %2074 = vrot.lane.b32.xlu0 %v2072, 32
    %v2075 = vpop.permute.xlu0 %2074
    %v2077 = vadd.f32 %v2067, %v2075
    %v2078 = vtanh.pop %v2077
    %2080 = vrot.lane.b32.xlu0 %v2078, 64
    %v2081 = vpop.permute.xlu0 %2080
    %v2083 = vmul.f32 %v2065, %v2081
    %2085 = vrot.lane.b32.xlu0 %v2083, 32
    %v2086 = vpop.permute.xlu0 %2085
    %v2087 = vsel %vm156, %v2086, 0
    %2089 = vmatprep.subr.mxu0 0.0
    %2090 = vmatpush1.msra.mxu0 0.0
    %2091 = vmatprep.subr.mxu0 0.0
    %2092 = vmatpush1.msra.mxu0 0.0
    %2093 = vmatprep.subr.mxu0 0.0
    %2094 = vmatpush1.msra.mxu0 0.0
    %2095 = vmatprep.subr.mxu0 0.0
    %2096 = vmatpush1.msra.mxu0 0.0
    %2097 = vmatprep.subr.mxu0 0.0
    %2098 = vmatpush1.msra.mxu0 0.0
    %2099 = vmatprep.subr.mxu0 0.0
    %2100 = vmatpush1.msra.mxu0 0.0
    %2101 = vmatprep.subr.mxu0 0.0
    %2102 = vmatpush1.msra.mxu0 0.0
    %2103 = vmatprep.subr.mxu0 0.0
    %2104 = vmatpush1.msra.mxu0 0.0
    %2105 = vmatprep.subr.mxu0 0.0
    %2106 = vmatpush1.msra.mxu0 0.0
    %2107 = vmatprep.subr.mxu0 0.0
    %2108 = vmatpush1.msra.mxu0 0.0
    %2109 = vmatprep.subr.mxu0 0.0
    %2110 = vmatpush1.msra.mxu0 0.0
    %2111 = vmatprep.subr.mxu0 0.0
    %2112 = vmatpush1.msra.mxu0 0.0
    %2113 = vmatprep.subr.mxu0 0.0
    %2114 = vmatpush1.msra.mxu0 %v1677
    %2115 = vmatprep.subr.mxu0 0.0
    %2116 = vmatpush1.msra.mxu0 %v1676
    %2117 = vmatprep.subr.mxu0 0.0
    %2118 = vmatpush1.msra.mxu0 %v1675
    %2119 = vmatprep.subr.mxu0 0.0
    %2120 = vmatpush1.msra.mxu0 %v1674
    %2121 = vmatprep.subr.mxu0 0.0
    %2122 = vmatpush2.msra.mxu0 0.0
    %2123 = vmatprep.subr.mxu0 0.0
    %2124 = vmatpush2.msra.mxu0 0.0
    %2125 = vmatprep.subr.mxu0 0.0
    %2126 = vmatpush2.msra.mxu0 0.0
    %2127 = vmatprep.subr.mxu0 0.0
    %2128 = vmatpush2.msra.mxu0 0.0
    %2129 = vmatprep.subr.mxu0 0.0
    %2130 = vmatpush2.msra.mxu0 0.0
    %2131 = vmatprep.subr.mxu0 0.0
    %2132 = vmatpush2.msra.mxu0 0.0
    %2133 = vmatprep.subr.mxu0 0.0
    %2134 = vmatpush2.msra.mxu0 0.0
    %2135 = vmatprep.subr.mxu0 0.0
    %2136 = vmatpush2.msra.mxu0 0.0
    %2137 = vmatprep.subr.mxu0 0.0
    %2138 = vmatpush2.msra.mxu0 0.0
    %2139 = vmatprep.subr.mxu0 0.0
    %2140 = vmatpush2.msra.mxu0 0.0
    %2141 = vmatprep.subr.mxu0 0.0
    %2142 = vmatpush2.msra.mxu0 0.0
    %2143 = vmatprep.subr.mxu0 0.0
    %2144 = vmatpush2.msra.mxu0 0.0
    %2145 = vmatprep.subr.mxu0 0.0
    %2146 = vmatpush2.msra.mxu0 0.0
    %2147 = vmatprep.subr.mxu0 0.0
    %2148 = vmatpush2.msra.mxu0 0.0
    %2149 = vmatprep.subr.mxu0 0.0
    %2150 = vmatpush2.msra.mxu0 0.0
    %2151 = vmatprep.subr.mxu0 0.0
    %2152 = vmatpush2.msra.mxu0 0.0
    %2153 = vmatprep.mubr.f32.mxu0 0.0
    %2154 = vmatmul.mubr.f32.gmra.mxu0 %v2087
    %v2155 = vpop.f32.mrf.mxu0
    %v2156 = vadd.f32 0.0, %v2155
    %v2157 = vpop.f32.mrf.mxu0
    %2158 = vdwg.mxu0
    %v2159 = vadd.f32 %v1129, %v2156
    %v2160 = vxor.u32 %v2159, 2147483648
    %v2161 = vmul.f32 %v2160, 1.442695
    %v2162 = vpow.pop %v2161
    %v2163 = vadd.f32 %v2162, 1.0
    %v2164 = vrcp.pop %v2163
    %v2165 = vmul.f32 1.0, %v2164
    %v2166 = vtanh.pop %v2159
    %v2167 = vmul.f32 %v2165, %v2077
    %2169 = vrot.lane.b32.xlu0 %v2166, 64
    %v2170 = vpop.permute.xlu0 %2169
    %v2172 = vmul.f32 %v2165, %v2170
    %2174 = vrot.lane.b32.xlu0 %v2172, 32
    %v2175 = vpop.permute.xlu0 %2174
    %v2177 = vadd.f32 %v2167, %v2175
    %v2178 = vtanh.pop %v2177
    %2180 = vrot.lane.b32.xlu0 %v2178, 64
    %v2181 = vpop.permute.xlu0 %2180
    %v2183 = vmul.f32 %v2165, %v2181
    %2185 = vrot.lane.b32.xlu0 %v2183, 32
    %v2186 = vpop.permute.xlu0 %2185
    %v2187 = vsel %vm156, %v2186, 0
    %2189 = vmatprep.subr.mxu0 0.0
    %2190 = vmatpush1.msra.mxu0 0.0
    %2191 = vmatprep.subr.mxu0 0.0
    %2192 = vmatpush1.msra.mxu0 0.0
    %2193 = vmatprep.subr.mxu0 0.0
    %2194 = vmatpush1.msra.mxu0 0.0
    %2195 = vmatprep.subr.mxu0 0.0
    %2196 = vmatpush1.msra.mxu0 0.0
    %2197 = vmatprep.subr.mxu0 0.0
    %2198 = vmatpush1.msra.mxu0 0.0
    %2199 = vmatprep.subr.mxu0 0.0
    %2200 = vmatpush1.msra.mxu0 0.0
    %2201 = vmatprep.subr.mxu0 0.0
    %2202 = vmatpush1.msra.mxu0 0.0
    %2203 = vmatprep.subr.mxu0 0.0
    %2204 = vmatpush1.msra.mxu0 0.0
    %2205 = vmatprep.subr.mxu0 0.0
    %2206 = vmatpush1.msra.mxu0 0.0
    %2207 = vmatprep.subr.mxu0 0.0
    %2208 = vmatpush1.msra.mxu0 0.0
    %2209 = vmatprep.subr.mxu0 0.0
    %2210 = vmatpush1.msra.mxu0 0.0
    %2211 = vmatprep.subr.mxu0 0.0
    %2212 = vmatpush1.msra.mxu0 0.0
    %2213 = vmatprep.subr.mxu0 0.0
    %2214 = vmatpush1.msra.mxu0 %v1677
    %2215 = vmatprep.subr.mxu0 0.0
    %2216 = vmatpush1.msra.mxu0 %v1676
    %2217 = vmatprep.subr.mxu0 0.0
    %2218 = vmatpush1.msra.mxu0 %v1675
    %2219 = vmatprep.subr.mxu0 0.0
    %2220 = vmatpush1.msra.mxu0 %v1674
    %2221 = vmatprep.subr.mxu0 0.0
    %2222 = vmatpush2.msra.mxu0 0.0
    %2223 = vmatprep.subr.mxu0 0.0
    %2224 = vmatpush2.msra.mxu0 0.0
    %2225 = vmatprep.subr.mxu0 0.0
    %2226 = vmatpush2.msra.mxu0 0.0
    %2227 = vmatprep.subr.mxu0 0.0
    %2228 = vmatpush2.msra.mxu0 0.0
    %2229 = vmatprep.subr.mxu0 0.0
    %2230 = vmatpush2.msra.mxu0 0.0
    %2231 = vmatprep.subr.mxu0 0.0
    %2232 = vmatpush2.msra.mxu0 0.0
    %2233 = vmatprep.subr.mxu0 0.0
    %2234 = vmatpush2.msra.mxu0 0.0
    %2235 = vmatprep.subr.mxu0 0.0
    %2236 = vmatpush2.msra.mxu0 0.0
    %2237 = vmatprep.subr.mxu0 0.0
    %2238 = vmatpush2.msra.mxu0 0.0
    %2239 = vmatprep.subr.mxu0 0.0
    %2240 = vmatpush2.msra.mxu0 0.0
    %2241 = vmatprep.subr.mxu0 0.0
    %2242 = vmatpush2.msra.mxu0 0.0
    %2243 = vmatprep.subr.mxu0 0.0
    %2244 = vmatpush2.msra.mxu0 0.0
    %2245 = vmatprep.subr.mxu0 0.0
    %2246 = vmatpush2.msra.mxu0 0.0
    %2247 = vmatprep.subr.mxu0 0.0
    %2248 = vmatpush2.msra.mxu0 0.0
    %2249 = vmatprep.subr.mxu0 0.0
    %2250 = vmatpush2.msra.mxu0 0.0
    %2251 = vmatprep.subr.mxu0 0.0
    %2252 = vmatpush2.msra.mxu0 0.0
    %2253 = vmatprep.mubr.f32.mxu0 0.0
    %2254 = vmatmul.mubr.f32.gmra.mxu0 %v2187
    %v2255 = vpop.f32.mrf.mxu0
    %v2256 = vadd.f32 0.0, %v2255
    %v2257 = vpop.f32.mrf.mxu0
    %2258 = vdwg.mxu0
    %v2259 = vadd.f32 %v1306, %v2256
    %v2260 = vxor.u32 %v2259, 2147483648
    %v2261 = vmul.f32 %v2260, 1.442695
    %v2262 = vpow.pop %v2261
    %v2263 = vadd.f32 %v2262, 1.0
    %v2264 = vrcp.pop %v2263
    %v2265 = vmul.f32 1.0, %v2264
    %v2266 = vtanh.pop %v2259
    %v2267 = vmul.f32 %v2265, %v2177
    %2269 = vrot.lane.b32.xlu0 %v2266, 64
    %v2270 = vpop.permute.xlu0 %2269
    %v2272 = vmul.f32 %v2265, %v2270
    %2274 = vrot.lane.b32.xlu0 %v2272, 32
    %v2275 = vpop.permute.xlu0 %2274
    %v2277 = vadd.f32 %v2267, %v2275
    %v2278 = vtanh.pop %v2277
    %2280 = vrot.lane.b32.xlu0 %v2278, 64
    %v2281 = vpop.permute.xlu0 %2280
    %v2283 = vmul.f32 %v2265, %v2281
    %2285 = vrot.lane.b32.xlu0 %v2283, 32
    %v2286 = vpop.permute.xlu0 %2285
    %v2287 = vsel %vm156, %v2286, 0
    %2289 = vmatprep.subr.mxu0 0.0
    %2290 = vmatpush1.msra.mxu0 0.0
    %2291 = vmatprep.subr.mxu0 0.0
    %2292 = vmatpush1.msra.mxu0 0.0
    %2293 = vmatprep.subr.mxu0 0.0
    %2294 = vmatpush1.msra.mxu0 0.0
    %2295 = vmatprep.subr.mxu0 0.0
    %2296 = vmatpush1.msra.mxu0 0.0
    %2297 = vmatprep.subr.mxu0 0.0
    %2298 = vmatpush1.msra.mxu0 0.0
    %2299 = vmatprep.subr.mxu0 0.0
    %2300 = vmatpush1.msra.mxu0 0.0
    %2301 = vmatprep.subr.mxu0 0.0
    %2302 = vmatpush1.msra.mxu0 0.0
    %2303 = vmatprep.subr.mxu0 0.0
    %2304 = vmatpush1.msra.mxu0 0.0
    %2305 = vmatprep.subr.mxu0 0.0
    %2306 = vmatpush1.msra.mxu0 0.0
    %2307 = vmatprep.subr.mxu0 0.0
    %2308 = vmatpush1.msra.mxu0 0.0
    %2309 = vmatprep.subr.mxu0 0.0
    %2310 = vmatpush1.msra.mxu0 0.0
    %2311 = vmatprep.subr.mxu0 0.0
    %2312 = vmatpush1.msra.mxu0 0.0
    %2313 = vmatprep.subr.mxu0 0.0
    %2314 = vmatpush1.msra.mxu0 %v1677
    %2315 = vmatprep.subr.mxu0 0.0
    %2316 = vmatpush1.msra.mxu0 %v1676
    %2317 = vmatprep.subr.mxu0 0.0
    %2318 = vmatpush1.msra.mxu0 %v1675
    %2319 = vmatprep.subr.mxu0 0.0
    %2320 = vmatpush1.msra.mxu0 %v1674
    %2321 = vmatprep.subr.mxu0 0.0
    %2322 = vmatpush2.msra.mxu0 0.0
    %2323 = vmatprep.subr.mxu0 0.0
    %2324 = vmatpush2.msra.mxu0 0.0
    %2325 = vmatprep.subr.mxu0 0.0
    %2326 = vmatpush2.msra.mxu0 0.0
    %2327 = vmatprep.subr.mxu0 0.0
    %2328 = vmatpush2.msra.mxu0 0.0
    %2329 = vmatprep.subr.mxu0 0.0
    %2330 = vmatpush2.msra.mxu0 0.0
    %2331 = vmatprep.subr.mxu0 0.0
    %2332 = vmatpush2.msra.mxu0 0.0
    %2333 = vmatprep.subr.mxu0 0.0
    %2334 = vmatpush2.msra.mxu0 0.0
    %2335 = vmatprep.subr.mxu0 0.0
    %2336 = vmatpush2.msra.mxu0 0.0
    %2337 = vmatprep.subr.mxu0 0.0
    %2338 = vmatpush2.msra.mxu0 0.0
    %2339 = vmatprep.subr.mxu0 0.0
    %2340 = vmatpush2.msra.mxu0 0.0
    %2341 = vmatprep.subr.mxu0 0.0
    %2342 = vmatpush2.msra.mxu0 0.0
    %2343 = vmatprep.subr.mxu0 0.0
    %2344 = vmatpush2.msra.mxu0 0.0
    %2345 = vmatprep.subr.mxu0 0.0
    %2346 = vmatpush2.msra.mxu0 0.0
    %2347 = vmatprep.subr.mxu0 0.0
    %2348 = vmatpush2.msra.mxu0 0.0
    %2349 = vmatprep.subr.mxu0 0.0
    %2350 = vmatpush2.msra.mxu0 0.0
    %2351 = vmatprep.subr.mxu0 0.0
    %2352 = vmatpush2.msra.mxu0 0.0
    %2353 = vmatprep.mubr.f32.mxu0 0.0
    %2354 = vmatmul.mubr.f32.gmra.mxu0 %v2287
    %v2355 = vpop.f32.mrf.mxu0
    %v2356 = vadd.f32 0.0, %v2355
    %v2357 = vpop.f32.mrf.mxu0
    %2358 = vdwg.mxu0
    %v2359 = vadd.f32 %v1483, %v2356
    %v2360 = vxor.u32 %v2359, 2147483648
    %v2361 = vmul.f32 %v2360, 1.442695
    %v2362 = vpow.pop %v2361
    %v2363 = vadd.f32 %v2362, 1.0
    %v2364 = vrcp.pop %v2363
    %v2365 = vmul.f32 1.0, %v2364
    %v2366 = vtanh.pop %v2359
    %v2367 = vmul.f32 %v2365, %v2277
    %2369 = vrot.lane.b32.xlu0 %v2366, 64
    %v2370 = vpop.permute.xlu0 %2369
    %v2372 = vmul.f32 %v2365, %v2370
    %2374 = vrot.lane.b32.xlu0 %v2372, 32
    %v2375 = vpop.permute.xlu0 %2374
    %v2377 = vadd.f32 %v2367, %v2375
    %v2378 = vtanh.pop %v2377
    %2380 = vrot.lane.b32.xlu0 %v2378, 64
    %v2381 = vpop.permute.xlu0 %2380
    %v2383 = vmul.f32 %v2365, %v2381
    %2385 = vrot.lane.b32.xlu0 %v2383, 32
    %v2386 = vpop.permute.xlu0 %2385
    %v2387 = vsel %vm156, %v2386, 0
    %2389 = vmatprep.subr.mxu0 0.0
    %2390 = vmatpush1.msra.mxu0 0.0
    %2391 = vmatprep.subr.mxu0 0.0
    %2392 = vmatpush1.msra.mxu0 0.0
    %2393 = vmatprep.subr.mxu0 0.0
    %2394 = vmatpush1.msra.mxu0 0.0
    %2395 = vmatprep.subr.mxu0 0.0
    %2396 = vmatpush1.msra.mxu0 0.0
    %2397 = vmatprep.subr.mxu0 0.0
    %2398 = vmatpush1.msra.mxu0 0.0
    %2399 = vmatprep.subr.mxu0 0.0
    %2400 = vmatpush1.msra.mxu0 0.0
    %2401 = vmatprep.subr.mxu0 0.0
    %2402 = vmatpush1.msra.mxu0 0.0
    %2403 = vmatprep.subr.mxu0 0.0
    %2404 = vmatpush1.msra.mxu0 0.0
    %2405 = vmatprep.subr.mxu0 0.0
    %2406 = vmatpush1.msra.mxu0 0.0
    %2407 = vmatprep.subr.mxu0 0.0
    %2408 = vmatpush1.msra.mxu0 0.0
    %2409 = vmatprep.subr.mxu0 0.0
    %2410 = vmatpush1.msra.mxu0 0.0
    %2411 = vmatprep.subr.mxu0 0.0
    %2412 = vmatpush1.msra.mxu0 0.0
    %2413 = vmatprep.subr.mxu0 0.0
    %2414 = vmatpush1.msra.mxu0 %v1677
    %2415 = vmatprep.subr.mxu0 0.0
    %2416 = vmatpush1.msra.mxu0 %v1676
    %2417 = vmatprep.subr.mxu0 0.0
    %2418 = vmatpush1.msra.mxu0 %v1675
    %2419 = vmatprep.subr.mxu0 0.0
    %2420 = vmatpush1.msra.mxu0 %v1674
    %2421 = vmatprep.subr.mxu0 0.0
    %2422 = vmatpush2.msra.mxu0 0.0
    %2423 = vmatprep.subr.mxu0 0.0
    %2424 = vmatpush2.msra.mxu0 0.0
    %2425 = vmatprep.subr.mxu0 0.0
    %2426 = vmatpush2.msra.mxu0 0.0
    %2427 = vmatprep.subr.mxu0 0.0
    %2428 = vmatpush2.msra.mxu0 0.0
    %2429 = vmatprep.subr.mxu0 0.0
    %2430 = vmatpush2.msra.mxu0 0.0
    %2431 = vmatprep.subr.mxu0 0.0
    %2432 = vmatpush2.msra.mxu0 0.0
    %2433 = vmatprep.subr.mxu0 0.0
    %2434 = vmatpush2.msra.mxu0 0.0
    %2435 = vmatprep.subr.mxu0 0.0
    %2436 = vmatpush2.msra.mxu0 0.0
    %2437 = vmatprep.subr.mxu0 0.0
    %2438 = vmatpush2.msra.mxu0 0.0
    %2439 = vmatprep.subr.mxu0 0.0
    %2440 = vmatpush2.msra.mxu0 0.0
    %2441 = vmatprep.subr.mxu0 0.0
    %2442 = vmatpush2.msra.mxu0 0.0
    %2443 = vmatprep.subr.mxu0 0.0
    %2444 = vmatpush2.msra.mxu0 0.0
    %2445 = vmatprep.subr.mxu0 0.0
    %2446 = vmatpush2.msra.mxu0 0.0
    %2447 = vmatprep.subr.mxu0 0.0
    %2448 = vmatpush2.msra.mxu0 0.0
    %2449 = vmatprep.subr.mxu0 0.0
    %2450 = vmatpush2.msra.mxu0 0.0
    %2451 = vmatprep.subr.mxu0 0.0
    %2452 = vmatpush2.msra.mxu0 0.0
    %2453 = vmatprep.mubr.f32.mxu0 0.0
    %2454 = vmatmul.mubr.f32.gmra.mxu0 %v2387
    %v2455 = vpop.f32.mrf.mxu0
    %v2456 = vadd.f32 0.0, %v2455
    %v2457 = vpop.f32.mrf.mxu0
    %2458 = vdwg.mxu0
    %v2459 = vadd.f32 %v1660, %v2456
    %v2460 = vxor.u32 %v2459, 2147483648
    %v2461 = vmul.f32 %v2460, 1.442695
    %v2462 = vpow.pop %v2461
    %v2463 = vadd.f32 %v2462, 1.0
    %v2464 = vrcp.pop %v2463
    %v2465 = vmul.f32 1.0, %v2464
    %v2466 = vtanh.pop %v2459
    %v2467 = vmul.f32 %v2465, %v2377
    %2469 = vrot.lane.b32.xlu0 %v2466, 64
    %v2470 = vpop.permute.xlu0 %2469
    %v2472 = vmul.f32 %v2465, %v2470
    %2474 = vrot.lane.b32.xlu0 %v2472, 32
    %v2475 = vpop.permute.xlu0 %2474
    %v2477 = vadd.f32 %v2467, %v2475
    %v2478 = vtanh.pop %v2477
    %2480 = vrot.lane.b32.xlu0 %v2478, 64
    %v2481 = vpop.permute.xlu0 %2480
    %v2483 = vmul.f32 %v2465, %v2481
    %2485 = vrot.lane.b32.xlu0 %v2483, 32
    %v2486 = vpop.permute.xlu0 %2485
    %s2488 = scalar_lea.vmem %s6, 2
    %vm2489 = vcmask 254976
    %2490 = vst.msk [vmem:[%s2488] sm:$0x3] %vm2489, %v2486
    %2492 = vrot.lane.b32.xlu0 %v2477, 96
    %v2493 = vpop.permute.xlu0 %2492
    %s2495 = scalar_lea.vmem %s6, 6
    %2496 = vst.msk [vmem:[%s2495] sm:$0x3] %vm2489, %v2493
    %v2497 = vrot.slane %v1883, 6
    %v2499 = vrot.slane %v1983, 4
    %v2501 = vrot.slane %v2083, 2
    %v2503 = vrot.slane %v2283, 6
    %v2505 = vrot.slane %v2383, 4
    %v2507 = vrot.slane %v2483, 2
    %vm2509 = vcmask 1041408
    %v2510 = vsel %vm2509, %v1783, %v2497
    %vm2511 = vcmask 1043456
    %v2512 = vsel %vm2511, %v2510, %v2499
    %vm2513 = vcmask 1045504
    %v2514 = vsel %vm2513, %v2512, %v2501
    %v2515 = vsel %vm2509, %v2183, %v2503
    %v2516 = vsel %vm2511, %v2515, %v2505
    %v2517 = vsel %vm2513, %v2516, %v2507
    %v2518 = vld [vmem:[#allocation2] sm:$0xff]
    %v2519 = vld [vmem:[#allocation2 + $0x8] sm:$0xff]
    %v2520 = vld [vmem:[#allocation2 + $0x10] sm:$0xff]
    %v2521 = vld [vmem:[#allocation2 + $0x18] sm:$0xff]
    %v2522 = vld [vmem:[#allocation2 + $0x20] sm:$0xff]
    %v2523 = vlaneseq
    %v2524 = vshrl.u32 %v2523, 7
    %v2525 = vsub.s32 0, %v2524
    %v2526 = vrot.slane %v2522, %v2525
    %2529 = vrot.lane.b32.xlu0 %v2514, 32
    %v2530 = vpop.permute.xlu0 %2529
    %2531 = vrot.lane.b32.xlu0 %v2517, 32
    %v2532 = vpop.permute.xlu0 %2531
    %v2533 = vsel %vm156, %v2530, 0
    %v2535 = vsel %vm156, %v2532, 0
    %2537 = vmatprep.subr.mxu0 0.0
    %2538 = vmatpush1.msra.mxu0 0.0
    %2539 = vmatprep.subr.mxu0 0.0
    %2540 = vmatpush1.msra.mxu0 0.0
    %2541 = vmatprep.subr.mxu0 0.0
    %2542 = vmatpush1.msra.mxu0 0.0
    %2543 = vmatprep.subr.mxu0 0.0
    %2544 = vmatpush1.msra.mxu0 0.0
    %2545 = vmatprep.subr.mxu0 0.0
    %2546 = vmatpush1.msra.mxu0 0.0
    %2547 = vmatprep.subr.mxu0 0.0
    %2548 = vmatpush1.msra.mxu0 0.0
    %2549 = vmatprep.subr.mxu0 0.0
    %2550 = vmatpush1.msra.mxu0 0.0
    %2551 = vmatprep.subr.mxu0 0.0
    %2552 = vmatpush1.msra.mxu0 0.0
    %2553 = vmatprep.subr.mxu0 0.0
    %2554 = vmatpush1.msra.mxu0 0.0
    %2555 = vmatprep.subr.mxu0 0.0
    %2556 = vmatpush1.msra.mxu0 0.0
    %2557 = vmatprep.subr.mxu0 0.0
    %2558 = vmatpush1.msra.mxu0 0.0
    %2559 = vmatprep.subr.mxu0 0.0
    %2560 = vmatpush1.msra.mxu0 0.0
    %2561 = vmatprep.subr.mxu0 0.0
    %2562 = vmatpush1.msra.mxu0 %v2521
    %2563 = vmatprep.subr.mxu0 0.0
    %2564 = vmatpush1.msra.mxu0 %v2520
    %2565 = vmatprep.subr.mxu0 0.0
    %2566 = vmatpush1.msra.mxu0 %v2519
    %2567 = vmatprep.subr.mxu0 0.0
    %2568 = vmatpush1.msra.mxu0 %v2518
    %2569 = vmatprep.subr.mxu0 0.0
    %2570 = vmatpush2.msra.mxu0 0.0
    %2571 = vmatprep.subr.mxu0 0.0
    %2572 = vmatpush2.msra.mxu0 0.0
    %2573 = vmatprep.subr.mxu0 0.0
    %2574 = vmatpush2.msra.mxu0 0.0
    %2575 = vmatprep.subr.mxu0 0.0
    %2576 = vmatpush2.msra.mxu0 0.0
    %2577 = vmatprep.subr.mxu0 0.0
    %2578 = vmatpush2.msra.mxu0 0.0
    %2579 = vmatprep.subr.mxu0 0.0
    %2580 = vmatpush2.msra.mxu0 0.0
    %2581 = vmatprep.subr.mxu0 0.0
    %2582 = vmatpush2.msra.mxu0 0.0
    %2583 = vmatprep.subr.mxu0 0.0
    %2584 = vmatpush2.msra.mxu0 0.0
    %2585 = vmatprep.subr.mxu0 0.0
    %2586 = vmatpush2.msra.mxu0 0.0
    %2587 = vmatprep.subr.mxu0 0.0
    %2588 = vmatpush2.msra.mxu0 0.0
    %2589 = vmatprep.subr.mxu0 0.0
    %2590 = vmatpush2.msra.mxu0 0.0
    %2591 = vmatprep.subr.mxu0 0.0
    %2592 = vmatpush2.msra.mxu0 0.0
    %2593 = vmatprep.subr.mxu0 0.0
    %2594 = vmatpush2.msra.mxu0 0.0
    %2595 = vmatprep.subr.mxu0 0.0
    %2596 = vmatpush2.msra.mxu0 0.0
    %2597 = vmatprep.subr.mxu0 0.0
    %2598 = vmatpush2.msra.mxu0 0.0
    %2599 = vmatprep.subr.mxu0 0.0
    %2600 = vmatpush2.msra.mxu0 0.0
    %2601 = vmatprep.mubr.f32.mxu0 0.0
    %2602 = vmatmul.mubr.f32.gmra.mxu0 %v2533
    %v2603 = vpop.f32.mrf.mxu0
    %v2604 = vadd.f32 %v2526, %v2603
    %v2605 = vpop.f32.mrf.mxu0
    %2606 = vmatprep.mubr.f32.mxu0 0.0
    %2607 = vmatmul.mubr.f32.gmra.mxu0 %v2535
    %v2608 = vpop.f32.mrf.mxu0
    %v2609 = vadd.f32 %v2526, %v2608
    %v2610 = vpop.f32.mrf.mxu0
    %2611 = vdwg.mxu0
    %v2612 = vsel %vm61, %v2604, -inf
    %2613 = vmax.xlane.f32.xlu0 %v2612
    %v2614 = vpop.xlane.xlu0 %2613
    %v2615 = vsel %vm61, %v2609, -inf
    %2616 = vmax.xlane.f32.xlu0 %v2615
    %v2617 = vpop.xlane.xlu0 %2616
    %v2618 = vsub.f32 %v2604, %v2614
    %v2619 = vsub.f32 %v2609, %v2617
    %v2620 = vmul.f32 %v2618, 1.442695
    %v2621 = vpow.pop %v2620
    %v2622 = vmul.f32 %v2619, 1.442695
    %v2623 = vpow.pop %v2622
    %v2624 = vsel %vm61, %v2621, 0.0
    %2625 = vadd.xlane.f32.xlu0 %v2624
    %v2626 = vpop.xlane.xlu0 %2625
    %v2627 = vsel %vm61, %v2623, 0.0
    %2628 = vadd.xlane.f32.xlu0 %v2627
    %v2629 = vpop.xlane.xlu0 %2628
    %v2630 = vlog2.pop %v2626
    %v2631 = vmul.f32 %v2630, 0.6931472
    %v2632 = vlog2.pop %v2629
    %v2633 = vmul.f32 %v2632, 0.6931472
    %v2634 = vsub.f32 %v2618, %v2631
    %v2635 = vsub.f32 %v2619, %v2633
    %2636 = vst.msk [vmem:[#allocation5] sm:$0xff] %vm61, %v2634
    %2637 = vst.msk [vmem:[#allocation5 + $0x8] sm:$0xff] %vm61, %v2635
    // Predicated region
    $region26: #{text_gen_forward.1} parent=1 // pred_check
      _
    $region27: #{text_gen_forward.1} parent=1 // pred_check_branch
      %2639 = sbr.rel (0) target = $region29
    $region28: #{text_gen_forward.1} parent=1 // pred_region
      %s2641 = ssub.s32 256, 256
      %2642 = vsyncadd [#allocation4], %s2641
      %s2643 = sshll.u32 [#allocation5], 4
      %s2644 = int_to_ptr.vmem [resolvable:$true] %s2643
      %2649 = dma.vmem_to_hbm [thread:$0]  %s2644, 256, %s5, [#allocation4], 128, 128, 8
    $region29: #{text_gen_forward.1} parent=1 // pred_fallthru
      _
    // Predicated region
    $region30: #{text_gen_forward.1} parent=1 // pred_check
      _
    $region31: #{text_gen_forward.1} parent=1 // pred_check_branch
      %2651 = sbr.rel (0) target = $region33
    $region32: #{text_gen_forward.1} parent=1 // pred_region
      _
    $region33: #{text_gen_forward.1} parent=1 // pred_fallthru
      _
    // Predicated region
    $region34: #{text_gen_forward.1} parent=1 // pred_check
      _
    $region35: #{text_gen_forward.1} parent=1 // pred_check_branch
      %2653 = sbr.rel (0) target = $region37
    $region36: #{text_gen_forward.1} parent=1 // pred_region
      %2654 = dma.done [#allocation4], 256
    $region37: #{text_gen_forward.1} parent=1 // pred_fallthru
      _
    // Predicated region
    $region38: #{text_gen_forward.1} parent=1 // pred_check
      _
    $region39: #{text_gen_forward.1} parent=1 // pred_check_branch
      %2656 = sbr.rel (0) target = $region41
    $region40: #{text_gen_forward.1} parent=1 // pred_region
      _
    $region41: #{text_gen_forward.1} parent=1 // pred_fallthru
      _
    %2657 = vsyncpa [#allocation3], 1
    %2658 = vsyncpa [#allocation4], 1

</llo_original>
